<compile_context>
chip_gen: v7x
topology: tpu7x:2x2x1
jax: 0.10.0
libtpu: 0.0.40
codegen_flags: <defaults>
</compile_context>

<pallas_src>
import math

import jax
import jax.numpy as jnp
from jax import lax
from jax.experimental import pallas as pl
from jax.experimental.pallas import tpu as pltpu

D_MODEL = 32
NHEAD = 4
DIM_FF = 64
HEAD_DIM = D_MODEL // NHEAD
SCALE = HEAD_DIM ** (-0.5)
EPS = 1e-5
MASK_NEG = float(jnp.finfo(jnp.float32).max)   # torch masked_fill uses -finfo(dtype).max

# packed weight slab (bf16): column offsets along lanes
_QKV_OFF = 0
_PROJ_OFF = 3 * D_MODEL
_W1_OFF = 4 * D_MODEL
_W2_OFF = 4 * D_MODEL + DIM_FF
_SLAB_COLS = 4 * D_MODEL + DIM_FF + D_MODEL     # 224
_SLAB_ROWS = max(D_MODEL, DIM_FF)               # 64

# packed LN/bias vector array (f32, (8, 128)): row assignments
_ROW_PN_G, _ROW_PN_B, _ROW_BPROJ, _ROW_N1_G, _ROW_N1_B, _ROW_B1, _ROW_B2 = range(7)


def _layer_norm(x, gamma, beta):
    mu = jnp.mean(x, axis=-1, keepdims=True)
    var = jnp.mean((x - mu) ** 2, axis=-1, keepdims=True)
    return (x - mu) * lax.rsqrt(var + EPS) * gamma + beta


def _gelu_exact(x):
    # F.gelu default (approximate='none'): 0.5 * x * (1 + erf(x / sqrt(2)))
    return 0.5 * x * (1.0 + lax.erf(x * (1.0 / math.sqrt(2.0))))


def encoder_layer_kernel(src_ref, bias_ref, vec_ref, w_ref, out_ref, fin_ref):
    BB, N, C = src_ref.shape
    F = DIM_FF
    H = NHEAD
    HD = HEAD_DIM
    cdt = w_ref.dtype                     # MXU input dtype (bf16), f32 accumulation

    # ---- unpack parameters (static ref slices; weights already bf16, scale folded) ----
    wqkv = w_ref[0:C, _QKV_OFF:_QKV_OFF + 3 * C]       # (C, 3C)
    wproj = w_ref[0:C, _PROJ_OFF:_PROJ_OFF + C]        # (C, C)
    w1 = w_ref[0:C, _W1_OFF:_W1_OFF + F]               # (C, F)
    w2 = w_ref[0:F, _W2_OFF:_W2_OFF + C]               # (F, C)

    pn_g = vec_ref[_ROW_PN_G:_ROW_PN_G + 1, 0:C]
    pn_b = vec_ref[_ROW_PN_B:_ROW_PN_B + 1, 0:C]
    bproj = vec_ref[_ROW_BPROJ:_ROW_BPROJ + 1, 0:C]
    n1_g = vec_ref[_ROW_N1_G:_ROW_N1_G + 1, 0:C]
    n1_b = vec_ref[_ROW_N1_B:_ROW_N1_B + 1, 0:C]
    b1 = vec_ref[_ROW_B1:_ROW_B1 + 1, 0:F]
    b2 = vec_ref[_ROW_B2:_ROW_B2 + 1, 0:C]

    x = src_ref[...].reshape(BB * N, C)   # (M, C) f32, rows ordered (batch-major, token)

    # ---------------- pre_norm + masked multi-head self-attention ----------------
    y = _layer_norm(x, pn_g, pn_b)
    qkv = jnp.dot(y.astype(cdt), wqkv, preferred_element_type=jnp.float32)   # (M, 3C)
    q = qkv[:, 0:C].reshape(BB, N, C)
    k = qkv[:, C:2 * C].reshape(BB, N, C)
    v = qkv[:, 2 * C:3 * C].reshape(BB, N, C)

    # fold heads into the batch dim -> one batched attention with a single softmax chain
    qh = jnp.concatenate([q[:, :, h * HD:(h + 1) * HD] for h in range(H)], axis=0)
    kh = jnp.concatenate([k[:, :, h * HD:(h + 1) * HD] for h in range(H)], axis=0)
    vh = jnp.concatenate([v[:, :, h * HD:(h + 1) * HD] for h in range(H)], axis=0)
    qh = qh.astype(cdt)
    kh = kh.astype(cdt)
    vh = vh.astype(cdt)

    # additive mask bias: 0 where (query kept & key kept), -FLT_MAX otherwise.
    # Fully-masked rows end up uniform after max-subtraction (torch masked_fill semantics).
    bias = jnp.concatenate([bias_ref[...]] * H, axis=0)       # (H*BB, N, N) f32

    s = jnp.einsum('bnd,bmd->bnm', qh, kh,
                   preferred_element_type=jnp.float32) + bias  # scale folded into Wq
    s = s - jnp.max(s, axis=-1, keepdims=True)
    p = jnp.exp(s)
    p = p * pl.reciprocal(jnp.sum(p, axis=-1, keepdims=True), approx=True)
    ctx = jnp.einsum('bnm,bmd->bnd', p.astype(cdt), vh,
                     preferred_element_type=jnp.float32)       # (H*BB, N, HD)

    # heads back to channels: lane-concat in head order (matches torch reshape)
    ctx = jnp.concatenate([ctx[h * BB:(h + 1) * BB] for h in range(H)], axis=-1)  # (BB,N,C)
    attn_out = jnp.dot(ctx.reshape(BB * N, C).astype(cdt), wproj,
                       preferred_element_type=jnp.float32) + bproj

    # dropout / drop_path: identity in eval mode
    x = x + attn_out

    # ---------------- norm1 + GELU MLP ----------------
    x = _layer_norm(x, n1_g, n1_b)
    h1 = _gelu_exact(jnp.dot(x.astype(cdt), w1, preferred_element_type=jnp.float32) + b1)
    src2 = jnp.dot(h1.astype(cdt), w2, preferred_element_type=jnp.float32) + b2
    xf = x + src2                                              # (M, C) f32

    # ---- lane-dense output: pack (M, C) rows into (BB, N*C) via strided scratch reads ----
    fin_ref[...] = xf
    pieces = [fin_ref[pl.ds(n, BB, stride=N), :] for n in range(N)]   # each (BB, C)
    out_ref[...] = jnp.concatenate(pieces, axis=-1)            # (BB, N*C): unmasked stores


def _vmem_capacity_bytes():
    try:
        return int(pltpu.get_tpu_info().vmem_capacity_bytes)
    except Exception:
        return 64 << 20          # conservative (v7x physical); v5e/v6e have 128 MiB


def _estimate_vmem_bytes(block_b, N):
    C, F, H = D_MODEL, DIM_FF, NHEAD
    M = block_b * N
    blocks = 2 * (M * C * 4 + block_b * N * N * 4 + block_b * N * C * 4)  # double-buffered IO
    consts = 2 * (8 * 128 * 4 + _SLAB_ROWS * _SLAB_COLS * 2)
    scratch = M * C * 4
    live = M * (3 * C + 3 * C + 2 * C + 2 * F) * 4 + 3 * H * block_b * N * N * 4
    return blocks + consts + scratch + live


def _choose_block_b(B, N, budget):
    # out block is (block_b, N*C): its sublane dim must be a multiple of 8 or the full B.
    cands = [d for d in range(B, 0, -1) if B % d == 0 and (d == B or d % 8 == 0)]
    for d in cands:
        if _estimate_vmem_bytes(d, N) <= budget:
            return d
    return cands[-1]


def masked_transformer_encoder_layer(src, mask, params, *,
                                     block_b=None, compute_dtype=jnp.bfloat16):
    B, N, C = src.shape
    assert C == D_MODEL
    F = DIM_FF
    (pn_g, pn_b, wqkv, wproj, bproj, n1_g, n1_b, w1, b1, w2, b2) = params

    cap = _vmem_capacity_bytes()
    if block_b is None:
        block_b = _choose_block_b(B, N, budget=int(cap * 0.4))
    grid = (B // block_b,)
    est = _estimate_vmem_bytes(block_b, N)
    vmem_limit = min(int(cap * 0.75), max(32 << 20, 2 * est))

    # ---- one-time parameter packing (wrapper side) ----
    # fold the 1/sqrt(head_dim) attention scale into the Q columns of the qkv weight
    wqkv_s = jnp.concatenate([wqkv[:, :C] * SCALE, wqkv[:, C:]], axis=1)
    slab = jnp.zeros((_SLAB_ROWS, _SLAB_COLS), jnp.float32)
    slab = slab.at[:C, _QKV_OFF:_QKV_OFF + 3 * C].set(wqkv_s)
    slab = slab.at[:C, _PROJ_OFF:_PROJ_OFF + C].set(wproj)
    slab = slab.at[:C, _W1_OFF:_W1_OFF + F].set(w1)
    slab = slab.at[:F, _W2_OFF:_W2_OFF + C].set(w2)
    slab = slab.astype(compute_dtype)

    vecs = jnp.zeros((8, 128), jnp.float32)
    vecs = vecs.at[_ROW_PN_G, :C].set(pn_g.reshape(C))
    vecs = vecs.at[_ROW_PN_B, :C].set(pn_b.reshape(C))
    vecs = vecs.at[_ROW_BPROJ, :C].set(bproj.reshape(C))
    vecs = vecs.at[_ROW_N1_G, :C].set(n1_g.reshape(C))
    vecs = vecs.at[_ROW_N1_B, :C].set(n1_b.reshape(C))
    vecs = vecs.at[_ROW_B1, :F].set(b1.reshape(F))
    vecs = vecs.at[_ROW_B2, :C].set(b2.reshape(C))

    # additive attention-mask bias: 0 where both tokens kept, -FLT_MAX otherwise
    if mask is None:
        bias = jnp.zeros((B, N, N), jnp.float32)
    else:
        m = mask.reshape(B, N).astype(jnp.float32)
        pair = m[:, :, None] * m[:, None, :]
        bias = jnp.where(pair > 0.5, 0.0, -MASK_NEG).astype(jnp.float32)

    in_specs = [
        pl.BlockSpec((block_b, N, C), lambda b: (b, 0, 0)),          # activations
        pl.BlockSpec((block_b, N, N), lambda b: (b, 0, 0)),          # mask bias
        pl.BlockSpec((8, 128), lambda b: (0, 0)),                    # packed LN/bias vectors
        pl.BlockSpec((_SLAB_ROWS, _SLAB_COLS), lambda b: (0, 0)),    # packed bf16 weights
    ]
    out = pl.pallas_call(
        encoder_layer_kernel,
        out_shape=jax.ShapeDtypeStruct((B, N * C), jnp.float32),     # lane-dense output
        grid=grid,
        in_specs=in_specs,
        out_specs=pl.BlockSpec((block_b, N * C), lambda b: (b, 0)),
        scratch_shapes=[pltpu.VMEM((block_b * N, C), jnp.float32)],
        compiler_params=pltpu.CompilerParams(
            # Single grid step on single-TC chips (v5e/v6e).  NOTE: if splitting for v7x,
            # pltpu.CORE_PARALLEL on this axis would shard steps across its 2 TensorCores.
            dimension_semantics=("arbitrary",) if grid[0] == 1 else ("parallel",),
            vmem_limit_bytes=vmem_limit),
    )(src, bias, vecs, slab)
    return out.reshape(B, N, C)


def ref_forward(src, mask, params):
    """Pure-JAX f32 reference mirroring the PyTorch forward (eval mode)."""
    (pn_g, pn_b, wqkv, wproj, bproj, n1_g, n1_b, w1, b1, w2, b2) = params

    def ln(x, g, b):
        mu = x.mean(-1, keepdims=True)
        var = ((x - mu) ** 2).mean(-1, keepdims=True)
        return (x - mu) / jnp.sqrt(var + EPS) * g + b

    B, N, C = src.shape
    y = ln(src, pn_g, pn_b)
    qkv = (y @ wqkv).reshape(B, N, 3, NHEAD, HEAD_DIM).transpose(2, 0, 3, 1, 4)
    q, k, v = qkv[0], qkv[1], qkv[2]
    attn = jnp.einsum('bhnd,bhmd->bhnm', q, k) * SCALE
    m2 = mask.reshape(B, N)
    pair = m2[:, :, None] * m2[:, None, :]
    attn = jnp.where(pair[:, None] > 0.5, attn, -MASK_NEG)
    attn = jax.nn.softmax(attn, axis=-1)
    out = jnp.einsum('bhnm,bhmd->bhnd', attn, v).transpose(0, 2, 1, 3).reshape(B, N, C)
    out = out @ wproj + bproj
    x = src + out
    x = ln(x, n1_g, n1_b)
    h = jax.nn.gelu(x @ w1 + b1, approximate=False)
    return x + (h @ w2 + b2)


if __name__ == "__main__":
    B, N = 8, 8
    key = jax.random.PRNGKey(0)
    ks = jax.random.split(key, 8)

    src = jax.random.normal(ks[0], (B, N, D_MODEL), jnp.float32)
    # mask: 1 = keep, 0 = masked-out token
    mask = jnp.ones((B, N), jnp.float32)
    mask = (mask.at[0, -2:].set(0.0)
                .at[1, 0].set(0.0)
                .at[3, 3:6].set(0.0)
                .at[6, 1::2].set(0.0))

    s = 0.05
    params = (
        jnp.ones((1, D_MODEL), jnp.float32),                                # pre_norm gamma
        jnp.zeros((1, D_MODEL), jnp.float32),                               # pre_norm beta
        jax.random.normal(ks[1], (D_MODEL, 3 * D_MODEL), jnp.float32) * s,  # qkv W^T
        jax.random.normal(ks[2], (D_MODEL, D_MODEL), jnp.float32) * s,      # proj W^T
        jax.random.normal(ks[3], (1, D_MODEL), jnp.float32) * s,            # proj bias
        jnp.ones((1, D_MODEL), jnp.float32),                                # norm1 gamma
        jnp.zeros((1, D_MODEL), jnp.float32),                               # norm1 beta
        jax.random.normal(ks[4], (D_MODEL, DIM_FF), jnp.float32) * s,       # linear1 W^T
        jax.random.normal(ks[5], (1, DIM_FF), jnp.float32) * s,             # linear1 bias
        jax.random.normal(ks[6], (DIM_FF, D_MODEL), jnp.float32) * s,       # linear2 W^T
        jax.random.normal(ks[7], (1, D_MODEL), jnp.float32) * s,            # linear2 bias
    )

    out = masked_transformer_encoder_layer(src, mask, params)
    out = jax.block_until_ready(out)

    ref = ref_forward(src, mask, params)
    assert out.shape == (B, N, D_MODEL) and out.dtype == jnp.float32
    # bf16 MXU inputs (f32 accumulate) + approx EUP reciprocal -> bf16-appropriate tolerance.
    err = float(jnp.max(jnp.abs(out - ref)))
    assert jnp.allclose(out, ref, rtol=2e-2, atol=2e-2), err
    print("KERNEL_OK")
</pallas_src>

<mosaic_0001>
module attributes {stable_mosaic.version = 11 : i64} {
  func.func @encoder_layer_kernel(%arg0: i32, %arg1: memref<8x8x32xf32, #tpu.memory_space<vmem>>, %arg2: memref<8x8x8xf32, #tpu.memory_space<vmem>>, %arg3: memref<8x128xf32, #tpu.memory_space<vmem>>, %arg4: memref<64x224xbf16, #tpu.memory_space<vmem>>, %arg5: memref<8x256xf32, #tpu.memory_space<vmem>>, %arg6: memref<64x32xf32, #tpu.memory_space<vmem>>) attributes {dimension_semantics = [#tpu.dimension_semantics<arbitrary>], iteration_bounds = array<i64: 1>, scalar_prefetch = 0 : i64, scratch_operands = 1 : i64, tpu.core_type = #tpu.core_type<tc>, window_params = [{transform_indices = @transform_0, window_bounds = array<i64: 8, 8, 32>}, {transform_indices = @transform_1, window_bounds = array<i64: 8, 8, 8>}, {pipeline_mode = #tpu.pipeline_mode<synchronous>, transform_indices = @transform_2, window_bounds = array<i64: 8, 128>}, {pipeline_mode = #tpu.pipeline_mode<synchronous>, transform_indices = @transform_3, window_bounds = array<i64: 64, 224>}, {transform_indices = @transform_4, window_bounds = array<i64: 8, 256>}]} {
    %c0 = arith.constant 0 : index
    %c0_0 = arith.constant 0 : index
    %0 = vector.load %arg4[%c0, %c0_0] : memref<64x224xbf16, #tpu.memory_space<vmem>>, vector<32x96xbf16>
    %c0_1 = arith.constant 0 : index
    %c96 = arith.constant 96 : index
    %1 = vector.load %arg4[%c0_1, %c96] : memref<64x224xbf16, #tpu.memory_space<vmem>>, vector<32x32xbf16>
    %c0_2 = arith.constant 0 : index
    %c128 = arith.constant 128 : index
    %2 = vector.load %arg4[%c0_2, %c128] : memref<64x224xbf16, #tpu.memory_space<vmem>>, vector<32x64xbf16>
    %c0_3 = arith.constant 0 : index
    %c192 = arith.constant 192 : index
    %3 = vector.load %arg4[%c0_3, %c192] : memref<64x224xbf16, #tpu.memory_space<vmem>>, vector<64x32xbf16>
    %c0_4 = arith.constant 0 : index
    %c0_5 = arith.constant 0 : index
    %4 = vector.load %arg3[%c0_4, %c0_5] : memref<8x128xf32, #tpu.memory_space<vmem>>, vector<1x32xf32>
    %c1 = arith.constant 1 : index
    %c0_6 = arith.constant 0 : index
    %5 = vector.load %arg3[%c1, %c0_6] : memref<8x128xf32, #tpu.memory_space<vmem>>, vector<1x32xf32>
    %c2 = arith.constant 2 : index
    %c0_7 = arith.constant 0 : index
    %6 = vector.load %arg3[%c2, %c0_7] : memref<8x128xf32, #tpu.memory_space<vmem>>, vector<1x32xf32>
    %c3 = arith.constant 3 : index
    %c0_8 = arith.constant 0 : index
    %7 = vector.load %arg3[%c3, %c0_8] : memref<8x128xf32, #tpu.memory_space<vmem>>, vector<1x32xf32>
    %c4 = arith.constant 4 : index
    %c0_9 = arith.constant 0 : index
    %8 = vector.load %arg3[%c4, %c0_9] : memref<8x128xf32, #tpu.memory_space<vmem>>, vector<1x32xf32>
    %c5 = arith.constant 5 : index
    %c0_10 = arith.constant 0 : index
    %9 = vector.load %arg3[%c5, %c0_10] : memref<8x128xf32, #tpu.memory_space<vmem>>, vector<1x64xf32>
    %c6 = arith.constant 6 : index
    %c0_11 = arith.constant 0 : index
    %10 = vector.load %arg3[%c6, %c0_11] : memref<8x128xf32, #tpu.memory_space<vmem>>, vector<1x32xf32>
    %c0_12 = arith.constant 0 : index
    %c0_13 = arith.constant 0 : index
    %c0_14 = arith.constant 0 : index
    %11 = vector.load %arg1[%c0_12, %c0_13, %c0_14] : memref<8x8x32xf32, #tpu.memory_space<vmem>>, vector<8x8x32xf32>
    %12 = vector.shape_cast %11 : vector<8x8x32xf32> to vector<64x32xf32>
    %cst = arith.constant dense<0.000000e+00> : vector<64xf32>
    %13 = vector.multi_reduction <add>, %12, %cst [1] : vector<64x32xf32> to vector<64xf32>
    %14 = vector.shape_cast %13 : vector<64xf32> to vector<64x1xf32>
    %cst_15 = arith.constant 3.200000e+01 : f32
    %15 = vector.broadcast %cst_15 : f32 to vector<64x1xf32>
    %16 = arith.divf %14, %15 : vector<64x1xf32>
    %17 = vector.broadcast %16 : vector<64x1xf32> to vector<64x32xf32>
    %18 = arith.subf %12, %17 : vector<64x32xf32>
    %19 = arith.mulf %18, %18 : vector<64x32xf32>
    %cst_16 = arith.constant dense<0.000000e+00> : vector<64xf32>
    %20 = vector.multi_reduction <add>, %19, %cst_16 [1] : vector<64x32xf32> to vector<64xf32>
    %21 = vector.shape_cast %20 : vector<64xf32> to vector<64x1xf32>
    %cst_17 = arith.constant 3.200000e+01 : f32
    %22 = vector.broadcast %cst_17 : f32 to vector<64x1xf32>
    %23 = arith.divf %21, %22 : vector<64x1xf32>
    %24 = vector.broadcast %16 : vector<64x1xf32> to vector<64x32xf32>
    %25 = arith.subf %12, %24 : vector<64x32xf32>
    %cst_18 = arith.constant 9.99999974E-6 : f32
    %26 = vector.broadcast %cst_18 : f32 to vector<64x1xf32>
    %27 = arith.addf %23, %26 : vector<64x1xf32>
    %28 = math.rsqrt %27 : vector<64x1xf32>
    %29 = vector.broadcast %28 : vector<64x1xf32> to vector<64x32xf32>
    %30 = arith.mulf %25, %29 : vector<64x32xf32>
    %31 = vector.broadcast %4 : vector<1x32xf32> to vector<64x32xf32>
    %32 = arith.mulf %30, %31 : vector<64x32xf32>
    %33 = vector.broadcast %5 : vector<1x32xf32> to vector<64x32xf32>
    %34 = arith.addf %32, %33 : vector<64x32xf32>
    %35 = arith.truncf %34 : vector<64x32xf32> to vector<64x32xbf16>
    %cst_19 = arith.constant dense<0.000000e+00> : vector<64x96xf32>
    %36 = tpu.matmul %35, %0, %cst_19 {dimension_numbers = #tpu.dot_dimension_numbers<[1], [0], [0], [1], [0, 0, 1, 1], [], []>} : vector<64x32xbf16>, vector<32x96xbf16>, vector<64x96xf32> -> vector<64x96xf32>
    %37 = vector.extract_strided_slice %36 {offsets = [0, 0], sizes = [64, 32], strides = [1, 1]} : vector<64x96xf32> to vector<64x32xf32>
    %38 = vector.shape_cast %37 : vector<64x32xf32> to vector<8x8x32xf32>
    %39 = vector.extract_strided_slice %36 {offsets = [0, 32], sizes = [64, 32], strides = [1, 1]} : vector<64x96xf32> to vector<64x32xf32>
    %40 = vector.shape_cast %39 : vector<64x32xf32> to vector<8x8x32xf32>
    %41 = vector.extract_strided_slice %36 {offsets = [0, 64], sizes = [64, 32], strides = [1, 1]} : vector<64x96xf32> to vector<64x32xf32>
    %42 = vector.shape_cast %41 : vector<64x32xf32> to vector<8x8x32xf32>
    %43 = vector.extract_strided_slice %38 {offsets = [0, 0, 0], sizes = [8, 8, 8], strides = [1, 1, 1]} : vector<8x8x32xf32> to vector<8x8x8xf32>
    %44 = vector.extract_strided_slice %38 {offsets = [0, 0, 8], sizes = [8, 8, 8], strides = [1, 1, 1]} : vector<8x8x32xf32> to vector<8x8x8xf32>
    %45 = vector.extract_strided_slice %38 {offsets = [0, 0, 16], sizes = [8, 8, 8], strides = [1, 1, 1]} : vector<8x8x32xf32> to vector<8x8x8xf32>
    %46 = vector.extract_strided_slice %38 {offsets = [0, 0, 24], sizes = [8, 8, 8], strides = [1, 1, 1]} : vector<8x8x32xf32> to vector<8x8x8xf32>
    %47 = tpu.concatenate %43, %44, %45, %46 in 0 : vector<8x8x8xf32>, vector<8x8x8xf32>, vector<8x8x8xf32>, vector<8x8x8xf32> -> vector<32x8x8xf32>
    %48 = vector.extract_strided_slice %40 {offsets = [0, 0, 0], sizes = [8, 8, 8], strides = [1, 1, 1]} : vector<8x8x32xf32> to vector<8x8x8xf32>
    %49 = vector.extract_strided_slice %40 {offsets = [0, 0, 8], sizes = [8, 8, 8], strides = [1, 1, 1]} : vector<8x8x32xf32> to vector<8x8x8xf32>
    %50 = vector.extract_strided_slice %40 {offsets = [0, 0, 16], sizes = [8, 8, 8], strides = [1, 1, 1]} : vector<8x8x32xf32> to vector<8x8x8xf32>
    %51 = vector.extract_strided_slice %40 {offsets = [0, 0, 24], sizes = [8, 8, 8], strides = [1, 1, 1]} : vector<8x8x32xf32> to vector<8x8x8xf32>
    %52 = tpu.concatenate %48, %49, %50, %51 in 0 : vector<8x8x8xf32>, vector<8x8x8xf32>, vector<8x8x8xf32>, vector<8x8x8xf32> -> vector<32x8x8xf32>
    %53 = vector.extract_strided_slice %42 {offsets = [0, 0, 0], sizes = [8, 8, 8], strides = [1, 1, 1]} : vector<8x8x32xf32> to vector<8x8x8xf32>
    %54 = vector.extract_strided_slice %42 {offsets = [0, 0, 8], sizes = [8, 8, 8], strides = [1, 1, 1]} : vector<8x8x32xf32> to vector<8x8x8xf32>
    %55 = vector.extract_strided_slice %42 {offsets = [0, 0, 16], sizes = [8, 8, 8], strides = [1, 1, 1]} : vector<8x8x32xf32> to vector<8x8x8xf32>
    %56 = vector.extract_strided_slice %42 {offsets = [0, 0, 24], sizes = [8, 8, 8], strides = [1, 1, 1]} : vector<8x8x32xf32> to vector<8x8x8xf32>
    %57 = tpu.concatenate %53, %54, %55, %56 in 0 : vector<8x8x8xf32>, vector<8x8x8xf32>, vector<8x8x8xf32>, vector<8x8x8xf32> -> vector<32x8x8xf32>
    %58 = arith.truncf %47 : vector<32x8x8xf32> to vector<32x8x8xbf16>
    %59 = arith.truncf %52 : vector<32x8x8xf32> to vector<32x8x8xbf16>
    %60 = arith.truncf %57 : vector<32x8x8xf32> to vector<32x8x8xbf16>
    %c0_20 = arith.constant 0 : index
    %c0_21 = arith.constant 0 : index
    %c0_22 = arith.constant 0 : index
    %61 = vector.load %arg2[%c0_20, %c0_21, %c0_22] : memref<8x8x8xf32, #tpu.memory_space<vmem>>, vector<8x8x8xf32>
    %62 = tpu.concatenate %61, %61, %61, %61 in 0 : vector<8x8x8xf32>, vector<8x8x8xf32>, vector<8x8x8xf32>, vector<8x8x8xf32> -> vector<32x8x8xf32>
    "tpu.trace_start"() <{level = 10 : i32, message = "bnd,bmd->bnm"}> : () -> ()
    %cst_23 = arith.constant dense<0.000000e+00> : vector<32x8x8xf32>
    %63 = tpu.matmul %58, %59, %cst_23 {dimension_numbers = #tpu.dot_dimension_numbers<[2], [2], [1], [1], [0, 0, 0, 1, 1, 1], [0], [0]>} : vector<32x8x8xbf16>, vector<32x8x8xbf16>, vector<32x8x8xf32> -> vector<32x8x8xf32>
    "tpu.trace_stop"() : () -> ()
    %64 = arith.addf %63, %62 : vector<32x8x8xf32>
    %cst_24 = arith.constant dense<0xFF800000> : vector<32x8xf32>
    %65 = vector.multi_reduction <maximumf>, %64, %cst_24 [2] : vector<32x8x8xf32> to vector<32x8xf32>
    %66 = vector.shape_cast %65 : vector<32x8xf32> to vector<32x8x1xf32>
    %67 = vector.broadcast %66 : vector<32x8x1xf32> to vector<32x8x8xf32>
    %68 = arith.subf %64, %67 : vector<32x8x8xf32>
    %69 = math.exp %68 : vector<32x8x8xf32>
    %cst_25 = arith.constant dense<0.000000e+00> : vector<32x8xf32>
    %70 = vector.multi_reduction <add>, %69, %cst_25 [2] : vector<32x8x8xf32> to vector<32x8xf32>
    %71 = vector.shape_cast %70 : vector<32x8xf32> to vector<32x8x1xf32>
    %72 = tpu.reciprocal %71 {approx = true} : vector<32x8x1xf32> -> vector<32x8x1xf32>
    %73 = vector.broadcast %72 : vector<32x8x1xf32> to vector<32x8x8xf32>
    %74 = arith.mulf %69, %73 : vector<32x8x8xf32>
    %75 = arith.truncf %74 : vector<32x8x8xf32> to vector<32x8x8xbf16>
    "tpu.trace_start"() <{level = 10 : i32, message = "bnm,bmd->bnd"}> : () -> ()
    %cst_26 = arith.constant dense<0.000000e+00> : vector<32x8x8xf32>
    %76 = tpu.matmul %75, %60, %cst_26 {dimension_numbers = #tpu.dot_dimension_numbers<[2], [1], [1], [2], [0, 0, 0, 1, 1, 2], [0], [0]>} : vector<32x8x8xbf16>, vector<32x8x8xbf16>, vector<32x8x8xf32> -> vector<32x8x8xf32>
    "tpu.trace_stop"() : () -> ()
    %77 = vector.extract_strided_slice %76 {offsets = [0, 0, 0], sizes = [8, 8, 8], strides = [1, 1, 1]} : vector<32x8x8xf32> to vector<8x8x8xf32>
    %78 = vector.extract_strided_slice %76 {offsets = [8, 0, 0], sizes = [8, 8, 8], strides = [1, 1, 1]} : vector<32x8x8xf32> to vector<8x8x8xf32>
    %79 = vector.extract_strided_slice %76 {offsets = [16, 0, 0], sizes = [8, 8, 8], strides = [1, 1, 1]} : vector<32x8x8xf32> to vector<8x8x8xf32>
    %80 = vector.extract_strided_slice %76 {offsets = [24, 0, 0], sizes = [8, 8, 8], strides = [1, 1, 1]} : vector<32x8x8xf32> to vector<8x8x8xf32>
    %81 = tpu.concatenate %77, %78, %79, %80 in 2 : vector<8x8x8xf32>, vector<8x8x8xf32>, vector<8x8x8xf32>, vector<8x8x8xf32> -> vector<8x8x32xf32>
    %82 = vector.shape_cast %81 : vector<8x8x32xf32> to vector<64x32xf32>
    %83 = arith.truncf %82 : vector<64x32xf32> to vector<64x32xbf16>
    %cst_27 = arith.constant dense<0.000000e+00> : vector<64x32xf32>
    %84 = tpu.matmul %83, %1, %cst_27 {dimension_numbers = #tpu.dot_dimension_numbers<[1], [0], [0], [1], [0, 0, 1, 1], [], []>} : vector<64x32xbf16>, vector<32x32xbf16>, vector<64x32xf32> -> vector<64x32xf32>
    %85 = vector.broadcast %6 : vector<1x32xf32> to vector<64x32xf32>
    %86 = arith.addf %84, %85 : vector<64x32xf32>
    %87 = arith.addf %12, %86 : vector<64x32xf32>
    %cst_28 = arith.constant dense<0.000000e+00> : vector<64xf32>
    %88 = vector.multi_reduction <add>, %87, %cst_28 [1] : vector<64x32xf32> to vector<64xf32>
    %89 = vector.shape_cast %88 : vector<64xf32> to vector<64x1xf32>
    %cst_29 = arith.constant 3.200000e+01 : f32
    %90 = vector.broadcast %cst_29 : f32 to vector<64x1xf32>
    %91 = arith.divf %89, %90 : vector<64x1xf32>
    %92 = vector.broadcast %91 : vector<64x1xf32> to vector<64x32xf32>
    %93 = arith.subf %87, %92 : vector<64x32xf32>
    %94 = arith.mulf %93, %93 : vector<64x32xf32>
    %cst_30 = arith.constant dense<0.000000e+00> : vector<64xf32>
    %95 = vector.multi_reduction <add>, %94, %cst_30 [1] : vector<64x32xf32> to vector<64xf32>
    %96 = vector.shape_cast %95 : vector<64xf32> to vector<64x1xf32>
    %cst_31 = arith.constant 3.200000e+01 : f32
    %97 = vector.broadcast %cst_31 : f32 to vector<64x1xf32>
    %98 = arith.divf %96, %97 : vector<64x1xf32>
    %99 = vector.broadcast %91 : vector<64x1xf32> to vector<64x32xf32>
    %100 = arith.subf %87, %99 : vector<64x32xf32>
    %cst_32 = arith.constant 9.99999974E-6 : f32
    %101 = vector.broadcast %cst_32 : f32 to vector<64x1xf32>
    %102 = arith.addf %98, %101 : vector<64x1xf32>
    %103 = math.rsqrt %102 : vector<64x1xf32>
    %104 = vector.broadcast %103 : vector<64x1xf32> to vector<64x32xf32>
    %105 = arith.mulf %100, %104 : vector<64x32xf32>
    %106 = vector.broadcast %7 : vector<1x32xf32> to vector<64x32xf32>
    %107 = arith.mulf %105, %106 : vector<64x32xf32>
    %108 = vector.broadcast %8 : vector<1x32xf32> to vector<64x32xf32>
    %109 = arith.addf %107, %108 : vector<64x32xf32>
    %110 = arith.truncf %109 : vector<64x32xf32> to vector<64x32xbf16>
    %cst_33 = arith.constant dense<0.000000e+00> : vector<64x64xf32>
    %111 = tpu.matmul %110, %2, %cst_33 {dimension_numbers = #tpu.dot_dimension_numbers<[1], [0], [0], [1], [0, 0, 1, 1], [], []>} : vector<64x32xbf16>, vector<32x64xbf16>, vector<64x64xf32> -> vector<64x64xf32>
    %112 = vector.broadcast %9 : vector<1x64xf32> to vector<64x64xf32>
    %113 = arith.addf %111, %112 : vector<64x64xf32>
    %cst_34 = arith.constant 5.000000e-01 : f32
    %114 = vector.broadcast %cst_34 : f32 to vector<64x64xf32>
    %115 = arith.mulf %114, %113 : vector<64x64xf32>
    %cst_35 = arith.constant 0.707106769 : f32
    %116 = vector.broadcast %cst_35 : f32 to vector<64x64xf32>
    %117 = arith.mulf %113, %116 : vector<64x64xf32>
    %118 = math.erf %117 : vector<64x64xf32>
    %cst_36 = arith.constant 1.000000e+00 : f32
    %119 = vector.broadcast %cst_36 : f32 to vector<64x64xf32>
    %120 = arith.addf %119, %118 : vector<64x64xf32>
    %121 = arith.mulf %115, %120 : vector<64x64xf32>
    %122 = arith.truncf %121 : vector<64x64xf32> to vector<64x64xbf16>
    %cst_37 = arith.constant dense<0.000000e+00> : vector<64x32xf32>
    %123 = tpu.matmul %122, %3, %cst_37 {dimension_numbers = #tpu.dot_dimension_numbers<[1], [0], [0], [1], [0, 0, 1, 1], [], []>} : vector<64x64xbf16>, vector<64x32xbf16>, vector<64x32xf32> -> vector<64x32xf32>
    %124 = vector.broadcast %10 : vector<1x32xf32> to vector<64x32xf32>
    %125 = arith.addf %123, %124 : vector<64x32xf32>
    %126 = arith.addf %109, %125 : vector<64x32xf32>
    %c0_38 = arith.constant 0 : index
    %c0_39 = arith.constant 0 : index
    %127 = vector.load %arg6[%c0_38, %c0_39] : memref<64x32xf32, #tpu.memory_space<vmem>>, vector<64x32xf32>
    tpu.vector_store %arg6[%c0_38, %c0_39], %126 {strides = array<i32>} : memref<64x32xf32, #tpu.memory_space<vmem>>, vector<64x32xf32>,
    %c0_40 = arith.constant 0 : index
    %c0_41 = arith.constant 0 : index
    %128 = tpu.strided_load %arg6[%c0_40, %c0_41] {strides = array<i32: 8, 1>} : memref<64x32xf32, #tpu.memory_space<vmem>>, vector<8x32xf32>
    %c1_42 = arith.constant 1 : index
    %c0_43 = arith.constant 0 : index
    %129 = tpu.strided_load %arg6[%c1_42, %c0_43] {strides = array<i32: 8, 1>} : memref<64x32xf32, #tpu.memory_space<vmem>>, vector<8x32xf32>
    %c2_44 = arith.constant 2 : index
    %c0_45 = arith.constant 0 : index
    %130 = tpu.strided_load %arg6[%c2_44, %c0_45] {strides = array<i32: 8, 1>} : memref<64x32xf32, #tpu.memory_space<vmem>>, vector<8x32xf32>
    %c3_46 = arith.constant 3 : index
    %c0_47 = arith.constant 0 : index
    %131 = tpu.strided_load %arg6[%c3_46, %c0_47] {strides = array<i32: 8, 1>} : memref<64x32xf32, #tpu.memory_space<vmem>>, vector<8x32xf32>
    %c4_48 = arith.constant 4 : index
    %c0_49 = arith.constant 0 : index
    %132 = tpu.strided_load %arg6[%c4_48, %c0_49] {strides = array<i32: 8, 1>} : memref<64x32xf32, #tpu.memory_space<vmem>>, vector<8x32xf32>
    %c5_50 = arith.constant 5 : index
    %c0_51 = arith.constant 0 : index
    %133 = tpu.strided_load %arg6[%c5_50, %c0_51] {strides = array<i32: 8, 1>} : memref<64x32xf32, #tpu.memory_space<vmem>>, vector<8x32xf32>
    %c6_52 = arith.constant 6 : index
    %c0_53 = arith.constant 0 : index
    %134 = tpu.strided_load %arg6[%c6_52, %c0_53] {strides = array<i32: 8, 1>} : memref<64x32xf32, #tpu.memory_space<vmem>>, vector<8x32xf32>
    %c7 = arith.constant 7 : index
    %c0_54 = arith.constant 0 : index
    %135 = tpu.strided_load %arg6[%c7, %c0_54] {strides = array<i32: 8, 1>} : memref<64x32xf32, #tpu.memory_space<vmem>>, vector<8x32xf32>
    %136 = tpu.concatenate %128, %129, %130, %131, %132, %133, %134, %135 in 1 : vector<8x32xf32>, vector<8x32xf32>, vector<8x32xf32>, vector<8x32xf32>, vector<8x32xf32>, vector<8x32xf32>, vector<8x32xf32>, vector<8x32xf32> -> vector<8x256xf32>
    %c0_55 = arith.constant 0 : index
    %c0_56 = arith.constant 0 : index
    %137 = vector.load %arg5[%c0_55, %c0_56] : memref<8x256xf32, #tpu.memory_space<vmem>>, vector<8x256xf32>
    tpu.vector_store %arg5[%c0_55, %c0_56], %136 {strides = array<i32>} : memref<8x256xf32, #tpu.memory_space<vmem>>, vector<8x256xf32>,
    return
  }
  func.func @transform_0(%arg0: i32) -> (i32, i32, i32) {
    %c0_i32 = arith.constant 0 : i32
    %c0_i32_0 = arith.constant 0 : i32
    %c0_i32_1 = arith.constant 0 : i32
    return %arg0, %c0_i32, %c0_i32_0 : i32, i32, i32
  }
  func.func @transform_1(%arg0: i32) -> (i32, i32, i32) {
    %c0_i32 = arith.constant 0 : i32
    %c0_i32_0 = arith.constant 0 : i32
    %c0_i32_1 = arith.constant 0 : i32
    return %arg0, %c0_i32, %c0_i32_0 : i32, i32, i32
  }
  func.func @transform_2(%arg0: i32) -> (i32, i32) {
    %c0_i32 = arith.constant 0 : i32
    %c0_i32_0 = arith.constant 0 : i32
    %c0_i32_1 = arith.constant 0 : i32
    return %c0_i32, %c0_i32_0 : i32, i32
  }
  func.func @transform_3(%arg0: i32) -> (i32, i32) {
    %c0_i32 = arith.constant 0 : i32
    %c0_i32_0 = arith.constant 0 : i32
    %c0_i32_1 = arith.constant 0 : i32
    return %c0_i32, %c0_i32_0 : i32, i32
  }
  func.func @transform_4(%arg0: i32) -> (i32, i32) {
    %c0_i32 = arith.constant 0 : i32
    %c0_i32_0 = arith.constant 0 : i32
    return %arg0, %c0_i32 : i32, i32
  }
}

</mosaic_0001>

<llo_original>
// kernel: tpu_custom_call.1
$region0: #{tpu_custom_call.1}
  #allocation0 [shape = 'u32[]', space=smem, size = 0x4, offset = 0x4, fixed_abs, tag = 'smem constant byte address 0x4 - core index']
  #allocation1 [shape = 'u32[144,128]{1,0:T(1,128)}', space=vmem, size = 0x12000, scoped, tag = 'internal scratch']
  #allocation2 [shape = 'f32[64,32]{1,0:T(8,128)}', space=vmem, size = 0x8000, scoped, tag = 'scratch operand']
  %s0 = inlined_call_operand.hbm [shape: f32[8,8,32], index: 0, kind: input, shape index: {}]
  %s1 = inlined_call_operand.hbm [shape: f32[8,8,8], index: 1, kind: input, shape index: {}]
  %s2 = inlined_call_operand.hbm [shape: f32[8,128], index: 2, kind: input, shape index: {}]
  %s3 = inlined_call_operand.hbm [shape: bf16[64,224], index: 3, kind: input, shape index: {}]
  %s4 = inlined_call_operand.hbm [shape: f32[8,256], index: 4, kind: output, shape index: {}]
  %s5 = sld [smem:[#allocation0]]
  $region42: #{tpu_custom_call.1} parent=0
    _
  %s7 = ssub.s32 1, %s5
  %s8 = scalar_select 0, %s7, %s5
  $region1: #{tpu_custom_call.1} parent=0
    #allocation3 [shape = 'u8[32768]{0}', space=vmem, size = 0x8000, scoped, tag = 'input window, operand 0, single buffered']
    #allocation4 [shape = 's32[1]{0}', space=sflag, size = 0x4, scoped, tag = 'scoped memory for tpu_custom_call.1']
    #allocation5 [shape = 's32[1]{0}', space=sflag, size = 0x4, scoped, tag = 'scoped memory for tpu_custom_call.1']
    #allocation6 [shape = 'u8[32768]{0}', space=vmem, size = 0x8000, scoped, tag = 'input window, operand 1, single buffered']
    #allocation7 [shape = 's32[1]{0}', space=sflag, size = 0x4, scoped, tag = 'scoped memory for tpu_custom_call.1']
    #allocation8 [shape = 'u8[4096]{0}', space=vmem, size = 0x1000, scoped, tag = 'input window, operand 2, single buffered']
    #allocation9 [shape = 'u8[32768]{0}', space=vmem, size = 0x8000, scoped, tag = 'input window, operand 3, single buffered']
    #allocation10 [shape = 's32[1]{0}', space=sflag, size = 0x4, scoped, tag = 'scoped memory for tpu_custom_call.1']
    #allocation11 [shape = 'u8[8192]{0}', space=vmem, size = 0x2000, scoped, tag = 'output window, operand 0, single buffered']
    %9 = vsyncpa [#allocation4], 0
    %10 = vsyncpa [#allocation7], 0
    %11 = vsyncpa [#allocation10], 0
    %12 = vsyncpa [#allocation5], 0
    // Predicated region
    $region2: #{tpu_custom_call.1} parent=1 // pred_check
      _
    $region3: #{tpu_custom_call.1} parent=1 // pred_check_branch
      %14 = sbr.rel (0) target = $region5
    $region4: #{tpu_custom_call.1} parent=1 // pred_region
      %s16 = ssub.s32 1024, 1024
      %17 = vsyncadd [#allocation4], %s16
      %s18 = sshll.u32 [#allocation3], 4
      %s19 = int_to_ptr.vmem [resolvable:$true] %s18
      %24 = dma.hbm_to_vmem [thread:$0]  %s0, 1024, %s19, [#allocation4], 128, 128, 8
    $region5: #{tpu_custom_call.1} parent=1 // pred_fallthru
      _
    // Predicated region
    $region6: #{tpu_custom_call.1} parent=1 // pred_check
      _
    $region7: #{tpu_custom_call.1} parent=1 // pred_check_branch
      %26 = sbr.rel (0) target = $region9
    $region8: #{tpu_custom_call.1} parent=1 // pred_region
      %s28 = ssub.s32 1024, 1024
      %29 = vsyncadd [#allocation7], %s28
      %s30 = sshll.u32 [#allocation6], 4
      %s31 = int_to_ptr.vmem [resolvable:$true] %s30
      %36 = dma.hbm_to_vmem [thread:$0]  %s1, 1024, %s31, [#allocation7], 128, 128, 8
    $region9: #{tpu_custom_call.1} parent=1 // pred_fallthru
      _
    // Predicated region
    $region10: #{tpu_custom_call.1} parent=1 // pred_check
      _
    $region11: #{tpu_custom_call.1} parent=1 // pred_check_branch
      %38 = sbr.rel (0) target = $region13
    $region12: #{tpu_custom_call.1} parent=1 // pred_region
      %s40 = ssub.s32 128, 128
      %41 = vsyncadd [#allocation7], %s40
      %s43 = sshll.u32 [#allocation8], 4
      %s44 = int_to_ptr.vmem [resolvable:$true] %s43
      %46 = dma.hbm_to_vmem [thread:$0]  %s2, 128, %s44, [#allocation7]
    $region13: #{tpu_custom_call.1} parent=1 // pred_fallthru
      _
    // Predicated region
    $region14: #{tpu_custom_call.1} parent=1 // pred_check
      _
    $region15: #{tpu_custom_call.1} parent=1 // pred_check_branch
      %48 = sbr.rel (0) target = $region17
    $region16: #{tpu_custom_call.1} parent=1 // pred_region
      %s50 = ssub.s32 1024, 1024
      %51 = vsyncadd [#allocation10], %s50
      %s52 = sshll.u32 [#allocation9], 4
      %s53 = int_to_ptr.vmem [resolvable:$true] %s52
      %58 = dma.hbm_to_vmem [thread:$0]  %s3, 1024, %s53, [#allocation10], 128, 128, 8
    $region17: #{tpu_custom_call.1} parent=1 // pred_fallthru
      _
    // Predicated region
    $region18: #{tpu_custom_call.1} parent=1 // pred_check
      _
    $region19: #{tpu_custom_call.1} parent=1 // pred_check_branch
      %60 = sbr.rel (0) target = $region21
    $region20: #{tpu_custom_call.1} parent=1 // pred_region
      %61 = dma.done [#allocation4], 1024
    $region21: #{tpu_custom_call.1} parent=1 // pred_fallthru
      _
    // Predicated region
    $region22: #{tpu_custom_call.1} parent=1 // pred_check
      _
    $region23: #{tpu_custom_call.1} parent=1 // pred_check_branch
      %63 = sbr.rel (0) target = $region25
    $region24: #{tpu_custom_call.1} parent=1 // pred_region
      %64 = dma.done [#allocation7], 1024
    $region25: #{tpu_custom_call.1} parent=1 // pred_fallthru
      _
    // Predicated region
    $region26: #{tpu_custom_call.1} parent=1 // pred_check
      _
    $region27: #{tpu_custom_call.1} parent=1 // pred_check_branch
      %66 = sbr.rel (0) target = $region29
    $region28: #{tpu_custom_call.1} parent=1 // pred_region
      %67 = dma.done [#allocation7], 128
    $region29: #{tpu_custom_call.1} parent=1 // pred_fallthru
      _
    // Predicated region
    $region30: #{tpu_custom_call.1} parent=1 // pred_check
      _
    $region31: #{tpu_custom_call.1} parent=1 // pred_check_branch
      %69 = sbr.rel (0) target = $region33
    $region32: #{tpu_custom_call.1} parent=1 // pred_region
      %70 = dma.done [#allocation10], 1024
    $region33: #{tpu_custom_call.1} parent=1 // pred_fallthru
      _
    %v72 = vld [vmem:[#allocation9] sm:$0xf]
    %v73 = vld [vmem:[#allocation9 + $0x8] sm:$0xf]
    %v74 = vld [vmem:[#allocation9 + $0x10] sm:$0xf]
    %v75 = vld [vmem:[#allocation9 + $0x18] sm:$0xf]
    %v76 = vld [vmem:[#allocation9 + $0x4] sm:$0xf]
    %v77 = vld [vmem:[#allocation9 + $0xc] sm:$0xf]
    %v78 = vld [vmem:[#allocation9 + $0x14] sm:$0xf]
    %v79 = vld [vmem:[#allocation9 + $0x1c] sm:$0xf]
    %v80 = vld [vmem:[#allocation9 + $0x24] sm:$0xf]
    %v81 = vld [vmem:[#allocation9 + $0x2c] sm:$0xf]
    %v82 = vld [vmem:[#allocation9 + $0x34] sm:$0xf]
    %v83 = vld [vmem:[#allocation9 + $0x3c] sm:$0xf]
    %v84 = vld [vmem:[#allocation8] sm:$0x1]
    %v85 = vld [vmem:[#allocation8 + $0x1] sm:$0x1]
    %v86 = vld [vmem:[#allocation8 + $0x2] sm:$0x1]
    %v87 = vld [vmem:[#allocation8 + $0x3] sm:$0x1]
    %v88 = vld [vmem:[#allocation8 + $0x4] sm:$0x1]
    %v89 = vld [vmem:[#allocation8 + $0x5] sm:$0x1]
    %v90 = vld [vmem:[#allocation8 + $0x6] sm:$0x1]
    %v91 = vld [vmem:[#allocation3] sm:$0xff]
    %v92 = vld [vmem:[#allocation3 + $0x8] sm:$0xff]
    %v93 = vld [vmem:[#allocation3 + $0x10] sm:$0xff]
    %v94 = vld [vmem:[#allocation3 + $0x18] sm:$0xff]
    %v95 = vld [vmem:[#allocation3 + $0x20] sm:$0xff]
    %v96 = vld [vmem:[#allocation3 + $0x28] sm:$0xff]
    %v97 = vld [vmem:[#allocation3 + $0x30] sm:$0xff]
    %v98 = vld [vmem:[#allocation3 + $0x38] sm:$0xff]
    %vm99 = vcmask 261120
    %v100 = vsel %vm99, %v91, 0.0
    %101 = vadd.xlane.f32.xlu0 %v100
    %v102 = vpop.xlane.xlu0 %101
    %v103 = vsel %vm99, %v92, 0.0
    %104 = vadd.xlane.f32.xlu0 %v103
    %v105 = vpop.xlane.xlu0 %104
    %v106 = vsel %vm99, %v93, 0.0
    %107 = vadd.xlane.f32.xlu0 %v106
    %v108 = vpop.xlane.xlu0 %107
    %v109 = vsel %vm99, %v94, 0.0
    %110 = vadd.xlane.f32.xlu0 %v109
    %v111 = vpop.xlane.xlu0 %110
    %v112 = vsel %vm99, %v95, 0.0
    %113 = vadd.xlane.f32.xlu0 %v112
    %v114 = vpop.xlane.xlu0 %113
    %v115 = vsel %vm99, %v96, 0.0
    %116 = vadd.xlane.f32.xlu0 %v115
    %v117 = vpop.xlane.xlu0 %116
    %v118 = vsel %vm99, %v97, 0.0
    %119 = vadd.xlane.f32.xlu0 %v118
    %v120 = vpop.xlane.xlu0 %119
    %v121 = vsel %vm99, %v98, 0.0
    %122 = vadd.xlane.f32.xlu0 %v121
    %v123 = vpop.xlane.xlu0 %122
    %v124 = vrcp.pop 32.0
    %v125 = vmul.f32 %v102, %v124
    %v126 = vmul.f32 %v105, %v124
    %v127 = vmul.f32 %v108, %v124
    %v128 = vmul.f32 %v111, %v124
    %v129 = vmul.f32 %v114, %v124
    %v130 = vmul.f32 %v117, %v124
    %v131 = vmul.f32 %v120, %v124
    %v132 = vmul.f32 %v123, %v124
    %v133 = vsub.f32 %v91, %v125
    %v134 = vsub.f32 %v92, %v126
    %v135 = vsub.f32 %v93, %v127
    %v136 = vsub.f32 %v94, %v128
    %v137 = vsub.f32 %v95, %v129
    %v138 = vsub.f32 %v96, %v130
    %v139 = vsub.f32 %v97, %v131
    %v140 = vsub.f32 %v98, %v132
    %v141 = vmul.f32 %v133, %v133
    %v142 = vmul.f32 %v134, %v134
    %v143 = vmul.f32 %v135, %v135
    %v144 = vmul.f32 %v136, %v136
    %v145 = vmul.f32 %v137, %v137
    %v146 = vmul.f32 %v138, %v138
    %v147 = vmul.f32 %v139, %v139
    %v148 = vmul.f32 %v140, %v140
    %v149 = vsel %vm99, %v141, 0.0
    %150 = vadd.xlane.f32.xlu0 %v149
    %v151 = vpop.xlane.xlu0 %150
    %v152 = vsel %vm99, %v142, 0.0
    %153 = vadd.xlane.f32.xlu0 %v152
    %v154 = vpop.xlane.xlu0 %153
    %v155 = vsel %vm99, %v143, 0.0
    %156 = vadd.xlane.f32.xlu0 %v155
    %v157 = vpop.xlane.xlu0 %156
    %v158 = vsel %vm99, %v144, 0.0
    %159 = vadd.xlane.f32.xlu0 %v158
    %v160 = vpop.xlane.xlu0 %159
    %v161 = vsel %vm99, %v145, 0.0
    %162 = vadd.xlane.f32.xlu0 %v161
    %v163 = vpop.xlane.xlu0 %162
    %v164 = vsel %vm99, %v146, 0.0
    %165 = vadd.xlane.f32.xlu0 %v164
    %v166 = vpop.xlane.xlu0 %165
    %v167 = vsel %vm99, %v147, 0.0
    %168 = vadd.xlane.f32.xlu0 %v167
    %v169 = vpop.xlane.xlu0 %168
    %v170 = vsel %vm99, %v148, 0.0
    %171 = vadd.xlane.f32.xlu0 %v170
    %v172 = vpop.xlane.xlu0 %171
    %v173 = vmul.f32 %v151, %v124
    %v174 = vmul.f32 %v154, %v124
    %v175 = vmul.f32 %v157, %v124
    %v176 = vmul.f32 %v160, %v124
    %v177 = vmul.f32 %v163, %v124
    %v178 = vmul.f32 %v166, %v124
    %v179 = vmul.f32 %v169, %v124
    %v180 = vmul.f32 %v172, %v124
    %v181 = vadd.f32 %v173, 1e-05
    %v182 = vadd.f32 %v174, 1e-05
    %v183 = vadd.f32 %v175, 1e-05
    %v184 = vadd.f32 %v176, 1e-05
    %v185 = vadd.f32 %v177, 1e-05
    %v186 = vadd.f32 %v178, 1e-05
    %v187 = vadd.f32 %v179, 1e-05
    %v188 = vadd.f32 %v180, 1e-05
    %v189 = vrsqrt.pop %v181
    %v190 = vrsqrt.pop %v182
    %v191 = vrsqrt.pop %v183
    %v192 = vrsqrt.pop %v184
    %v193 = vrsqrt.pop %v185
    %v194 = vrsqrt.pop %v186
    %v195 = vrsqrt.pop %v187
    %v196 = vrsqrt.pop %v188
    %v197 = vmul.f32 %v133, %v189
    %v198 = vmul.f32 %v134, %v190
    %v199 = vmul.f32 %v135, %v191
    %v200 = vmul.f32 %v136, %v192
    %v201 = vmul.f32 %v137, %v193
    %v202 = vmul.f32 %v138, %v194
    %v203 = vmul.f32 %v139, %v195
    %v204 = vmul.f32 %v140, %v196
    %v205 = vlaneseq
    %v206 = vshrl.u32 %v205, 7
    %v207 = vsub.s32 0, %v206
    %v208 = vrot.slane %v84, %v207
    %v209 = vmul.f32 %v197, %v208
    %v210 = vmul.f32 %v198, %v208
    %v211 = vmul.f32 %v199, %v208
    %v212 = vmul.f32 %v200, %v208
    %v213 = vmul.f32 %v201, %v208
    %v214 = vmul.f32 %v202, %v208
    %v215 = vmul.f32 %v203, %v208
    %v216 = vmul.f32 %v204, %v208
    %v217 = vlaneseq
    %v218 = vshrl.u32 %v217, 7
    %v219 = vsub.s32 0, %v218
    %v220 = vrot.slane %v85, %v219
    %v221 = vadd.f32 %v209, %v220
    %v222 = vadd.f32 %v210, %v220
    %v223 = vadd.f32 %v211, %v220
    %v224 = vadd.f32 %v212, %v220
    %v225 = vadd.f32 %v213, %v220
    %v226 = vadd.f32 %v214, %v220
    %v227 = vadd.f32 %v215, %v220
    %v228 = vadd.f32 %v216, %v220
    %v229 = vpack.c.bf16 %v222, %v221
    %v230 = vpack.c.bf16 %v224, %v223
    %v231 = vpack.c.bf16 %v226, %v225
    %v232 = vpack.c.bf16 %v228, %v227
    %v237 = vunpack.c.l.b16 %v72
    %v238 = vunpack.c.l.b16 %v73
    %v239 = vunpack.c.l.b16 %v74
    %v240 = vunpack.c.l.b16 %v75
    %v241 = vpack.c.b16 %v238, %v237
    %v242 = vpack.c.b16 %v240, %v239
    %v246 = vsel %vm99, %v229, 0
    %v249 = vsel %vm99, %v230, 0
    %v252 = vsel %vm99, %v231, 0
    %v255 = vsel %vm99, %v232, 0
    %257 = vmatprep.subr.bf16.mxu0 0
    %258 = vmatpush1.bf16.msra.mxu0 %v241
    %259 = vmatprep.subr.bf16.mxu0 0
    %260 = vmatpush1.bf16.msra.mxu0 %v242
    %261 = vmatprep.subr.bf16.mxu0 0
    %262 = vmatpush1.bf16.msra.mxu0 0
    %263 = vmatprep.subr.bf16.mxu0 0
    %264 = vmatpush1.bf16.msra.mxu0 0
    %265 = vmatprep.subr.bf16.mxu0 0
    %266 = vmatpush1.bf16.msra.mxu0 0
    %267 = vmatprep.subr.bf16.mxu0 0
    %268 = vmatpush1.bf16.msra.mxu0 0
    %269 = vmatprep.subr.bf16.mxu0 0
    %270 = vmatpush1.bf16.msra.mxu0 0
    %271 = vmatprep.subr.bf16.mxu0 0
    %272 = vmatpush1.bf16.msra.mxu0 0
    %273 = vmatprep.subr.bf16.mxu0 0
    %274 = vmatpush1.bf16.msra.mxu0 0
    %275 = vmatprep.subr.bf16.mxu0 0
    %276 = vmatpush1.bf16.msra.mxu0 0
    %277 = vmatprep.subr.bf16.mxu0 0
    %278 = vmatpush1.bf16.msra.mxu0 0
    %279 = vmatprep.subr.bf16.mxu0 0
    %280 = vmatpush1.bf16.msra.mxu0 0
    %281 = vmatprep.subr.bf16.mxu0 0
    %282 = vmatpush1.bf16.msra.mxu0 0
    %283 = vmatprep.subr.bf16.mxu0 0
    %284 = vmatpush1.bf16.msra.mxu0 0
    %285 = vmatprep.subr.bf16.mxu0 0
    %286 = vmatpush1.bf16.msra.mxu0 0
    %287 = vmatprep.subr.bf16.mxu0 0
    %288 = vmatpush1.bf16.msra.mxu0 0
    %289 = vmatprep.mubr.bf16.mxu0 0
    %290 = vmatmul.mubr.bf16.gmra.mrb[0].mxu0 %v246
    %v291 = vpop.f32.mrb[0].mxu0
    %v292 = vadd.f32 0.0, %v291
    %v293 = vpop.f32.mrb[0].mxu0
    %v294 = vpop.f32.mrb[0].mxu0
    %v295 = vadd.f32 0.0, %v294
    %v296 = vpop.f32.mrb[0].mxu0
    %297 = vmatprep.mubr.bf16.mxu0 0
    %298 = vmatmul.mubr.bf16.gmra.mrb[0].mxu0 %v249
    %v299 = vpop.f32.mrb[0].mxu0
    %v300 = vadd.f32 0.0, %v299
    %v301 = vpop.f32.mrb[0].mxu0
    %v302 = vpop.f32.mrb[0].mxu0
    %v303 = vadd.f32 0.0, %v302
    %v304 = vpop.f32.mrb[0].mxu0
    %305 = vmatprep.mubr.bf16.mxu0 0
    %306 = vmatmul.mubr.bf16.gmra.mrb[0].mxu0 %v252
    %v307 = vpop.f32.mrb[0].mxu0
    %v308 = vadd.f32 0.0, %v307
    %v309 = vpop.f32.mrb[0].mxu0
    %v310 = vpop.f32.mrb[0].mxu0
    %v311 = vadd.f32 0.0, %v310
    %v312 = vpop.f32.mrb[0].mxu0
    %313 = vmatprep.mubr.bf16.mxu0 0
    %314 = vmatmul.mubr.bf16.gmra.mrb[0].mxu0 %v255
    %v315 = vpop.f32.mrb[0].mxu0
    %v316 = vadd.f32 0.0, %v315
    %v317 = vpop.f32.mrb[0].mxu0
    %v318 = vpop.f32.mrb[0].mxu0
    %v319 = vadd.f32 0.0, %v318
    %v320 = vpop.f32.mrb[0].mxu0
    %321 = vdwg.mxu0
    %330 = vrot.lane.b32.xlu0 %v292, 120
    %v331 = vpop.permute.xlu0 %330
    %332 = vrot.lane.b32.xlu0 %v295, 120
    %v333 = vpop.permute.xlu0 %332
    %334 = vrot.lane.b32.xlu0 %v300, 120
    %v335 = vpop.permute.xlu0 %334
    %336 = vrot.lane.b32.xlu0 %v303, 120
    %v337 = vpop.permute.xlu0 %336
    %338 = vrot.lane.b32.xlu0 %v308, 120
    %v339 = vpop.permute.xlu0 %338
    %340 = vrot.lane.b32.xlu0 %v311, 120
    %v341 = vpop.permute.xlu0 %340
    %342 = vrot.lane.b32.xlu0 %v316, 120
    %v343 = vpop.permute.xlu0 %342
    %344 = vrot.lane.b32.xlu0 %v319, 120
    %v345 = vpop.permute.xlu0 %344
    %354 = vrot.lane.b32.xlu0 %v292, 112
    %v355 = vpop.permute.xlu0 %354
    %356 = vrot.lane.b32.xlu0 %v295, 112
    %v357 = vpop.permute.xlu0 %356
    %358 = vrot.lane.b32.xlu0 %v300, 112
    %v359 = vpop.permute.xlu0 %358
    %360 = vrot.lane.b32.xlu0 %v303, 112
    %v361 = vpop.permute.xlu0 %360
    %362 = vrot.lane.b32.xlu0 %v308, 112
    %v363 = vpop.permute.xlu0 %362
    %364 = vrot.lane.b32.xlu0 %v311, 112
    %v365 = vpop.permute.xlu0 %364
    %366 = vrot.lane.b32.xlu0 %v316, 112
    %v367 = vpop.permute.xlu0 %366
    %368 = vrot.lane.b32.xlu0 %v319, 112
    %v369 = vpop.permute.xlu0 %368
    %378 = vrot.lane.b32.xlu0 %v292, 104
    %v379 = vpop.permute.xlu0 %378
    %380 = vrot.lane.b32.xlu0 %v295, 104
    %v381 = vpop.permute.xlu0 %380
    %382 = vrot.lane.b32.xlu0 %v300, 104
    %v383 = vpop.permute.xlu0 %382
    %384 = vrot.lane.b32.xlu0 %v303, 104
    %v385 = vpop.permute.xlu0 %384
    %386 = vrot.lane.b32.xlu0 %v308, 104
    %v387 = vpop.permute.xlu0 %386
    %388 = vrot.lane.b32.xlu0 %v311, 104
    %v389 = vpop.permute.xlu0 %388
    %390 = vrot.lane.b32.xlu0 %v316, 104
    %v391 = vpop.permute.xlu0 %390
    %392 = vrot.lane.b32.xlu0 %v319, 104
    %v393 = vpop.permute.xlu0 %392
    %v402 = vpack.c.bf16 %v292, %v292
    %v403 = vpack.c.bf16 %v295, %v295
    %v404 = vpack.c.bf16 %v300, %v300
    %v405 = vpack.c.bf16 %v303, %v303
    %v406 = vpack.c.bf16 %v308, %v308
    %v407 = vpack.c.bf16 %v311, %v311
    %v408 = vpack.c.bf16 %v316, %v316
    %v409 = vpack.c.bf16 %v319, %v319
    %v410 = vpack.c.bf16 %v331, %v331
    %v411 = vpack.c.bf16 %v333, %v333
    %v412 = vpack.c.bf16 %v335, %v335
    %v413 = vpack.c.bf16 %v337, %v337
    %v414 = vpack.c.bf16 %v339, %v339
    %v415 = vpack.c.bf16 %v341, %v341
    %v416 = vpack.c.bf16 %v343, %v343
    %v417 = vpack.c.bf16 %v345, %v345
    %v418 = vpack.c.bf16 %v355, %v355
    %v419 = vpack.c.bf16 %v357, %v357
    %v420 = vpack.c.bf16 %v359, %v359
    %v421 = vpack.c.bf16 %v361, %v361
    %v422 = vpack.c.bf16 %v363, %v363
    %v423 = vpack.c.bf16 %v365, %v365
    %v424 = vpack.c.bf16 %v367, %v367
    %v425 = vpack.c.bf16 %v369, %v369
    %v426 = vpack.c.bf16 %v379, %v379
    %v427 = vpack.c.bf16 %v381, %v381
    %v428 = vpack.c.bf16 %v383, %v383
    %v429 = vpack.c.bf16 %v385, %v385
    %v430 = vpack.c.bf16 %v387, %v387
    %v431 = vpack.c.bf16 %v389, %v389
    %v432 = vpack.c.bf16 %v391, %v391
    %v433 = vpack.c.bf16 %v393, %v393
    %v434 = vld [vmem:[#allocation6] sm:$0xff]
    %v435 = vld [vmem:[#allocation6 + $0x8] sm:$0xff]
    %v436 = vld [vmem:[#allocation6 + $0x10] sm:$0xff]
    %v437 = vld [vmem:[#allocation6 + $0x18] sm:$0xff]
    %v438 = vld [vmem:[#allocation6 + $0x20] sm:$0xff]
    %v439 = vld [vmem:[#allocation6 + $0x28] sm:$0xff]
    %v440 = vld [vmem:[#allocation6 + $0x30] sm:$0xff]
    %v441 = vld [vmem:[#allocation6 + $0x38] sm:$0xff]
    %443 = vrot.lane.b32.xlu0 %v402, 96
    %v444 = vpop.permute.xlu0 %443
    %vm445 = vcmask 64512
    %v447 = vsel %vm445, %v402, 0
    %v450 = vsel %vm445, %v444, 0
    %452 = vmatprep.subr.bf16.mxu0 0
    %453 = vmatpush1.bf16.xpose.msra.mxu0 %v450
    %454 = vmatprep.subr.bf16.mxu0 0
    %455 = vmatpush1.bf16.xpose.msra.mxu0 0
    %456 = vmatprep.subr.bf16.mxu0 0
    %457 = vmatpush1.bf16.xpose.msra.mxu0 0
    %458 = vmatprep.subr.bf16.mxu0 0
    %459 = vmatpush1.bf16.xpose.msra.mxu0 0
    %460 = vmatprep.subr.bf16.mxu0 0
    %461 = vmatpush1.bf16.xpose.msra.mxu0 0
    %462 = vmatprep.subr.bf16.mxu0 0
    %463 = vmatpush1.bf16.xpose.msra.mxu0 0
    %464 = vmatprep.subr.bf16.mxu0 0
    %465 = vmatpush1.bf16.xpose.msra.mxu0 0
    %466 = vmatprep.subr.bf16.mxu0 0
    %467 = vmatpush1.bf16.xpose.msra.mxu0 0
    %468 = vmatprep.subr.bf16.mxu0 0
    %469 = vmatpush1.bf16.xpose.msra.mxu0 0
    %470 = vmatprep.subr.bf16.mxu0 0
    %471 = vmatpush1.bf16.xpose.msra.mxu0 0
    %472 = vmatprep.subr.bf16.mxu0 0
    %473 = vmatpush1.bf16.xpose.msra.mxu0 0
    %474 = vmatprep.subr.bf16.mxu0 0
    %475 = vmatpush1.bf16.xpose.msra.mxu0 0
    %476 = vmatprep.subr.bf16.mxu0 0
    %477 = vmatpush1.bf16.xpose.msra.mxu0 0
    %478 = vmatprep.subr.bf16.mxu0 0
    %479 = vmatpush1.bf16.xpose.msra.mxu0 0
    %480 = vmatprep.subr.bf16.mxu0 0
    %481 = vmatpush1.bf16.xpose.msra.mxu0 0
    %482 = vmatprep.subr.bf16.mxu0 0
    %483 = vmatpush1.bf16.xpose.msra.mxu0 0
    %484 = vmatprep.mubr.bf16.mxu0 0
    %485 = vmatmul.mubr.bf16.gmra.mrb[0].mxu0 %v447
    %v486 = vpop.f32.mrb[0].mxu0
    %v487 = vadd.f32 %v434, %v486
    %v488 = vpop.f32.mrb[0].mxu0
    %v489 = vpop.f32.mrb[0].mxu0
    %v490 = vpop.f32.mrb[0].mxu0
    %491 = vdwg.mxu0
    %493 = vrot.lane.b32.xlu0 %v403, 96
    %v494 = vpop.permute.xlu0 %493
    %v496 = vsel %vm445, %v403, 0
    %v499 = vsel %vm445, %v494, 0
    %501 = vmatprep.subr.bf16.mxu0 0
    %502 = vmatpush1.bf16.xpose.msra.mxu0 %v499
    %503 = vmatprep.subr.bf16.mxu0 0
    %504 = vmatpush1.bf16.xpose.msra.mxu0 0
    %505 = vmatprep.subr.bf16.mxu0 0
    %506 = vmatpush1.bf16.xpose.msra.mxu0 0
    %507 = vmatprep.subr.bf16.mxu0 0
    %508 = vmatpush1.bf16.xpose.msra.mxu0 0
    %509 = vmatprep.subr.bf16.mxu0 0
    %510 = vmatpush1.bf16.xpose.msra.mxu0 0
    %511 = vmatprep.subr.bf16.mxu0 0
    %512 = vmatpush1.bf16.xpose.msra.mxu0 0
    %513 = vmatprep.subr.bf16.mxu0 0
    %514 = vmatpush1.bf16.xpose.msra.mxu0 0
    %515 = vmatprep.subr.bf16.mxu0 0
    %516 = vmatpush1.bf16.xpose.msra.mxu0 0
    %517 = vmatprep.subr.bf16.mxu0 0
    %518 = vmatpush1.bf16.xpose.msra.mxu0 0
    %519 = vmatprep.subr.bf16.mxu0 0
    %520 = vmatpush1.bf16.xpose.msra.mxu0 0
    %521 = vmatprep.subr.bf16.mxu0 0
    %522 = vmatpush1.bf16.xpose.msra.mxu0 0
    %523 = vmatprep.subr.bf16.mxu0 0
    %524 = vmatpush1.bf16.xpose.msra.mxu0 0
    %525 = vmatprep.subr.bf16.mxu0 0
    %526 = vmatpush1.bf16.xpose.msra.mxu0 0
    %527 = vmatprep.subr.bf16.mxu0 0
    %528 = vmatpush1.bf16.xpose.msra.mxu0 0
    %529 = vmatprep.subr.bf16.mxu0 0
    %530 = vmatpush1.bf16.xpose.msra.mxu0 0
    %531 = vmatprep.subr.bf16.mxu0 0
    %532 = vmatpush1.bf16.xpose.msra.mxu0 0
    %533 = vmatprep.mubr.bf16.mxu0 0
    %534 = vmatmul.mubr.bf16.gmra.mrb[0].mxu0 %v496
    %v535 = vpop.f32.mrb[0].mxu0
    %v536 = vadd.f32 %v435, %v535
    %v537 = vpop.f32.mrb[0].mxu0
    %v538 = vpop.f32.mrb[0].mxu0
    %v539 = vpop.f32.mrb[0].mxu0
    %540 = vdwg.mxu0
    %542 = vrot.lane.b32.xlu0 %v404, 96
    %v543 = vpop.permute.xlu0 %542
    %v545 = vsel %vm445, %v404, 0
    %v548 = vsel %vm445, %v543, 0
    %550 = vmatprep.subr.bf16.mxu0 0
    %551 = vmatpush1.bf16.xpose.msra.mxu0 %v548
    %552 = vmatprep.subr.bf16.mxu0 0
    %553 = vmatpush1.bf16.xpose.msra.mxu0 0
    %554 = vmatprep.subr.bf16.mxu0 0
    %555 = vmatpush1.bf16.xpose.msra.mxu0 0
    %556 = vmatprep.subr.bf16.mxu0 0
    %557 = vmatpush1.bf16.xpose.msra.mxu0 0
    %558 = vmatprep.subr.bf16.mxu0 0
    %559 = vmatpush1.bf16.xpose.msra.mxu0 0
    %560 = vmatprep.subr.bf16.mxu0 0
    %561 = vmatpush1.bf16.xpose.msra.mxu0 0
    %562 = vmatprep.subr.bf16.mxu0 0
    %563 = vmatpush1.bf16.xpose.msra.mxu0 0
    %564 = vmatprep.subr.bf16.mxu0 0
    %565 = vmatpush1.bf16.xpose.msra.mxu0 0
    %566 = vmatprep.subr.bf16.mxu0 0
    %567 = vmatpush1.bf16.xpose.msra.mxu0 0
    %568 = vmatprep.subr.bf16.mxu0 0
    %569 = vmatpush1.bf16.xpose.msra.mxu0 0
    %570 = vmatprep.subr.bf16.mxu0 0
    %571 = vmatpush1.bf16.xpose.msra.mxu0 0
    %572 = vmatprep.subr.bf16.mxu0 0
    %573 = vmatpush1.bf16.xpose.msra.mxu0 0
    %574 = vmatprep.subr.bf16.mxu0 0
    %575 = vmatpush1.bf16.xpose.msra.mxu0 0
    %576 = vmatprep.subr.bf16.mxu0 0
    %577 = vmatpush1.bf16.xpose.msra.mxu0 0
    %578 = vmatprep.subr.bf16.mxu0 0
    %579 = vmatpush1.bf16.xpose.msra.mxu0 0
    %580 = vmatprep.subr.bf16.mxu0 0
    %581 = vmatpush1.bf16.xpose.msra.mxu0 0
    %582 = vmatprep.mubr.bf16.mxu0 0
    %583 = vmatmul.mubr.bf16.gmra.mrb[0].mxu0 %v545
    %v584 = vpop.f32.mrb[0].mxu0
    %v585 = vadd.f32 %v436, %v584
    %v586 = vpop.f32.mrb[0].mxu0
    %v587 = vpop.f32.mrb[0].mxu0
    %v588 = vpop.f32.mrb[0].mxu0
    %589 = vdwg.mxu0
    %591 = vrot.lane.b32.xlu0 %v405, 96
    %v592 = vpop.permute.xlu0 %591
    %v594 = vsel %vm445, %v405, 0
    %v597 = vsel %vm445, %v592, 0
    %599 = vmatprep.subr.bf16.mxu0 0
    %600 = vmatpush1.bf16.xpose.msra.mxu0 %v597
    %601 = vmatprep.subr.bf16.mxu0 0
    %602 = vmatpush1.bf16.xpose.msra.mxu0 0
    %603 = vmatprep.subr.bf16.mxu0 0
    %604 = vmatpush1.bf16.xpose.msra.mxu0 0
    %605 = vmatprep.subr.bf16.mxu0 0
    %606 = vmatpush1.bf16.xpose.msra.mxu0 0
    %607 = vmatprep.subr.bf16.mxu0 0
    %608 = vmatpush1.bf16.xpose.msra.mxu0 0
    %609 = vmatprep.subr.bf16.mxu0 0
    %610 = vmatpush1.bf16.xpose.msra.mxu0 0
    %611 = vmatprep.subr.bf16.mxu0 0
    %612 = vmatpush1.bf16.xpose.msra.mxu0 0
    %613 = vmatprep.subr.bf16.mxu0 0
    %614 = vmatpush1.bf16.xpose.msra.mxu0 0
    %615 = vmatprep.subr.bf16.mxu0 0
    %616 = vmatpush1.bf16.xpose.msra.mxu0 0
    %617 = vmatprep.subr.bf16.mxu0 0
    %618 = vmatpush1.bf16.xpose.msra.mxu0 0
    %619 = vmatprep.subr.bf16.mxu0 0
    %620 = vmatpush1.bf16.xpose.msra.mxu0 0
    %621 = vmatprep.subr.bf16.mxu0 0
    %622 = vmatpush1.bf16.xpose.msra.mxu0 0
    %623 = vmatprep.subr.bf16.mxu0 0
    %624 = vmatpush1.bf16.xpose.msra.mxu0 0
    %625 = vmatprep.subr.bf16.mxu0 0
    %626 = vmatpush1.bf16.xpose.msra.mxu0 0
    %627 = vmatprep.subr.bf16.mxu0 0
    %628 = vmatpush1.bf16.xpose.msra.mxu0 0
    %629 = vmatprep.subr.bf16.mxu0 0
    %630 = vmatpush1.bf16.xpose.msra.mxu0 0
    %631 = vmatprep.mubr.bf16.mxu0 0
    %632 = vmatmul.mubr.bf16.gmra.mrb[0].mxu0 %v594
    %v633 = vpop.f32.mrb[0].mxu0
    %v634 = vadd.f32 %v437, %v633
    %v635 = vpop.f32.mrb[0].mxu0
    %v636 = vpop.f32.mrb[0].mxu0
    %v637 = vpop.f32.mrb[0].mxu0
    %638 = vdwg.mxu0
    %640 = vrot.lane.b32.xlu0 %v406, 96
    %v641 = vpop.permute.xlu0 %640
    %v643 = vsel %vm445, %v406, 0
    %v646 = vsel %vm445, %v641, 0
    %648 = vmatprep.subr.bf16.mxu0 0
    %649 = vmatpush1.bf16.xpose.msra.mxu0 %v646
    %650 = vmatprep.subr.bf16.mxu0 0
    %651 = vmatpush1.bf16.xpose.msra.mxu0 0
    %652 = vmatprep.subr.bf16.mxu0 0
    %653 = vmatpush1.bf16.xpose.msra.mxu0 0
    %654 = vmatprep.subr.bf16.mxu0 0
    %655 = vmatpush1.bf16.xpose.msra.mxu0 0
    %656 = vmatprep.subr.bf16.mxu0 0
    %657 = vmatpush1.bf16.xpose.msra.mxu0 0
    %658 = vmatprep.subr.bf16.mxu0 0
    %659 = vmatpush1.bf16.xpose.msra.mxu0 0
    %660 = vmatprep.subr.bf16.mxu0 0
    %661 = vmatpush1.bf16.xpose.msra.mxu0 0
    %662 = vmatprep.subr.bf16.mxu0 0
    %663 = vmatpush1.bf16.xpose.msra.mxu0 0
    %664 = vmatprep.subr.bf16.mxu0 0
    %665 = vmatpush1.bf16.xpose.msra.mxu0 0
    %666 = vmatprep.subr.bf16.mxu0 0
    %667 = vmatpush1.bf16.xpose.msra.mxu0 0
    %668 = vmatprep.subr.bf16.mxu0 0
    %669 = vmatpush1.bf16.xpose.msra.mxu0 0
    %670 = vmatprep.subr.bf16.mxu0 0
    %671 = vmatpush1.bf16.xpose.msra.mxu0 0
    %672 = vmatprep.subr.bf16.mxu0 0
    %673 = vmatpush1.bf16.xpose.msra.mxu0 0
    %674 = vmatprep.subr.bf16.mxu0 0
    %675 = vmatpush1.bf16.xpose.msra.mxu0 0
    %676 = vmatprep.subr.bf16.mxu0 0
    %677 = vmatpush1.bf16.xpose.msra.mxu0 0
    %678 = vmatprep.subr.bf16.mxu0 0
    %679 = vmatpush1.bf16.xpose.msra.mxu0 0
    %680 = vmatprep.mubr.bf16.mxu0 0
    %681 = vmatmul.mubr.bf16.gmra.mrb[0].mxu0 %v643
    %v682 = vpop.f32.mrb[0].mxu0
    %v683 = vadd.f32 %v438, %v682
    %v684 = vpop.f32.mrb[0].mxu0
    %v685 = vpop.f32.mrb[0].mxu0
    %v686 = vpop.f32.mrb[0].mxu0
    %687 = vdwg.mxu0
    %689 = vrot.lane.b32.xlu0 %v407, 96
    %v690 = vpop.permute.xlu0 %689
    %v692 = vsel %vm445, %v407, 0
    %v695 = vsel %vm445, %v690, 0
    %697 = vmatprep.subr.bf16.mxu0 0
    %698 = vmatpush1.bf16.xpose.msra.mxu0 %v695
    %699 = vmatprep.subr.bf16.mxu0 0
    %700 = vmatpush1.bf16.xpose.msra.mxu0 0
    %701 = vmatprep.subr.bf16.mxu0 0
    %702 = vmatpush1.bf16.xpose.msra.mxu0 0
    %703 = vmatprep.subr.bf16.mxu0 0
    %704 = vmatpush1.bf16.xpose.msra.mxu0 0
    %705 = vmatprep.subr.bf16.mxu0 0
    %706 = vmatpush1.bf16.xpose.msra.mxu0 0
    %707 = vmatprep.subr.bf16.mxu0 0
    %708 = vmatpush1.bf16.xpose.msra.mxu0 0
    %709 = vmatprep.subr.bf16.mxu0 0
    %710 = vmatpush1.bf16.xpose.msra.mxu0 0
    %711 = vmatprep.subr.bf16.mxu0 0
    %712 = vmatpush1.bf16.xpose.msra.mxu0 0
    %713 = vmatprep.subr.bf16.mxu0 0
    %714 = vmatpush1.bf16.xpose.msra.mxu0 0
    %715 = vmatprep.subr.bf16.mxu0 0
    %716 = vmatpush1.bf16.xpose.msra.mxu0 0
    %717 = vmatprep.subr.bf16.mxu0 0
    %718 = vmatpush1.bf16.xpose.msra.mxu0 0
    %719 = vmatprep.subr.bf16.mxu0 0
    %720 = vmatpush1.bf16.xpose.msra.mxu0 0
    %721 = vmatprep.subr.bf16.mxu0 0
    %722 = vmatpush1.bf16.xpose.msra.mxu0 0
    %723 = vmatprep.subr.bf16.mxu0 0
    %724 = vmatpush1.bf16.xpose.msra.mxu0 0
    %725 = vmatprep.subr.bf16.mxu0 0
    %726 = vmatpush1.bf16.xpose.msra.mxu0 0
    %727 = vmatprep.subr.bf16.mxu0 0
    %728 = vmatpush1.bf16.xpose.msra.mxu0 0
    %729 = vmatprep.mubr.bf16.mxu0 0
    %730 = vmatmul.mubr.bf16.gmra.mrb[0].mxu0 %v692
    %v731 = vpop.f32.mrb[0].mxu0
    %v732 = vadd.f32 %v439, %v731
    %v733 = vpop.f32.mrb[0].mxu0
    %v734 = vpop.f32.mrb[0].mxu0
    %v735 = vpop.f32.mrb[0].mxu0
    %736 = vdwg.mxu0
    %738 = vrot.lane.b32.xlu0 %v408, 96
    %v739 = vpop.permute.xlu0 %738
    %v741 = vsel %vm445, %v408, 0
    %v744 = vsel %vm445, %v739, 0
    %746 = vmatprep.subr.bf16.mxu0 0
    %747 = vmatpush1.bf16.xpose.msra.mxu0 %v744
    %748 = vmatprep.subr.bf16.mxu0 0
    %749 = vmatpush1.bf16.xpose.msra.mxu0 0
    %750 = vmatprep.subr.bf16.mxu0 0
    %751 = vmatpush1.bf16.xpose.msra.mxu0 0
    %752 = vmatprep.subr.bf16.mxu0 0
    %753 = vmatpush1.bf16.xpose.msra.mxu0 0
    %754 = vmatprep.subr.bf16.mxu0 0
    %755 = vmatpush1.bf16.xpose.msra.mxu0 0
    %756 = vmatprep.subr.bf16.mxu0 0
    %757 = vmatpush1.bf16.xpose.msra.mxu0 0
    %758 = vmatprep.subr.bf16.mxu0 0
    %759 = vmatpush1.bf16.xpose.msra.mxu0 0
    %760 = vmatprep.subr.bf16.mxu0 0
    %761 = vmatpush1.bf16.xpose.msra.mxu0 0
    %762 = vmatprep.subr.bf16.mxu0 0
    %763 = vmatpush1.bf16.xpose.msra.mxu0 0
    %764 = vmatprep.subr.bf16.mxu0 0
    %765 = vmatpush1.bf16.xpose.msra.mxu0 0
    %766 = vmatprep.subr.bf16.mxu0 0
    %767 = vmatpush1.bf16.xpose.msra.mxu0 0
    %768 = vmatprep.subr.bf16.mxu0 0
    %769 = vmatpush1.bf16.xpose.msra.mxu0 0
    %770 = vmatprep.subr.bf16.mxu0 0
    %771 = vmatpush1.bf16.xpose.msra.mxu0 0
    %772 = vmatprep.subr.bf16.mxu0 0
    %773 = vmatpush1.bf16.xpose.msra.mxu0 0
    %774 = vmatprep.subr.bf16.mxu0 0
    %775 = vmatpush1.bf16.xpose.msra.mxu0 0
    %776 = vmatprep.subr.bf16.mxu0 0
    %777 = vmatpush1.bf16.xpose.msra.mxu0 0
    %778 = vmatprep.mubr.bf16.mxu0 0
    %779 = vmatmul.mubr.bf16.gmra.mrb[0].mxu0 %v741
    %v780 = vpop.f32.mrb[0].mxu0
    %v781 = vadd.f32 %v440, %v780
    %v782 = vpop.f32.mrb[0].mxu0
    %v783 = vpop.f32.mrb[0].mxu0
    %v784 = vpop.f32.mrb[0].mxu0
    %785 = vdwg.mxu0
    %787 = vrot.lane.b32.xlu0 %v409, 96
    %v788 = vpop.permute.xlu0 %787
    %v790 = vsel %vm445, %v409, 0
    %v793 = vsel %vm445, %v788, 0
    %795 = vmatprep.subr.bf16.mxu0 0
    %796 = vmatpush1.bf16.xpose.msra.mxu0 %v793
    %797 = vmatprep.subr.bf16.mxu0 0
    %798 = vmatpush1.bf16.xpose.msra.mxu0 0
    %799 = vmatprep.subr.bf16.mxu0 0
    %800 = vmatpush1.bf16.xpose.msra.mxu0 0
    %801 = vmatprep.subr.bf16.mxu0 0
    %802 = vmatpush1.bf16.xpose.msra.mxu0 0
    %803 = vmatprep.subr.bf16.mxu0 0
    %804 = vmatpush1.bf16.xpose.msra.mxu0 0
    %805 = vmatprep.subr.bf16.mxu0 0
    %806 = vmatpush1.bf16.xpose.msra.mxu0 0
    %807 = vmatprep.subr.bf16.mxu0 0
    %808 = vmatpush1.bf16.xpose.msra.mxu0 0
    %809 = vmatprep.subr.bf16.mxu0 0
    %810 = vmatpush1.bf16.xpose.msra.mxu0 0
    %811 = vmatprep.subr.bf16.mxu0 0
    %812 = vmatpush1.bf16.xpose.msra.mxu0 0
    %813 = vmatprep.subr.bf16.mxu0 0
    %814 = vmatpush1.bf16.xpose.msra.mxu0 0
    %815 = vmatprep.subr.bf16.mxu0 0
    %816 = vmatpush1.bf16.xpose.msra.mxu0 0
    %817 = vmatprep.subr.bf16.mxu0 0
    %818 = vmatpush1.bf16.xpose.msra.mxu0 0
    %819 = vmatprep.subr.bf16.mxu0 0
    %820 = vmatpush1.bf16.xpose.msra.mxu0 0
    %821 = vmatprep.subr.bf16.mxu0 0
    %822 = vmatpush1.bf16.xpose.msra.mxu0 0
    %823 = vmatprep.subr.bf16.mxu0 0
    %824 = vmatpush1.bf16.xpose.msra.mxu0 0
    %825 = vmatprep.subr.bf16.mxu0 0
    %826 = vmatpush1.bf16.xpose.msra.mxu0 0
    %827 = vmatprep.mubr.bf16.mxu0 0
    %828 = vmatmul.mubr.bf16.gmra.mrb[0].mxu0 %v790
    %v829 = vpop.f32.mrb[0].mxu0
    %v830 = vadd.f32 %v441, %v829
    %v831 = vpop.f32.mrb[0].mxu0
    %v832 = vpop.f32.mrb[0].mxu0
    %v833 = vpop.f32.mrb[0].mxu0
    %834 = vdwg.mxu0
    %836 = vrot.lane.b32.xlu0 %v410, 96
    %v837 = vpop.permute.xlu0 %836
    %v839 = vsel %vm445, %v410, 0
    %v842 = vsel %vm445, %v837, 0
    %844 = vmatprep.subr.bf16.mxu0 0
    %845 = vmatpush1.bf16.xpose.msra.mxu0 %v842
    %846 = vmatprep.subr.bf16.mxu0 0
    %847 = vmatpush1.bf16.xpose.msra.mxu0 0
    %848 = vmatprep.subr.bf16.mxu0 0
    %849 = vmatpush1.bf16.xpose.msra.mxu0 0
    %850 = vmatprep.subr.bf16.mxu0 0
    %851 = vmatpush1.bf16.xpose.msra.mxu0 0
    %852 = vmatprep.subr.bf16.mxu0 0
    %853 = vmatpush1.bf16.xpose.msra.mxu0 0
    %854 = vmatprep.subr.bf16.mxu0 0
    %855 = vmatpush1.bf16.xpose.msra.mxu0 0
    %856 = vmatprep.subr.bf16.mxu0 0
    %857 = vmatpush1.bf16.xpose.msra.mxu0 0
    %858 = vmatprep.subr.bf16.mxu0 0
    %859 = vmatpush1.bf16.xpose.msra.mxu0 0
    %860 = vmatprep.subr.bf16.mxu0 0
    %861 = vmatpush1.bf16.xpose.msra.mxu0 0
    %862 = vmatprep.subr.bf16.mxu0 0
    %863 = vmatpush1.bf16.xpose.msra.mxu0 0
    %864 = vmatprep.subr.bf16.mxu0 0
    %865 = vmatpush1.bf16.xpose.msra.mxu0 0
    %866 = vmatprep.subr.bf16.mxu0 0
    %867 = vmatpush1.bf16.xpose.msra.mxu0 0
    %868 = vmatprep.subr.bf16.mxu0 0
    %869 = vmatpush1.bf16.xpose.msra.mxu0 0
    %870 = vmatprep.subr.bf16.mxu0 0
    %871 = vmatpush1.bf16.xpose.msra.mxu0 0
    %872 = vmatprep.subr.bf16.mxu0 0
    %873 = vmatpush1.bf16.xpose.msra.mxu0 0
    %874 = vmatprep.subr.bf16.mxu0 0
    %875 = vmatpush1.bf16.xpose.msra.mxu0 0
    %876 = vmatprep.mubr.bf16.mxu0 0
    %877 = vmatmul.mubr.bf16.gmra.mrb[0].mxu0 %v839
    %v878 = vpop.f32.mrb[0].mxu0
    %v879 = vadd.f32 %v434, %v878
    %v880 = vpop.f32.mrb[0].mxu0
    %v881 = vpop.f32.mrb[0].mxu0
    %v882 = vpop.f32.mrb[0].mxu0
    %883 = vdwg.mxu0
    %885 = vrot.lane.b32.xlu0 %v411, 96
    %v886 = vpop.permute.xlu0 %885
    %v888 = vsel %vm445, %v411, 0
    %v891 = vsel %vm445, %v886, 0
    %893 = vmatprep.subr.bf16.mxu0 0
    %894 = vmatpush1.bf16.xpose.msra.mxu0 %v891
    %895 = vmatprep.subr.bf16.mxu0 0
    %896 = vmatpush1.bf16.xpose.msra.mxu0 0
    %897 = vmatprep.subr.bf16.mxu0 0
    %898 = vmatpush1.bf16.xpose.msra.mxu0 0
    %899 = vmatprep.subr.bf16.mxu0 0
    %900 = vmatpush1.bf16.xpose.msra.mxu0 0
    %901 = vmatprep.subr.bf16.mxu0 0
    %902 = vmatpush1.bf16.xpose.msra.mxu0 0
    %903 = vmatprep.subr.bf16.mxu0 0
    %904 = vmatpush1.bf16.xpose.msra.mxu0 0
    %905 = vmatprep.subr.bf16.mxu0 0
    %906 = vmatpush1.bf16.xpose.msra.mxu0 0
    %907 = vmatprep.subr.bf16.mxu0 0
    %908 = vmatpush1.bf16.xpose.msra.mxu0 0
    %909 = vmatprep.subr.bf16.mxu0 0
    %910 = vmatpush1.bf16.xpose.msra.mxu0 0
    %911 = vmatprep.subr.bf16.mxu0 0
    %912 = vmatpush1.bf16.xpose.msra.mxu0 0
    %913 = vmatprep.subr.bf16.mxu0 0
    %914 = vmatpush1.bf16.xpose.msra.mxu0 0
    %915 = vmatprep.subr.bf16.mxu0 0
    %916 = vmatpush1.bf16.xpose.msra.mxu0 0
    %917 = vmatprep.subr.bf16.mxu0 0
    %918 = vmatpush1.bf16.xpose.msra.mxu0 0
    %919 = vmatprep.subr.bf16.mxu0 0
    %920 = vmatpush1.bf16.xpose.msra.mxu0 0
    %921 = vmatprep.subr.bf16.mxu0 0
    %922 = vmatpush1.bf16.xpose.msra.mxu0 0
    %923 = vmatprep.subr.bf16.mxu0 0
    %924 = vmatpush1.bf16.xpose.msra.mxu0 0
    %925 = vmatprep.mubr.bf16.mxu0 0
    %926 = vmatmul.mubr.bf16.gmra.mrb[0].mxu0 %v888
    %v927 = vpop.f32.mrb[0].mxu0
    %v928 = vadd.f32 %v435, %v927
    %v929 = vpop.f32.mrb[0].mxu0
    %v930 = vpop.f32.mrb[0].mxu0
    %v931 = vpop.f32.mrb[0].mxu0
    %932 = vdwg.mxu0
    %934 = vrot.lane.b32.xlu0 %v412, 96
    %v935 = vpop.permute.xlu0 %934
    %v937 = vsel %vm445, %v412, 0
    %v940 = vsel %vm445, %v935, 0
    %942 = vmatprep.subr.bf16.mxu0 0
    %943 = vmatpush1.bf16.xpose.msra.mxu0 %v940
    %944 = vmatprep.subr.bf16.mxu0 0
    %945 = vmatpush1.bf16.xpose.msra.mxu0 0
    %946 = vmatprep.subr.bf16.mxu0 0
    %947 = vmatpush1.bf16.xpose.msra.mxu0 0
    %948 = vmatprep.subr.bf16.mxu0 0
    %949 = vmatpush1.bf16.xpose.msra.mxu0 0
    %950 = vmatprep.subr.bf16.mxu0 0
    %951 = vmatpush1.bf16.xpose.msra.mxu0 0
    %952 = vmatprep.subr.bf16.mxu0 0
    %953 = vmatpush1.bf16.xpose.msra.mxu0 0
    %954 = vmatprep.subr.bf16.mxu0 0
    %955 = vmatpush1.bf16.xpose.msra.mxu0 0
    %956 = vmatprep.subr.bf16.mxu0 0
    %957 = vmatpush1.bf16.xpose.msra.mxu0 0
    %958 = vmatprep.subr.bf16.mxu0 0
    %959 = vmatpush1.bf16.xpose.msra.mxu0 0
    %960 = vmatprep.subr.bf16.mxu0 0
    %961 = vmatpush1.bf16.xpose.msra.mxu0 0
    %962 = vmatprep.subr.bf16.mxu0 0
    %963 = vmatpush1.bf16.xpose.msra.mxu0 0
    %964 = vmatprep.subr.bf16.mxu0 0
    %965 = vmatpush1.bf16.xpose.msra.mxu0 0
    %966 = vmatprep.subr.bf16.mxu0 0
    %967 = vmatpush1.bf16.xpose.msra.mxu0 0
    %968 = vmatprep.subr.bf16.mxu0 0
    %969 = vmatpush1.bf16.xpose.msra.mxu0 0
    %970 = vmatprep.subr.bf16.mxu0 0
    %971 = vmatpush1.bf16.xpose.msra.mxu0 0
    %972 = vmatprep.subr.bf16.mxu0 0
    %973 = vmatpush1.bf16.xpose.msra.mxu0 0
    %974 = vmatprep.mubr.bf16.mxu0 0
    %975 = vmatmul.mubr.bf16.gmra.mrb[0].mxu0 %v937
    %v976 = vpop.f32.mrb[0].mxu0
    %v977 = vadd.f32 %v436, %v976
    %v978 = vpop.f32.mrb[0].mxu0
    %v979 = vpop.f32.mrb[0].mxu0
    %v980 = vpop.f32.mrb[0].mxu0
    %981 = vdwg.mxu0
    %983 = vrot.lane.b32.xlu0 %v413, 96
    %v984 = vpop.permute.xlu0 %983
    %v986 = vsel %vm445, %v413, 0
    %v989 = vsel %vm445, %v984, 0
    %991 = vmatprep.subr.bf16.mxu0 0
    %992 = vmatpush1.bf16.xpose.msra.mxu0 %v989
    %993 = vmatprep.subr.bf16.mxu0 0
    %994 = vmatpush1.bf16.xpose.msra.mxu0 0
    %995 = vmatprep.subr.bf16.mxu0 0
    %996 = vmatpush1.bf16.xpose.msra.mxu0 0
    %997 = vmatprep.subr.bf16.mxu0 0
    %998 = vmatpush1.bf16.xpose.msra.mxu0 0
    %999 = vmatprep.subr.bf16.mxu0 0
    %1000 = vmatpush1.bf16.xpose.msra.mxu0 0
    %1001 = vmatprep.subr.bf16.mxu0 0
    %1002 = vmatpush1.bf16.xpose.msra.mxu0 0
    %1003 = vmatprep.subr.bf16.mxu0 0
    %1004 = vmatpush1.bf16.xpose.msra.mxu0 0
    %1005 = vmatprep.subr.bf16.mxu0 0
    %1006 = vmatpush1.bf16.xpose.msra.mxu0 0
    %1007 = vmatprep.subr.bf16.mxu0 0
    %1008 = vmatpush1.bf16.xpose.msra.mxu0 0
    %1009 = vmatprep.subr.bf16.mxu0 0
    %1010 = vmatpush1.bf16.xpose.msra.mxu0 0
    %1011 = vmatprep.subr.bf16.mxu0 0
    %1012 = vmatpush1.bf16.xpose.msra.mxu0 0
    %1013 = vmatprep.subr.bf16.mxu0 0
    %1014 = vmatpush1.bf16.xpose.msra.mxu0 0
    %1015 = vmatprep.subr.bf16.mxu0 0
    %1016 = vmatpush1.bf16.xpose.msra.mxu0 0
    %1017 = vmatprep.subr.bf16.mxu0 0
    %1018 = vmatpush1.bf16.xpose.msra.mxu0 0
    %1019 = vmatprep.subr.bf16.mxu0 0
    %1020 = vmatpush1.bf16.xpose.msra.mxu0 0
    %1021 = vmatprep.subr.bf16.mxu0 0
    %1022 = vmatpush1.bf16.xpose.msra.mxu0 0
    %1023 = vmatprep.mubr.bf16.mxu0 0
    %1024 = vmatmul.mubr.bf16.gmra.mrb[0].mxu0 %v986
    %v1025 = vpop.f32.mrb[0].mxu0
    %v1026 = vadd.f32 %v437, %v1025
    %v1027 = vpop.f32.mrb[0].mxu0
    %v1028 = vpop.f32.mrb[0].mxu0
    %v1029 = vpop.f32.mrb[0].mxu0
    %1030 = vdwg.mxu0
    %1032 = vrot.lane.b32.xlu0 %v414, 96
    %v1033 = vpop.permute.xlu0 %1032
    %v1035 = vsel %vm445, %v414, 0
    %v1038 = vsel %vm445, %v1033, 0
    %1040 = vmatprep.subr.bf16.mxu0 0
    %1041 = vmatpush1.bf16.xpose.msra.mxu0 %v1038
    %1042 = vmatprep.subr.bf16.mxu0 0
    %1043 = vmatpush1.bf16.xpose.msra.mxu0 0
    %1044 = vmatprep.subr.bf16.mxu0 0
    %1045 = vmatpush1.bf16.xpose.msra.mxu0 0
    %1046 = vmatprep.subr.bf16.mxu0 0
    %1047 = vmatpush1.bf16.xpose.msra.mxu0 0
    %1048 = vmatprep.subr.bf16.mxu0 0
    %1049 = vmatpush1.bf16.xpose.msra.mxu0 0
    %1050 = vmatprep.subr.bf16.mxu0 0
    %1051 = vmatpush1.bf16.xpose.msra.mxu0 0
    %1052 = vmatprep.subr.bf16.mxu0 0
    %1053 = vmatpush1.bf16.xpose.msra.mxu0 0
    %1054 = vmatprep.subr.bf16.mxu0 0
    %1055 = vmatpush1.bf16.xpose.msra.mxu0 0
    %1056 = vmatprep.subr.bf16.mxu0 0
    %1057 = vmatpush1.bf16.xpose.msra.mxu0 0
    %1058 = vmatprep.subr.bf16.mxu0 0
    %1059 = vmatpush1.bf16.xpose.msra.mxu0 0
    %1060 = vmatprep.subr.bf16.mxu0 0
    %1061 = vmatpush1.bf16.xpose.msra.mxu0 0
    %1062 = vmatprep.subr.bf16.mxu0 0
    %1063 = vmatpush1.bf16.xpose.msra.mxu0 0
    %1064 = vmatprep.subr.bf16.mxu0 0
    %1065 = vmatpush1.bf16.xpose.msra.mxu0 0
    %1066 = vmatprep.subr.bf16.mxu0 0
    %1067 = vmatpush1.bf16.xpose.msra.mxu0 0
    %1068 = vmatprep.subr.bf16.mxu0 0
    %1069 = vmatpush1.bf16.xpose.msra.mxu0 0
    %1070 = vmatprep.subr.bf16.mxu0 0
    %1071 = vmatpush1.bf16.xpose.msra.mxu0 0
    %1072 = vmatprep.mubr.bf16.mxu0 0
    %1073 = vmatmul.mubr.bf16.gmra.mrb[0].mxu0 %v1035
    %v1074 = vpop.f32.mrb[0].mxu0
    %v1075 = vadd.f32 %v438, %v1074
    %v1076 = vpop.f32.mrb[0].mxu0
    %v1077 = vpop.f32.mrb[0].mxu0
    %v1078 = vpop.f32.mrb[0].mxu0
    %1079 = vdwg.mxu0
    %1081 = vrot.lane.b32.xlu0 %v415, 96
    %v1082 = vpop.permute.xlu0 %1081
    %v1084 = vsel %vm445, %v415, 0
    %v1087 = vsel %vm445, %v1082, 0
    %1089 = vmatprep.subr.bf16.mxu0 0
    %1090 = vmatpush1.bf16.xpose.msra.mxu0 %v1087
    %1091 = vmatprep.subr.bf16.mxu0 0
    %1092 = vmatpush1.bf16.xpose.msra.mxu0 0
    %1093 = vmatprep.subr.bf16.mxu0 0
    %1094 = vmatpush1.bf16.xpose.msra.mxu0 0
    %1095 = vmatprep.subr.bf16.mxu0 0
    %1096 = vmatpush1.bf16.xpose.msra.mxu0 0
    %1097 = vmatprep.subr.bf16.mxu0 0
    %1098 = vmatpush1.bf16.xpose.msra.mxu0 0
    %1099 = vmatprep.subr.bf16.mxu0 0
    %1100 = vmatpush1.bf16.xpose.msra.mxu0 0
    %1101 = vmatprep.subr.bf16.mxu0 0
    %1102 = vmatpush1.bf16.xpose.msra.mxu0 0
    %1103 = vmatprep.subr.bf16.mxu0 0
    %1104 = vmatpush1.bf16.xpose.msra.mxu0 0
    %1105 = vmatprep.subr.bf16.mxu0 0
    %1106 = vmatpush1.bf16.xpose.msra.mxu0 0
    %1107 = vmatprep.subr.bf16.mxu0 0
    %1108 = vmatpush1.bf16.xpose.msra.mxu0 0
    %1109 = vmatprep.subr.bf16.mxu0 0
    %1110 = vmatpush1.bf16.xpose.msra.mxu0 0
    %1111 = vmatprep.subr.bf16.mxu0 0
    %1112 = vmatpush1.bf16.xpose.msra.mxu0 0
    %1113 = vmatprep.subr.bf16.mxu0 0
    %1114 = vmatpush1.bf16.xpose.msra.mxu0 0
    %1115 = vmatprep.subr.bf16.mxu0 0
    %1116 = vmatpush1.bf16.xpose.msra.mxu0 0
    %1117 = vmatprep.subr.bf16.mxu0 0
    %1118 = vmatpush1.bf16.xpose.msra.mxu0 0
    %1119 = vmatprep.subr.bf16.mxu0 0
    %1120 = vmatpush1.bf16.xpose.msra.mxu0 0
    %1121 = vmatprep.mubr.bf16.mxu0 0
    %1122 = vmatmul.mubr.bf16.gmra.mrb[0].mxu0 %v1084
    %v1123 = vpop.f32.mrb[0].mxu0
    %v1124 = vadd.f32 %v439, %v1123
    %v1125 = vpop.f32.mrb[0].mxu0
    %v1126 = vpop.f32.mrb[0].mxu0
    %v1127 = vpop.f32.mrb[0].mxu0
    %1128 = vdwg.mxu0
    %1130 = vrot.lane.b32.xlu0 %v416, 96
    %v1131 = vpop.permute.xlu0 %1130
    %v1133 = vsel %vm445, %v416, 0
    %v1136 = vsel %vm445, %v1131, 0
    %1138 = vmatprep.subr.bf16.mxu0 0
    %1139 = vmatpush1.bf16.xpose.msra.mxu0 %v1136
    %1140 = vmatprep.subr.bf16.mxu0 0
    %1141 = vmatpush1.bf16.xpose.msra.mxu0 0
    %1142 = vmatprep.subr.bf16.mxu0 0
    %1143 = vmatpush1.bf16.xpose.msra.mxu0 0
    %1144 = vmatprep.subr.bf16.mxu0 0
    %1145 = vmatpush1.bf16.xpose.msra.mxu0 0
    %1146 = vmatprep.subr.bf16.mxu0 0
    %1147 = vmatpush1.bf16.xpose.msra.mxu0 0
    %1148 = vmatprep.subr.bf16.mxu0 0
    %1149 = vmatpush1.bf16.xpose.msra.mxu0 0
    %1150 = vmatprep.subr.bf16.mxu0 0
    %1151 = vmatpush1.bf16.xpose.msra.mxu0 0
    %1152 = vmatprep.subr.bf16.mxu0 0
    %1153 = vmatpush1.bf16.xpose.msra.mxu0 0
    %1154 = vmatprep.subr.bf16.mxu0 0
    %1155 = vmatpush1.bf16.xpose.msra.mxu0 0
    %1156 = vmatprep.subr.bf16.mxu0 0
    %1157 = vmatpush1.bf16.xpose.msra.mxu0 0
    %1158 = vmatprep.subr.bf16.mxu0 0
    %1159 = vmatpush1.bf16.xpose.msra.mxu0 0
    %1160 = vmatprep.subr.bf16.mxu0 0
    %1161 = vmatpush1.bf16.xpose.msra.mxu0 0
    %1162 = vmatprep.subr.bf16.mxu0 0
    %1163 = vmatpush1.bf16.xpose.msra.mxu0 0
    %1164 = vmatprep.subr.bf16.mxu0 0
    %1165 = vmatpush1.bf16.xpose.msra.mxu0 0
    %1166 = vmatprep.subr.bf16.mxu0 0
    %1167 = vmatpush1.bf16.xpose.msra.mxu0 0
    %1168 = vmatprep.subr.bf16.mxu0 0
    %1169 = vmatpush1.bf16.xpose.msra.mxu0 0
    %1170 = vmatprep.mubr.bf16.mxu0 0
    %1171 = vmatmul.mubr.bf16.gmra.mrb[0].mxu0 %v1133
    %v1172 = vpop.f32.mrb[0].mxu0
    %v1173 = vadd.f32 %v440, %v1172
    %v1174 = vpop.f32.mrb[0].mxu0
    %v1175 = vpop.f32.mrb[0].mxu0
    %v1176 = vpop.f32.mrb[0].mxu0
    %1177 = vdwg.mxu0
    %1179 = vrot.lane.b32.xlu0 %v417, 96
    %v1180 = vpop.permute.xlu0 %1179
    %v1182 = vsel %vm445, %v417, 0
    %v1185 = vsel %vm445, %v1180, 0
    %1187 = vmatprep.subr.bf16.mxu0 0
    %1188 = vmatpush1.bf16.xpose.msra.mxu0 %v1185
    %1189 = vmatprep.subr.bf16.mxu0 0
    %1190 = vmatpush1.bf16.xpose.msra.mxu0 0
    %1191 = vmatprep.subr.bf16.mxu0 0
    %1192 = vmatpush1.bf16.xpose.msra.mxu0 0
    %1193 = vmatprep.subr.bf16.mxu0 0
    %1194 = vmatpush1.bf16.xpose.msra.mxu0 0
    %1195 = vmatprep.subr.bf16.mxu0 0
    %1196 = vmatpush1.bf16.xpose.msra.mxu0 0
    %1197 = vmatprep.subr.bf16.mxu0 0
    %1198 = vmatpush1.bf16.xpose.msra.mxu0 0
    %1199 = vmatprep.subr.bf16.mxu0 0
    %1200 = vmatpush1.bf16.xpose.msra.mxu0 0
    %1201 = vmatprep.subr.bf16.mxu0 0
    %1202 = vmatpush1.bf16.xpose.msra.mxu0 0
    %1203 = vmatprep.subr.bf16.mxu0 0
    %1204 = vmatpush1.bf16.xpose.msra.mxu0 0
    %1205 = vmatprep.subr.bf16.mxu0 0
    %1206 = vmatpush1.bf16.xpose.msra.mxu0 0
    %1207 = vmatprep.subr.bf16.mxu0 0
    %1208 = vmatpush1.bf16.xpose.msra.mxu0 0
    %1209 = vmatprep.subr.bf16.mxu0 0
    %1210 = vmatpush1.bf16.xpose.msra.mxu0 0
    %1211 = vmatprep.subr.bf16.mxu0 0
    %1212 = vmatpush1.bf16.xpose.msra.mxu0 0
    %1213 = vmatprep.subr.bf16.mxu0 0
    %1214 = vmatpush1.bf16.xpose.msra.mxu0 0
    %1215 = vmatprep.subr.bf16.mxu0 0
    %1216 = vmatpush1.bf16.xpose.msra.mxu0 0
    %1217 = vmatprep.subr.bf16.mxu0 0
    %1218 = vmatpush1.bf16.xpose.msra.mxu0 0
    %1219 = vmatprep.mubr.bf16.mxu0 0
    %1220 = vmatmul.mubr.bf16.gmra.mrb[0].mxu0 %v1182
    %v1221 = vpop.f32.mrb[0].mxu0
    %v1222 = vadd.f32 %v441, %v1221
    %v1223 = vpop.f32.mrb[0].mxu0
    %v1224 = vpop.f32.mrb[0].mxu0
    %v1225 = vpop.f32.mrb[0].mxu0
    %1226 = vdwg.mxu0
    %1228 = vrot.lane.b32.xlu0 %v418, 96
    %v1229 = vpop.permute.xlu0 %1228
    %v1231 = vsel %vm445, %v418, 0
    %v1234 = vsel %vm445, %v1229, 0
    %1236 = vmatprep.subr.bf16.mxu0 0
    %1237 = vmatpush1.bf16.xpose.msra.mxu0 %v1234
    %1238 = vmatprep.subr.bf16.mxu0 0
    %1239 = vmatpush1.bf16.xpose.msra.mxu0 0
    %1240 = vmatprep.subr.bf16.mxu0 0
    %1241 = vmatpush1.bf16.xpose.msra.mxu0 0
    %1242 = vmatprep.subr.bf16.mxu0 0
    %1243 = vmatpush1.bf16.xpose.msra.mxu0 0
    %1244 = vmatprep.subr.bf16.mxu0 0
    %1245 = vmatpush1.bf16.xpose.msra.mxu0 0
    %1246 = vmatprep.subr.bf16.mxu0 0
    %1247 = vmatpush1.bf16.xpose.msra.mxu0 0
    %1248 = vmatprep.subr.bf16.mxu0 0
    %1249 = vmatpush1.bf16.xpose.msra.mxu0 0
    %1250 = vmatprep.subr.bf16.mxu0 0
    %1251 = vmatpush1.bf16.xpose.msra.mxu0 0
    %1252 = vmatprep.subr.bf16.mxu0 0
    %1253 = vmatpush1.bf16.xpose.msra.mxu0 0
    %1254 = vmatprep.subr.bf16.mxu0 0
    %1255 = vmatpush1.bf16.xpose.msra.mxu0 0
    %1256 = vmatprep.subr.bf16.mxu0 0
    %1257 = vmatpush1.bf16.xpose.msra.mxu0 0
    %1258 = vmatprep.subr.bf16.mxu0 0
    %1259 = vmatpush1.bf16.xpose.msra.mxu0 0
    %1260 = vmatprep.subr.bf16.mxu0 0
    %1261 = vmatpush1.bf16.xpose.msra.mxu0 0
    %1262 = vmatprep.subr.bf16.mxu0 0
    %1263 = vmatpush1.bf16.xpose.msra.mxu0 0
    %1264 = vmatprep.subr.bf16.mxu0 0
    %1265 = vmatpush1.bf16.xpose.msra.mxu0 0
    %1266 = vmatprep.subr.bf16.mxu0 0
    %1267 = vmatpush1.bf16.xpose.msra.mxu0 0
    %1268 = vmatprep.mubr.bf16.mxu0 0
    %1269 = vmatmul.mubr.bf16.gmra.mrb[0].mxu0 %v1231
    %v1270 = vpop.f32.mrb[0].mxu0
    %v1271 = vadd.f32 %v434, %v1270
    %v1272 = vpop.f32.mrb[0].mxu0
    %v1273 = vpop.f32.mrb[0].mxu0
    %v1274 = vpop.f32.mrb[0].mxu0
    %1275 = vdwg.mxu0
    %1277 = vrot.lane.b32.xlu0 %v419, 96
    %v1278 = vpop.permute.xlu0 %1277
    %v1280 = vsel %vm445, %v419, 0
    %v1283 = vsel %vm445, %v1278, 0
    %1285 = vmatprep.subr.bf16.mxu0 0
    %1286 = vmatpush1.bf16.xpose.msra.mxu0 %v1283
    %1287 = vmatprep.subr.bf16.mxu0 0
    %1288 = vmatpush1.bf16.xpose.msra.mxu0 0
    %1289 = vmatprep.subr.bf16.mxu0 0
    %1290 = vmatpush1.bf16.xpose.msra.mxu0 0
    %1291 = vmatprep.subr.bf16.mxu0 0
    %1292 = vmatpush1.bf16.xpose.msra.mxu0 0
    %1293 = vmatprep.subr.bf16.mxu0 0
    %1294 = vmatpush1.bf16.xpose.msra.mxu0 0
    %1295 = vmatprep.subr.bf16.mxu0 0
    %1296 = vmatpush1.bf16.xpose.msra.mxu0 0
    %1297 = vmatprep.subr.bf16.mxu0 0
    %1298 = vmatpush1.bf16.xpose.msra.mxu0 0
    %1299 = vmatprep.subr.bf16.mxu0 0
    %1300 = vmatpush1.bf16.xpose.msra.mxu0 0
    %1301 = vmatprep.subr.bf16.mxu0 0
    %1302 = vmatpush1.bf16.xpose.msra.mxu0 0
    %1303 = vmatprep.subr.bf16.mxu0 0
    %1304 = vmatpush1.bf16.xpose.msra.mxu0 0
    %1305 = vmatprep.subr.bf16.mxu0 0
    %1306 = vmatpush1.bf16.xpose.msra.mxu0 0
    %1307 = vmatprep.subr.bf16.mxu0 0
    %1308 = vmatpush1.bf16.xpose.msra.mxu0 0
    %1309 = vmatprep.subr.bf16.mxu0 0
    %1310 = vmatpush1.bf16.xpose.msra.mxu0 0
    %1311 = vmatprep.subr.bf16.mxu0 0
    %1312 = vmatpush1.bf16.xpose.msra.mxu0 0
    %1313 = vmatprep.subr.bf16.mxu0 0
    %1314 = vmatpush1.bf16.xpose.msra.mxu0 0
    %1315 = vmatprep.subr.bf16.mxu0 0
    %1316 = vmatpush1.bf16.xpose.msra.mxu0 0
    %1317 = vmatprep.mubr.bf16.mxu0 0
    %1318 = vmatmul.mubr.bf16.gmra.mrb[0].mxu0 %v1280
    %v1319 = vpop.f32.mrb[0].mxu0
    %v1320 = vadd.f32 %v435, %v1319
    %v1321 = vpop.f32.mrb[0].mxu0
    %v1322 = vpop.f32.mrb[0].mxu0
    %v1323 = vpop.f32.mrb[0].mxu0
    %1324 = vdwg.mxu0
    %1326 = vrot.lane.b32.xlu0 %v420, 96
    %v1327 = vpop.permute.xlu0 %1326
    %v1329 = vsel %vm445, %v420, 0
    %v1332 = vsel %vm445, %v1327, 0
    %1334 = vmatprep.subr.bf16.mxu0 0
    %1335 = vmatpush1.bf16.xpose.msra.mxu0 %v1332
    %1336 = vmatprep.subr.bf16.mxu0 0
    %1337 = vmatpush1.bf16.xpose.msra.mxu0 0
    %1338 = vmatprep.subr.bf16.mxu0 0
    %1339 = vmatpush1.bf16.xpose.msra.mxu0 0
    %1340 = vmatprep.subr.bf16.mxu0 0
    %1341 = vmatpush1.bf16.xpose.msra.mxu0 0
    %1342 = vmatprep.subr.bf16.mxu0 0
    %1343 = vmatpush1.bf16.xpose.msra.mxu0 0
    %1344 = vmatprep.subr.bf16.mxu0 0
    %1345 = vmatpush1.bf16.xpose.msra.mxu0 0
    %1346 = vmatprep.subr.bf16.mxu0 0
    %1347 = vmatpush1.bf16.xpose.msra.mxu0 0
    %1348 = vmatprep.subr.bf16.mxu0 0
    %1349 = vmatpush1.bf16.xpose.msra.mxu0 0
    %1350 = vmatprep.subr.bf16.mxu0 0
    %1351 = vmatpush1.bf16.xpose.msra.mxu0 0
    %1352 = vmatprep.subr.bf16.mxu0 0
    %1353 = vmatpush1.bf16.xpose.msra.mxu0 0
    %1354 = vmatprep.subr.bf16.mxu0 0
    %1355 = vmatpush1.bf16.xpose.msra.mxu0 0
    %1356 = vmatprep.subr.bf16.mxu0 0
    %1357 = vmatpush1.bf16.xpose.msra.mxu0 0
    %1358 = vmatprep.subr.bf16.mxu0 0
    %1359 = vmatpush1.bf16.xpose.msra.mxu0 0
    %1360 = vmatprep.subr.bf16.mxu0 0
    %1361 = vmatpush1.bf16.xpose.msra.mxu0 0
    %1362 = vmatprep.subr.bf16.mxu0 0
    %1363 = vmatpush1.bf16.xpose.msra.mxu0 0
    %1364 = vmatprep.subr.bf16.mxu0 0
    %1365 = vmatpush1.bf16.xpose.msra.mxu0 0
    %1366 = vmatprep.mubr.bf16.mxu0 0
    %1367 = vmatmul.mubr.bf16.gmra.mrb[0].mxu0 %v1329
    %v1368 = vpop.f32.mrb[0].mxu0
    %v1369 = vadd.f32 %v436, %v1368
    %v1370 = vpop.f32.mrb[0].mxu0
    %v1371 = vpop.f32.mrb[0].mxu0
    %v1372 = vpop.f32.mrb[0].mxu0
    %1373 = vdwg.mxu0
    %1375 = vrot.lane.b32.xlu0 %v421, 96
    %v1376 = vpop.permute.xlu0 %1375
    %v1378 = vsel %vm445, %v421, 0
    %v1381 = vsel %vm445, %v1376, 0
    %1383 = vmatprep.subr.bf16.mxu0 0
    %1384 = vmatpush1.bf16.xpose.msra.mxu0 %v1381
    %1385 = vmatprep.subr.bf16.mxu0 0
    %1386 = vmatpush1.bf16.xpose.msra.mxu0 0
    %1387 = vmatprep.subr.bf16.mxu0 0
    %1388 = vmatpush1.bf16.xpose.msra.mxu0 0
    %1389 = vmatprep.subr.bf16.mxu0 0
    %1390 = vmatpush1.bf16.xpose.msra.mxu0 0
    %1391 = vmatprep.subr.bf16.mxu0 0
    %1392 = vmatpush1.bf16.xpose.msra.mxu0 0
    %1393 = vmatprep.subr.bf16.mxu0 0
    %1394 = vmatpush1.bf16.xpose.msra.mxu0 0
    %1395 = vmatprep.subr.bf16.mxu0 0
    %1396 = vmatpush1.bf16.xpose.msra.mxu0 0
    %1397 = vmatprep.subr.bf16.mxu0 0
    %1398 = vmatpush1.bf16.xpose.msra.mxu0 0
    %1399 = vmatprep.subr.bf16.mxu0 0
    %1400 = vmatpush1.bf16.xpose.msra.mxu0 0
    %1401 = vmatprep.subr.bf16.mxu0 0
    %1402 = vmatpush1.bf16.xpose.msra.mxu0 0
    %1403 = vmatprep.subr.bf16.mxu0 0
    %1404 = vmatpush1.bf16.xpose.msra.mxu0 0
    %1405 = vmatprep.subr.bf16.mxu0 0
    %1406 = vmatpush1.bf16.xpose.msra.mxu0 0
    %1407 = vmatprep.subr.bf16.mxu0 0
    %1408 = vmatpush1.bf16.xpose.msra.mxu0 0
    %1409 = vmatprep.subr.bf16.mxu0 0
    %1410 = vmatpush1.bf16.xpose.msra.mxu0 0
    %1411 = vmatprep.subr.bf16.mxu0 0
    %1412 = vmatpush1.bf16.xpose.msra.mxu0 0
    %1413 = vmatprep.subr.bf16.mxu0 0
    %1414 = vmatpush1.bf16.xpose.msra.mxu0 0
    %1415 = vmatprep.mubr.bf16.mxu0 0
    %1416 = vmatmul.mubr.bf16.gmra.mrb[0].mxu0 %v1378
    %v1417 = vpop.f32.mrb[0].mxu0
    %v1418 = vadd.f32 %v437, %v1417
    %v1419 = vpop.f32.mrb[0].mxu0
    %v1420 = vpop.f32.mrb[0].mxu0
    %v1421 = vpop.f32.mrb[0].mxu0
    %1422 = vdwg.mxu0
    %1424 = vrot.lane.b32.xlu0 %v422, 96
    %v1425 = vpop.permute.xlu0 %1424
    %v1427 = vsel %vm445, %v422, 0
    %v1430 = vsel %vm445, %v1425, 0
    %1432 = vmatprep.subr.bf16.mxu0 0
    %1433 = vmatpush1.bf16.xpose.msra.mxu0 %v1430
    %1434 = vmatprep.subr.bf16.mxu0 0
    %1435 = vmatpush1.bf16.xpose.msra.mxu0 0
    %1436 = vmatprep.subr.bf16.mxu0 0
    %1437 = vmatpush1.bf16.xpose.msra.mxu0 0
    %1438 = vmatprep.subr.bf16.mxu0 0
    %1439 = vmatpush1.bf16.xpose.msra.mxu0 0
    %1440 = vmatprep.subr.bf16.mxu0 0
    %1441 = vmatpush1.bf16.xpose.msra.mxu0 0
    %1442 = vmatprep.subr.bf16.mxu0 0
    %1443 = vmatpush1.bf16.xpose.msra.mxu0 0
    %1444 = vmatprep.subr.bf16.mxu0 0
    %1445 = vmatpush1.bf16.xpose.msra.mxu0 0
    %1446 = vmatprep.subr.bf16.mxu0 0
    %1447 = vmatpush1.bf16.xpose.msra.mxu0 0
    %1448 = vmatprep.subr.bf16.mxu0 0
    %1449 = vmatpush1.bf16.xpose.msra.mxu0 0
    %1450 = vmatprep.subr.bf16.mxu0 0
    %1451 = vmatpush1.bf16.xpose.msra.mxu0 0
    %1452 = vmatprep.subr.bf16.mxu0 0
    %1453 = vmatpush1.bf16.xpose.msra.mxu0 0
    %1454 = vmatprep.subr.bf16.mxu0 0
    %1455 = vmatpush1.bf16.xpose.msra.mxu0 0
    %1456 = vmatprep.subr.bf16.mxu0 0
    %1457 = vmatpush1.bf16.xpose.msra.mxu0 0
    %1458 = vmatprep.subr.bf16.mxu0 0
    %1459 = vmatpush1.bf16.xpose.msra.mxu0 0
    %1460 = vmatprep.subr.bf16.mxu0 0
    %1461 = vmatpush1.bf16.xpose.msra.mxu0 0
    %1462 = vmatprep.subr.bf16.mxu0 0
    %1463 = vmatpush1.bf16.xpose.msra.mxu0 0
    %1464 = vmatprep.mubr.bf16.mxu0 0
    %1465 = vmatmul.mubr.bf16.gmra.mrb[0].mxu0 %v1427
    %v1466 = vpop.f32.mrb[0].mxu0
    %v1467 = vadd.f32 %v438, %v1466
    %v1468 = vpop.f32.mrb[0].mxu0
    %v1469 = vpop.f32.mrb[0].mxu0
    %v1470 = vpop.f32.mrb[0].mxu0
    %1471 = vdwg.mxu0
    %1473 = vrot.lane.b32.xlu0 %v423, 96
    %v1474 = vpop.permute.xlu0 %1473
    %v1476 = vsel %vm445, %v423, 0
    %v1479 = vsel %vm445, %v1474, 0
    %1481 = vmatprep.subr.bf16.mxu0 0
    %1482 = vmatpush1.bf16.xpose.msra.mxu0 %v1479
    %1483 = vmatprep.subr.bf16.mxu0 0
    %1484 = vmatpush1.bf16.xpose.msra.mxu0 0
    %1485 = vmatprep.subr.bf16.mxu0 0
    %1486 = vmatpush1.bf16.xpose.msra.mxu0 0
    %1487 = vmatprep.subr.bf16.mxu0 0
    %1488 = vmatpush1.bf16.xpose.msra.mxu0 0
    %1489 = vmatprep.subr.bf16.mxu0 0
    %1490 = vmatpush1.bf16.xpose.msra.mxu0 0
    %1491 = vmatprep.subr.bf16.mxu0 0
    %1492 = vmatpush1.bf16.xpose.msra.mxu0 0
    %1493 = vmatprep.subr.bf16.mxu0 0
    %1494 = vmatpush1.bf16.xpose.msra.mxu0 0
    %1495 = vmatprep.subr.bf16.mxu0 0
    %1496 = vmatpush1.bf16.xpose.msra.mxu0 0
    %1497 = vmatprep.subr.bf16.mxu0 0
    %1498 = vmatpush1.bf16.xpose.msra.mxu0 0
    %1499 = vmatprep.subr.bf16.mxu0 0
    %1500 = vmatpush1.bf16.xpose.msra.mxu0 0
    %1501 = vmatprep.subr.bf16.mxu0 0
    %1502 = vmatpush1.bf16.xpose.msra.mxu0 0
    %1503 = vmatprep.subr.bf16.mxu0 0
    %1504 = vmatpush1.bf16.xpose.msra.mxu0 0
    %1505 = vmatprep.subr.bf16.mxu0 0
    %1506 = vmatpush1.bf16.xpose.msra.mxu0 0
    %1507 = vmatprep.subr.bf16.mxu0 0
    %1508 = vmatpush1.bf16.xpose.msra.mxu0 0
    %1509 = vmatprep.subr.bf16.mxu0 0
    %1510 = vmatpush1.bf16.xpose.msra.mxu0 0
    %1511 = vmatprep.subr.bf16.mxu0 0
    %1512 = vmatpush1.bf16.xpose.msra.mxu0 0
    %1513 = vmatprep.mubr.bf16.mxu0 0
    %1514 = vmatmul.mubr.bf16.gmra.mrb[0].mxu0 %v1476
    %v1515 = vpop.f32.mrb[0].mxu0
    %v1516 = vadd.f32 %v439, %v1515
    %v1517 = vpop.f32.mrb[0].mxu0
    %v1518 = vpop.f32.mrb[0].mxu0
    %v1519 = vpop.f32.mrb[0].mxu0
    %1520 = vdwg.mxu0
    %1522 = vrot.lane.b32.xlu0 %v424, 96
    %v1523 = vpop.permute.xlu0 %1522
    %v1525 = vsel %vm445, %v424, 0
    %v1528 = vsel %vm445, %v1523, 0
    %1530 = vmatprep.subr.bf16.mxu0 0
    %1531 = vmatpush1.bf16.xpose.msra.mxu0 %v1528
    %1532 = vmatprep.subr.bf16.mxu0 0
    %1533 = vmatpush1.bf16.xpose.msra.mxu0 0
    %1534 = vmatprep.subr.bf16.mxu0 0
    %1535 = vmatpush1.bf16.xpose.msra.mxu0 0
    %1536 = vmatprep.subr.bf16.mxu0 0
    %1537 = vmatpush1.bf16.xpose.msra.mxu0 0
    %1538 = vmatprep.subr.bf16.mxu0 0
    %1539 = vmatpush1.bf16.xpose.msra.mxu0 0
    %1540 = vmatprep.subr.bf16.mxu0 0
    %1541 = vmatpush1.bf16.xpose.msra.mxu0 0
    %1542 = vmatprep.subr.bf16.mxu0 0
    %1543 = vmatpush1.bf16.xpose.msra.mxu0 0
    %1544 = vmatprep.subr.bf16.mxu0 0
    %1545 = vmatpush1.bf16.xpose.msra.mxu0 0
    %1546 = vmatprep.subr.bf16.mxu0 0
    %1547 = vmatpush1.bf16.xpose.msra.mxu0 0
    %1548 = vmatprep.subr.bf16.mxu0 0
    %1549 = vmatpush1.bf16.xpose.msra.mxu0 0
    %1550 = vmatprep.subr.bf16.mxu0 0
    %1551 = vmatpush1.bf16.xpose.msra.mxu0 0
    %1552 = vmatprep.subr.bf16.mxu0 0
    %1553 = vmatpush1.bf16.xpose.msra.mxu0 0
    %1554 = vmatprep.subr.bf16.mxu0 0
    %1555 = vmatpush1.bf16.xpose.msra.mxu0 0
    %1556 = vmatprep.subr.bf16.mxu0 0
    %1557 = vmatpush1.bf16.xpose.msra.mxu0 0
    %1558 = vmatprep.subr.bf16.mxu0 0
    %1559 = vmatpush1.bf16.xpose.msra.mxu0 0
    %1560 = vmatprep.subr.bf16.mxu0 0
    %1561 = vmatpush1.bf16.xpose.msra.mxu0 0
    %1562 = vmatprep.mubr.bf16.mxu0 0
    %1563 = vmatmul.mubr.bf16.gmra.mrb[0].mxu0 %v1525
    %v1564 = vpop.f32.mrb[0].mxu0
    %v1565 = vadd.f32 %v440, %v1564
    %v1566 = vpop.f32.mrb[0].mxu0
    %v1567 = vpop.f32.mrb[0].mxu0
    %v1568 = vpop.f32.mrb[0].mxu0
    %1569 = vdwg.mxu0
    %1571 = vrot.lane.b32.xlu0 %v425, 96
    %v1572 = vpop.permute.xlu0 %1571
    %v1574 = vsel %vm445, %v425, 0
    %v1577 = vsel %vm445, %v1572, 0
    %1579 = vmatprep.subr.bf16.mxu0 0
    %1580 = vmatpush1.bf16.xpose.msra.mxu0 %v1577
    %1581 = vmatprep.subr.bf16.mxu0 0
    %1582 = vmatpush1.bf16.xpose.msra.mxu0 0
    %1583 = vmatprep.subr.bf16.mxu0 0
    %1584 = vmatpush1.bf16.xpose.msra.mxu0 0
    %1585 = vmatprep.subr.bf16.mxu0 0
    %1586 = vmatpush1.bf16.xpose.msra.mxu0 0
    %1587 = vmatprep.subr.bf16.mxu0 0
    %1588 = vmatpush1.bf16.xpose.msra.mxu0 0
    %1589 = vmatprep.subr.bf16.mxu0 0
    %1590 = vmatpush1.bf16.xpose.msra.mxu0 0
    %1591 = vmatprep.subr.bf16.mxu0 0
    %1592 = vmatpush1.bf16.xpose.msra.mxu0 0
    %1593 = vmatprep.subr.bf16.mxu0 0
    %1594 = vmatpush1.bf16.xpose.msra.mxu0 0
    %1595 = vmatprep.subr.bf16.mxu0 0
    %1596 = vmatpush1.bf16.xpose.msra.mxu0 0
    %1597 = vmatprep.subr.bf16.mxu0 0
    %1598 = vmatpush1.bf16.xpose.msra.mxu0 0
    %1599 = vmatprep.subr.bf16.mxu0 0
    %1600 = vmatpush1.bf16.xpose.msra.mxu0 0
    %1601 = vmatprep.subr.bf16.mxu0 0
    %1602 = vmatpush1.bf16.xpose.msra.mxu0 0
    %1603 = vmatprep.subr.bf16.mxu0 0
    %1604 = vmatpush1.bf16.xpose.msra.mxu0 0
    %1605 = vmatprep.subr.bf16.mxu0 0
    %1606 = vmatpush1.bf16.xpose.msra.mxu0 0
    %1607 = vmatprep.subr.bf16.mxu0 0
    %1608 = vmatpush1.bf16.xpose.msra.mxu0 0
    %1609 = vmatprep.subr.bf16.mxu0 0
    %1610 = vmatpush1.bf16.xpose.msra.mxu0 0
    %1611 = vmatprep.mubr.bf16.mxu0 0
    %1612 = vmatmul.mubr.bf16.gmra.mrb[0].mxu0 %v1574
    %v1613 = vpop.f32.mrb[0].mxu0
    %v1614 = vadd.f32 %v441, %v1613
    %v1615 = vpop.f32.mrb[0].mxu0
    %v1616 = vpop.f32.mrb[0].mxu0
    %v1617 = vpop.f32.mrb[0].mxu0
    %1618 = vdwg.mxu0
    %1620 = vrot.lane.b32.xlu0 %v426, 96
    %v1621 = vpop.permute.xlu0 %1620
    %v1623 = vsel %vm445, %v426, 0
    %v1626 = vsel %vm445, %v1621, 0
    %1628 = vmatprep.subr.bf16.mxu0 0
    %1629 = vmatpush1.bf16.xpose.msra.mxu0 %v1626
    %1630 = vmatprep.subr.bf16.mxu0 0
    %1631 = vmatpush1.bf16.xpose.msra.mxu0 0
    %1632 = vmatprep.subr.bf16.mxu0 0
    %1633 = vmatpush1.bf16.xpose.msra.mxu0 0
    %1634 = vmatprep.subr.bf16.mxu0 0
    %1635 = vmatpush1.bf16.xpose.msra.mxu0 0
    %1636 = vmatprep.subr.bf16.mxu0 0
    %1637 = vmatpush1.bf16.xpose.msra.mxu0 0
    %1638 = vmatprep.subr.bf16.mxu0 0
    %1639 = vmatpush1.bf16.xpose.msra.mxu0 0
    %1640 = vmatprep.subr.bf16.mxu0 0
    %1641 = vmatpush1.bf16.xpose.msra.mxu0 0
    %1642 = vmatprep.subr.bf16.mxu0 0
    %1643 = vmatpush1.bf16.xpose.msra.mxu0 0
    %1644 = vmatprep.subr.bf16.mxu0 0
    %1645 = vmatpush1.bf16.xpose.msra.mxu0 0
    %1646 = vmatprep.subr.bf16.mxu0 0
    %1647 = vmatpush1.bf16.xpose.msra.mxu0 0
    %1648 = vmatprep.subr.bf16.mxu0 0
    %1649 = vmatpush1.bf16.xpose.msra.mxu0 0
    %1650 = vmatprep.subr.bf16.mxu0 0
    %1651 = vmatpush1.bf16.xpose.msra.mxu0 0
    %1652 = vmatprep.subr.bf16.mxu0 0
    %1653 = vmatpush1.bf16.xpose.msra.mxu0 0
    %1654 = vmatprep.subr.bf16.mxu0 0
    %1655 = vmatpush1.bf16.xpose.msra.mxu0 0
    %1656 = vmatprep.subr.bf16.mxu0 0
    %1657 = vmatpush1.bf16.xpose.msra.mxu0 0
    %1658 = vmatprep.subr.bf16.mxu0 0
    %1659 = vmatpush1.bf16.xpose.msra.mxu0 0
    %1660 = vmatprep.mubr.bf16.mxu0 0
    %1661 = vmatmul.mubr.bf16.gmra.mrb[0].mxu0 %v1623
    %v1662 = vpop.f32.mrb[0].mxu0
    %v1663 = vadd.f32 %v434, %v1662
    %v1664 = vpop.f32.mrb[0].mxu0
    %v1665 = vpop.f32.mrb[0].mxu0
    %v1666 = vpop.f32.mrb[0].mxu0
    %1667 = vdwg.mxu0
    %1669 = vrot.lane.b32.xlu0 %v427, 96
    %v1670 = vpop.permute.xlu0 %1669
    %v1672 = vsel %vm445, %v427, 0
    %v1675 = vsel %vm445, %v1670, 0
    %1677 = vmatprep.subr.bf16.mxu0 0
    %1678 = vmatpush1.bf16.xpose.msra.mxu0 %v1675
    %1679 = vmatprep.subr.bf16.mxu0 0
    %1680 = vmatpush1.bf16.xpose.msra.mxu0 0
    %1681 = vmatprep.subr.bf16.mxu0 0
    %1682 = vmatpush1.bf16.xpose.msra.mxu0 0
    %1683 = vmatprep.subr.bf16.mxu0 0
    %1684 = vmatpush1.bf16.xpose.msra.mxu0 0
    %1685 = vmatprep.subr.bf16.mxu0 0
    %1686 = vmatpush1.bf16.xpose.msra.mxu0 0
    %1687 = vmatprep.subr.bf16.mxu0 0
    %1688 = vmatpush1.bf16.xpose.msra.mxu0 0
    %1689 = vmatprep.subr.bf16.mxu0 0
    %1690 = vmatpush1.bf16.xpose.msra.mxu0 0
    %1691 = vmatprep.subr.bf16.mxu0 0
    %1692 = vmatpush1.bf16.xpose.msra.mxu0 0
    %1693 = vmatprep.subr.bf16.mxu0 0
    %1694 = vmatpush1.bf16.xpose.msra.mxu0 0
    %1695 = vmatprep.subr.bf16.mxu0 0
    %1696 = vmatpush1.bf16.xpose.msra.mxu0 0
    %1697 = vmatprep.subr.bf16.mxu0 0
    %1698 = vmatpush1.bf16.xpose.msra.mxu0 0
    %1699 = vmatprep.subr.bf16.mxu0 0
    %1700 = vmatpush1.bf16.xpose.msra.mxu0 0
    %1701 = vmatprep.subr.bf16.mxu0 0
    %1702 = vmatpush1.bf16.xpose.msra.mxu0 0
    %1703 = vmatprep.subr.bf16.mxu0 0
    %1704 = vmatpush1.bf16.xpose.msra.mxu0 0
    %1705 = vmatprep.subr.bf16.mxu0 0
    %1706 = vmatpush1.bf16.xpose.msra.mxu0 0
    %1707 = vmatprep.subr.bf16.mxu0 0
    %1708 = vmatpush1.bf16.xpose.msra.mxu0 0
    %1709 = vmatprep.mubr.bf16.mxu0 0
    %1710 = vmatmul.mubr.bf16.gmra.mrb[0].mxu0 %v1672
    %v1711 = vpop.f32.mrb[0].mxu0
    %v1712 = vadd.f32 %v435, %v1711
    %v1713 = vpop.f32.mrb[0].mxu0
    %v1714 = vpop.f32.mrb[0].mxu0
    %v1715 = vpop.f32.mrb[0].mxu0
    %1716 = vdwg.mxu0
    %1718 = vrot.lane.b32.xlu0 %v428, 96
    %v1719 = vpop.permute.xlu0 %1718
    %v1721 = vsel %vm445, %v428, 0
    %v1724 = vsel %vm445, %v1719, 0
    %1726 = vmatprep.subr.bf16.mxu0 0
    %1727 = vmatpush1.bf16.xpose.msra.mxu0 %v1724
    %1728 = vmatprep.subr.bf16.mxu0 0
    %1729 = vmatpush1.bf16.xpose.msra.mxu0 0
    %1730 = vmatprep.subr.bf16.mxu0 0
    %1731 = vmatpush1.bf16.xpose.msra.mxu0 0
    %1732 = vmatprep.subr.bf16.mxu0 0
    %1733 = vmatpush1.bf16.xpose.msra.mxu0 0
    %1734 = vmatprep.subr.bf16.mxu0 0
    %1735 = vmatpush1.bf16.xpose.msra.mxu0 0
    %1736 = vmatprep.subr.bf16.mxu0 0
    %1737 = vmatpush1.bf16.xpose.msra.mxu0 0
    %1738 = vmatprep.subr.bf16.mxu0 0
    %1739 = vmatpush1.bf16.xpose.msra.mxu0 0
    %1740 = vmatprep.subr.bf16.mxu0 0
    %1741 = vmatpush1.bf16.xpose.msra.mxu0 0
    %1742 = vmatprep.subr.bf16.mxu0 0
    %1743 = vmatpush1.bf16.xpose.msra.mxu0 0
    %1744 = vmatprep.subr.bf16.mxu0 0
    %1745 = vmatpush1.bf16.xpose.msra.mxu0 0
    %1746 = vmatprep.subr.bf16.mxu0 0
    %1747 = vmatpush1.bf16.xpose.msra.mxu0 0
    %1748 = vmatprep.subr.bf16.mxu0 0
    %1749 = vmatpush1.bf16.xpose.msra.mxu0 0
    %1750 = vmatprep.subr.bf16.mxu0 0
    %1751 = vmatpush1.bf16.xpose.msra.mxu0 0
    %1752 = vmatprep.subr.bf16.mxu0 0
    %1753 = vmatpush1.bf16.xpose.msra.mxu0 0
    %1754 = vmatprep.subr.bf16.mxu0 0
    %1755 = vmatpush1.bf16.xpose.msra.mxu0 0
    %1756 = vmatprep.subr.bf16.mxu0 0
    %1757 = vmatpush1.bf16.xpose.msra.mxu0 0
    %1758 = vmatprep.mubr.bf16.mxu0 0
    %1759 = vmatmul.mubr.bf16.gmra.mrb[0].mxu0 %v1721
    %v1760 = vpop.f32.mrb[0].mxu0
    %v1761 = vadd.f32 %v436, %v1760
    %v1762 = vpop.f32.mrb[0].mxu0
    %v1763 = vpop.f32.mrb[0].mxu0
    %v1764 = vpop.f32.mrb[0].mxu0
    %1765 = vdwg.mxu0
    %1767 = vrot.lane.b32.xlu0 %v429, 96
    %v1768 = vpop.permute.xlu0 %1767
    %v1770 = vsel %vm445, %v429, 0
    %v1773 = vsel %vm445, %v1768, 0
    %1775 = vmatprep.subr.bf16.mxu0 0
    %1776 = vmatpush1.bf16.xpose.msra.mxu0 %v1773
    %1777 = vmatprep.subr.bf16.mxu0 0
    %1778 = vmatpush1.bf16.xpose.msra.mxu0 0
    %1779 = vmatprep.subr.bf16.mxu0 0
    %1780 = vmatpush1.bf16.xpose.msra.mxu0 0
    %1781 = vmatprep.subr.bf16.mxu0 0
    %1782 = vmatpush1.bf16.xpose.msra.mxu0 0
    %1783 = vmatprep.subr.bf16.mxu0 0
    %1784 = vmatpush1.bf16.xpose.msra.mxu0 0
    %1785 = vmatprep.subr.bf16.mxu0 0
    %1786 = vmatpush1.bf16.xpose.msra.mxu0 0
    %1787 = vmatprep.subr.bf16.mxu0 0
    %1788 = vmatpush1.bf16.xpose.msra.mxu0 0
    %1789 = vmatprep.subr.bf16.mxu0 0
    %1790 = vmatpush1.bf16.xpose.msra.mxu0 0
    %1791 = vmatprep.subr.bf16.mxu0 0
    %1792 = vmatpush1.bf16.xpose.msra.mxu0 0
    %1793 = vmatprep.subr.bf16.mxu0 0
    %1794 = vmatpush1.bf16.xpose.msra.mxu0 0
    %1795 = vmatprep.subr.bf16.mxu0 0
    %1796 = vmatpush1.bf16.xpose.msra.mxu0 0
    %1797 = vmatprep.subr.bf16.mxu0 0
    %1798 = vmatpush1.bf16.xpose.msra.mxu0 0
    %1799 = vmatprep.subr.bf16.mxu0 0
    %1800 = vmatpush1.bf16.xpose.msra.mxu0 0
    %1801 = vmatprep.subr.bf16.mxu0 0
    %1802 = vmatpush1.bf16.xpose.msra.mxu0 0
    %1803 = vmatprep.subr.bf16.mxu0 0
    %1804 = vmatpush1.bf16.xpose.msra.mxu0 0
    %1805 = vmatprep.subr.bf16.mxu0 0
    %1806 = vmatpush1.bf16.xpose.msra.mxu0 0
    %1807 = vmatprep.mubr.bf16.mxu0 0
    %1808 = vmatmul.mubr.bf16.gmra.mrb[0].mxu0 %v1770
    %v1809 = vpop.f32.mrb[0].mxu0
    %v1810 = vadd.f32 %v437, %v1809
    %v1811 = vpop.f32.mrb[0].mxu0
    %v1812 = vpop.f32.mrb[0].mxu0
    %v1813 = vpop.f32.mrb[0].mxu0
    %1814 = vdwg.mxu0
    %1816 = vrot.lane.b32.xlu0 %v430, 96
    %v1817 = vpop.permute.xlu0 %1816
    %v1819 = vsel %vm445, %v430, 0
    %v1822 = vsel %vm445, %v1817, 0
    %1824 = vmatprep.subr.bf16.mxu0 0
    %1825 = vmatpush1.bf16.xpose.msra.mxu0 %v1822
    %1826 = vmatprep.subr.bf16.mxu0 0
    %1827 = vmatpush1.bf16.xpose.msra.mxu0 0
    %1828 = vmatprep.subr.bf16.mxu0 0
    %1829 = vmatpush1.bf16.xpose.msra.mxu0 0
    %1830 = vmatprep.subr.bf16.mxu0 0
    %1831 = vmatpush1.bf16.xpose.msra.mxu0 0
    %1832 = vmatprep.subr.bf16.mxu0 0
    %1833 = vmatpush1.bf16.xpose.msra.mxu0 0
    %1834 = vmatprep.subr.bf16.mxu0 0
    %1835 = vmatpush1.bf16.xpose.msra.mxu0 0
    %1836 = vmatprep.subr.bf16.mxu0 0
    %1837 = vmatpush1.bf16.xpose.msra.mxu0 0
    %1838 = vmatprep.subr.bf16.mxu0 0
    %1839 = vmatpush1.bf16.xpose.msra.mxu0 0
    %1840 = vmatprep.subr.bf16.mxu0 0
    %1841 = vmatpush1.bf16.xpose.msra.mxu0 0
    %1842 = vmatprep.subr.bf16.mxu0 0
    %1843 = vmatpush1.bf16.xpose.msra.mxu0 0
    %1844 = vmatprep.subr.bf16.mxu0 0
    %1845 = vmatpush1.bf16.xpose.msra.mxu0 0
    %1846 = vmatprep.subr.bf16.mxu0 0
    %1847 = vmatpush1.bf16.xpose.msra.mxu0 0
    %1848 = vmatprep.subr.bf16.mxu0 0
    %1849 = vmatpush1.bf16.xpose.msra.mxu0 0
    %1850 = vmatprep.subr.bf16.mxu0 0
    %1851 = vmatpush1.bf16.xpose.msra.mxu0 0
    %1852 = vmatprep.subr.bf16.mxu0 0
    %1853 = vmatpush1.bf16.xpose.msra.mxu0 0
    %1854 = vmatprep.subr.bf16.mxu0 0
    %1855 = vmatpush1.bf16.xpose.msra.mxu0 0
    %1856 = vmatprep.mubr.bf16.mxu0 0
    %1857 = vmatmul.mubr.bf16.gmra.mrb[0].mxu0 %v1819
    %v1858 = vpop.f32.mrb[0].mxu0
    %v1859 = vadd.f32 %v438, %v1858
    %v1860 = vpop.f32.mrb[0].mxu0
    %v1861 = vpop.f32.mrb[0].mxu0
    %v1862 = vpop.f32.mrb[0].mxu0
    %1863 = vdwg.mxu0
    %1865 = vrot.lane.b32.xlu0 %v431, 96
    %v1866 = vpop.permute.xlu0 %1865
    %v1868 = vsel %vm445, %v431, 0
    %v1871 = vsel %vm445, %v1866, 0
    %1873 = vmatprep.subr.bf16.mxu0 0
    %1874 = vmatpush1.bf16.xpose.msra.mxu0 %v1871
    %1875 = vmatprep.subr.bf16.mxu0 0
    %1876 = vmatpush1.bf16.xpose.msra.mxu0 0
    %1877 = vmatprep.subr.bf16.mxu0 0
    %1878 = vmatpush1.bf16.xpose.msra.mxu0 0
    %1879 = vmatprep.subr.bf16.mxu0 0
    %1880 = vmatpush1.bf16.xpose.msra.mxu0 0
    %1881 = vmatprep.subr.bf16.mxu0 0
    %1882 = vmatpush1.bf16.xpose.msra.mxu0 0
    %1883 = vmatprep.subr.bf16.mxu0 0
    %1884 = vmatpush1.bf16.xpose.msra.mxu0 0
    %1885 = vmatprep.subr.bf16.mxu0 0
    %1886 = vmatpush1.bf16.xpose.msra.mxu0 0
    %1887 = vmatprep.subr.bf16.mxu0 0
    %1888 = vmatpush1.bf16.xpose.msra.mxu0 0
    %1889 = vmatprep.subr.bf16.mxu0 0
    %1890 = vmatpush1.bf16.xpose.msra.mxu0 0
    %1891 = vmatprep.subr.bf16.mxu0 0
    %1892 = vmatpush1.bf16.xpose.msra.mxu0 0
    %1893 = vmatprep.subr.bf16.mxu0 0
    %1894 = vmatpush1.bf16.xpose.msra.mxu0 0
    %1895 = vmatprep.subr.bf16.mxu0 0
    %1896 = vmatpush1.bf16.xpose.msra.mxu0 0
    %1897 = vmatprep.subr.bf16.mxu0 0
    %1898 = vmatpush1.bf16.xpose.msra.mxu0 0
    %1899 = vmatprep.subr.bf16.mxu0 0
    %1900 = vmatpush1.bf16.xpose.msra.mxu0 0
    %1901 = vmatprep.subr.bf16.mxu0 0
    %1902 = vmatpush1.bf16.xpose.msra.mxu0 0
    %1903 = vmatprep.subr.bf16.mxu0 0
    %1904 = vmatpush1.bf16.xpose.msra.mxu0 0
    %1905 = vmatprep.mubr.bf16.mxu0 0
    %1906 = vmatmul.mubr.bf16.gmra.mrb[0].mxu0 %v1868
    %v1907 = vpop.f32.mrb[0].mxu0
    %v1908 = vadd.f32 %v439, %v1907
    %v1909 = vpop.f32.mrb[0].mxu0
    %v1910 = vpop.f32.mrb[0].mxu0
    %v1911 = vpop.f32.mrb[0].mxu0
    %1912 = vdwg.mxu0
    %1914 = vrot.lane.b32.xlu0 %v432, 96
    %v1915 = vpop.permute.xlu0 %1914
    %v1917 = vsel %vm445, %v432, 0
    %v1920 = vsel %vm445, %v1915, 0
    %1922 = vmatprep.subr.bf16.mxu0 0
    %1923 = vmatpush1.bf16.xpose.msra.mxu0 %v1920
    %1924 = vmatprep.subr.bf16.mxu0 0
    %1925 = vmatpush1.bf16.xpose.msra.mxu0 0
    %1926 = vmatprep.subr.bf16.mxu0 0
    %1927 = vmatpush1.bf16.xpose.msra.mxu0 0
    %1928 = vmatprep.subr.bf16.mxu0 0
    %1929 = vmatpush1.bf16.xpose.msra.mxu0 0
    %1930 = vmatprep.subr.bf16.mxu0 0
    %1931 = vmatpush1.bf16.xpose.msra.mxu0 0
    %1932 = vmatprep.subr.bf16.mxu0 0
    %1933 = vmatpush1.bf16.xpose.msra.mxu0 0
    %1934 = vmatprep.subr.bf16.mxu0 0
    %1935 = vmatpush1.bf16.xpose.msra.mxu0 0
    %1936 = vmatprep.subr.bf16.mxu0 0
    %1937 = vmatpush1.bf16.xpose.msra.mxu0 0
    %1938 = vmatprep.subr.bf16.mxu0 0
    %1939 = vmatpush1.bf16.xpose.msra.mxu0 0
    %1940 = vmatprep.subr.bf16.mxu0 0
    %1941 = vmatpush1.bf16.xpose.msra.mxu0 0
    %1942 = vmatprep.subr.bf16.mxu0 0
    %1943 = vmatpush1.bf16.xpose.msra.mxu0 0
    %1944 = vmatprep.subr.bf16.mxu0 0
    %1945 = vmatpush1.bf16.xpose.msra.mxu0 0
    %1946 = vmatprep.subr.bf16.mxu0 0
    %1947 = vmatpush1.bf16.xpose.msra.mxu0 0
    %1948 = vmatprep.subr.bf16.mxu0 0
    %1949 = vmatpush1.bf16.xpose.msra.mxu0 0
    %1950 = vmatprep.subr.bf16.mxu0 0
    %1951 = vmatpush1.bf16.xpose.msra.mxu0 0
    %1952 = vmatprep.subr.bf16.mxu0 0
    %1953 = vmatpush1.bf16.xpose.msra.mxu0 0
    %1954 = vmatprep.mubr.bf16.mxu0 0
    %1955 = vmatmul.mubr.bf16.gmra.mrb[0].mxu0 %v1917
    %v1956 = vpop.f32.mrb[0].mxu0
    %v1957 = vadd.f32 %v440, %v1956
    %v1958 = vpop.f32.mrb[0].mxu0
    %v1959 = vpop.f32.mrb[0].mxu0
    %v1960 = vpop.f32.mrb[0].mxu0
    %1961 = vdwg.mxu0
    %1963 = vrot.lane.b32.xlu0 %v433, 96
    %v1964 = vpop.permute.xlu0 %1963
    %v1966 = vsel %vm445, %v433, 0
    %v1969 = vsel %vm445, %v1964, 0
    %1971 = vmatprep.subr.bf16.mxu0 0
    %1972 = vmatpush1.bf16.xpose.msra.mxu0 %v1969
    %1973 = vmatprep.subr.bf16.mxu0 0
    %1974 = vmatpush1.bf16.xpose.msra.mxu0 0
    %1975 = vmatprep.subr.bf16.mxu0 0
    %1976 = vmatpush1.bf16.xpose.msra.mxu0 0
    %1977 = vmatprep.subr.bf16.mxu0 0
    %1978 = vmatpush1.bf16.xpose.msra.mxu0 0
    %1979 = vmatprep.subr.bf16.mxu0 0
    %1980 = vmatpush1.bf16.xpose.msra.mxu0 0
    %1981 = vmatprep.subr.bf16.mxu0 0
    %1982 = vmatpush1.bf16.xpose.msra.mxu0 0
    %1983 = vmatprep.subr.bf16.mxu0 0
    %1984 = vmatpush1.bf16.xpose.msra.mxu0 0
    %1985 = vmatprep.subr.bf16.mxu0 0
    %1986 = vmatpush1.bf16.xpose.msra.mxu0 0
    %1987 = vmatprep.subr.bf16.mxu0 0
    %1988 = vmatpush1.bf16.xpose.msra.mxu0 0
    %1989 = vmatprep.subr.bf16.mxu0 0
    %1990 = vmatpush1.bf16.xpose.msra.mxu0 0
    %1991 = vmatprep.subr.bf16.mxu0 0
    %1992 = vmatpush1.bf16.xpose.msra.mxu0 0
    %1993 = vmatprep.subr.bf16.mxu0 0
    %1994 = vmatpush1.bf16.xpose.msra.mxu0 0
    %1995 = vmatprep.subr.bf16.mxu0 0
    %1996 = vmatpush1.bf16.xpose.msra.mxu0 0
    %1997 = vmatprep.subr.bf16.mxu0 0
    %1998 = vmatpush1.bf16.xpose.msra.mxu0 0
    %1999 = vmatprep.subr.bf16.mxu0 0
    %2000 = vmatpush1.bf16.xpose.msra.mxu0 0
    %2001 = vmatprep.subr.bf16.mxu0 0
    %2002 = vmatpush1.bf16.xpose.msra.mxu0 0
    %2003 = vmatprep.mubr.bf16.mxu0 0
    %2004 = vmatmul.mubr.bf16.gmra.mrb[0].mxu0 %v1966
    %v2005 = vpop.f32.mrb[0].mxu0
    %v2006 = vadd.f32 %v441, %v2005
    %v2007 = vpop.f32.mrb[0].mxu0
    %v2008 = vpop.f32.mrb[0].mxu0
    %v2009 = vpop.f32.mrb[0].mxu0
    %2010 = vdwg.mxu0
    %v2011 = vsel %vm445, %v487, -inf
    %2012 = vmax.xlane.f32.xlu0 %v2011
    %v2013 = vpop.xlane.xlu0 %2012
    %v2014 = vsel %vm445, %v536, -inf
    %2015 = vmax.xlane.f32.xlu0 %v2014
    %v2016 = vpop.xlane.xlu0 %2015
    %v2017 = vsel %vm445, %v585, -inf
    %2018 = vmax.xlane.f32.xlu0 %v2017
    %v2019 = vpop.xlane.xlu0 %2018
    %v2020 = vsel %vm445, %v634, -inf
    %2021 = vmax.xlane.f32.xlu0 %v2020
    %v2022 = vpop.xlane.xlu0 %2021
    %v2023 = vsel %vm445, %v683, -inf
    %2024 = vmax.xlane.f32.xlu0 %v2023
    %v2025 = vpop.xlane.xlu0 %2024
    %v2026 = vsel %vm445, %v732, -inf
    %2027 = vmax.xlane.f32.xlu0 %v2026
    %v2028 = vpop.xlane.xlu0 %2027
    %v2029 = vsel %vm445, %v781, -inf
    %2030 = vmax.xlane.f32.xlu0 %v2029
    %v2031 = vpop.xlane.xlu0 %2030
    %v2032 = vsel %vm445, %v830, -inf
    %2033 = vmax.xlane.f32.xlu0 %v2032
    %v2034 = vpop.xlane.xlu0 %2033
    %v2035 = vsel %vm445, %v879, -inf
    %2036 = vmax.xlane.f32.xlu0 %v2035
    %v2037 = vpop.xlane.xlu0 %2036
    %v2038 = vsel %vm445, %v928, -inf
    %2039 = vmax.xlane.f32.xlu0 %v2038
    %v2040 = vpop.xlane.xlu0 %2039
    %v2041 = vsel %vm445, %v977, -inf
    %2042 = vmax.xlane.f32.xlu0 %v2041
    %v2043 = vpop.xlane.xlu0 %2042
    %v2044 = vsel %vm445, %v1026, -inf
    %2045 = vmax.xlane.f32.xlu0 %v2044
    %v2046 = vpop.xlane.xlu0 %2045
    %v2047 = vsel %vm445, %v1075, -inf
    %2048 = vmax.xlane.f32.xlu0 %v2047
    %v2049 = vpop.xlane.xlu0 %2048
    %v2050 = vsel %vm445, %v1124, -inf
    %2051 = vmax.xlane.f32.xlu0 %v2050
    %v2052 = vpop.xlane.xlu0 %2051
    %v2053 = vsel %vm445, %v1173, -inf
    %2054 = vmax.xlane.f32.xlu0 %v2053
    %v2055 = vpop.xlane.xlu0 %2054
    %v2056 = vsel %vm445, %v1222, -inf
    %2057 = vmax.xlane.f32.xlu0 %v2056
    %v2058 = vpop.xlane.xlu0 %2057
    %v2059 = vsel %vm445, %v1271, -inf
    %2060 = vmax.xlane.f32.xlu0 %v2059
    %v2061 = vpop.xlane.xlu0 %2060
    %v2062 = vsel %vm445, %v1320, -inf
    %2063 = vmax.xlane.f32.xlu0 %v2062
    %v2064 = vpop.xlane.xlu0 %2063
    %v2065 = vsel %vm445, %v1369, -inf
    %2066 = vmax.xlane.f32.xlu0 %v2065
    %v2067 = vpop.xlane.xlu0 %2066
    %v2068 = vsel %vm445, %v1418, -inf
    %2069 = vmax.xlane.f32.xlu0 %v2068
    %v2070 = vpop.xlane.xlu0 %2069
    %v2071 = vsel %vm445, %v1467, -inf
    %2072 = vmax.xlane.f32.xlu0 %v2071
    %v2073 = vpop.xlane.xlu0 %2072
    %v2074 = vsel %vm445, %v1516, -inf
    %2075 = vmax.xlane.f32.xlu0 %v2074
    %v2076 = vpop.xlane.xlu0 %2075
    %v2077 = vsel %vm445, %v1565, -inf
    %2078 = vmax.xlane.f32.xlu0 %v2077
    %v2079 = vpop.xlane.xlu0 %2078
    %v2080 = vsel %vm445, %v1614, -inf
    %2081 = vmax.xlane.f32.xlu0 %v2080
    %v2082 = vpop.xlane.xlu0 %2081
    %v2083 = vsel %vm445, %v1663, -inf
    %2084 = vmax.xlane.f32.xlu0 %v2083
    %v2085 = vpop.xlane.xlu0 %2084
    %v2086 = vsel %vm445, %v1712, -inf
    %2087 = vmax.xlane.f32.xlu0 %v2086
    %v2088 = vpop.xlane.xlu0 %2087
    %v2089 = vsel %vm445, %v1761, -inf
    %2090 = vmax.xlane.f32.xlu0 %v2089
    %v2091 = vpop.xlane.xlu0 %2090
    %v2092 = vsel %vm445, %v1810, -inf
    %2093 = vmax.xlane.f32.xlu0 %v2092
    %v2094 = vpop.xlane.xlu0 %2093
    %v2095 = vsel %vm445, %v1859, -inf
    %2096 = vmax.xlane.f32.xlu0 %v2095
    %v2097 = vpop.xlane.xlu0 %2096
    %v2098 = vsel %vm445, %v1908, -inf
    %2099 = vmax.xlane.f32.xlu0 %v2098
    %v2100 = vpop.xlane.xlu0 %2099
    %v2101 = vsel %vm445, %v1957, -inf
    %2102 = vmax.xlane.f32.xlu0 %v2101
    %v2103 = vpop.xlane.xlu0 %2102
    %v2104 = vsel %vm445, %v2006, -inf
    %2105 = vmax.xlane.f32.xlu0 %v2104
    %v2106 = vpop.xlane.xlu0 %2105
    %v2107 = vsub.f32 %v487, %v2013
    %v2108 = vsub.f32 %v536, %v2016
    %v2109 = vsub.f32 %v585, %v2019
    %v2110 = vsub.f32 %v634, %v2022
    %v2111 = vsub.f32 %v683, %v2025
    %v2112 = vsub.f32 %v732, %v2028
    %v2113 = vsub.f32 %v781, %v2031
    %v2114 = vsub.f32 %v830, %v2034
    %v2115 = vsub.f32 %v879, %v2037
    %v2116 = vsub.f32 %v928, %v2040
    %v2117 = vsub.f32 %v977, %v2043
    %v2118 = vsub.f32 %v1026, %v2046
    %v2119 = vsub.f32 %v1075, %v2049
    %v2120 = vsub.f32 %v1124, %v2052
    %v2121 = vsub.f32 %v1173, %v2055
    %v2122 = vsub.f32 %v1222, %v2058
    %v2123 = vsub.f32 %v1271, %v2061
    %v2124 = vsub.f32 %v1320, %v2064
    %v2125 = vsub.f32 %v1369, %v2067
    %v2126 = vsub.f32 %v1418, %v2070
    %v2127 = vsub.f32 %v1467, %v2073
    %v2128 = vsub.f32 %v1516, %v2076
    %v2129 = vsub.f32 %v1565, %v2079
    %v2130 = vsub.f32 %v1614, %v2082
    %v2131 = vsub.f32 %v1663, %v2085
    %v2132 = vsub.f32 %v1712, %v2088
    %v2133 = vsub.f32 %v1761, %v2091
    %v2134 = vsub.f32 %v1810, %v2094
    %v2135 = vsub.f32 %v1859, %v2097
    %v2136 = vsub.f32 %v1908, %v2100
    %v2137 = vsub.f32 %v1957, %v2103
    %v2138 = vsub.f32 %v2006, %v2106
    %v2139 = vmul.f32 %v2107, 1.442695
    %v2140 = vpow.pop %v2139
    %v2141 = vmul.f32 %v2108, 1.442695
    %v2142 = vpow.pop %v2141
    %v2143 = vmul.f32 %v2109, 1.442695
    %v2144 = vpow.pop %v2143
    %v2145 = vmul.f32 %v2110, 1.442695
    %v2146 = vpow.pop %v2145
    %v2147 = vmul.f32 %v2111, 1.442695
    %v2148 = vpow.pop %v2147
    %v2149 = vmul.f32 %v2112, 1.442695
    %v2150 = vpow.pop %v2149
    %v2151 = vmul.f32 %v2113, 1.442695
    %v2152 = vpow.pop %v2151
    %v2153 = vmul.f32 %v2114, 1.442695
    %v2154 = vpow.pop %v2153
    %v2155 = vmul.f32 %v2115, 1.442695
    %v2156 = vpow.pop %v2155
    %v2157 = vmul.f32 %v2116, 1.442695
    %v2158 = vpow.pop %v2157
    %v2159 = vmul.f32 %v2117, 1.442695
    %v2160 = vpow.pop %v2159
    %v2161 = vmul.f32 %v2118, 1.442695
    %v2162 = vpow.pop %v2161
    %v2163 = vmul.f32 %v2119, 1.442695
    %v2164 = vpow.pop %v2163
    %v2165 = vmul.f32 %v2120, 1.442695
    %v2166 = vpow.pop %v2165
    %v2167 = vmul.f32 %v2121, 1.442695
    %v2168 = vpow.pop %v2167
    %v2169 = vmul.f32 %v2122, 1.442695
    %v2170 = vpow.pop %v2169
    %v2171 = vmul.f32 %v2123, 1.442695
    %v2172 = vpow.pop %v2171
    %v2173 = vmul.f32 %v2124, 1.442695
    %v2174 = vpow.pop %v2173
    %v2175 = vmul.f32 %v2125, 1.442695
    %v2176 = vpow.pop %v2175
    %v2177 = vmul.f32 %v2126, 1.442695
    %v2178 = vpow.pop %v2177
    %v2179 = vmul.f32 %v2127, 1.442695
    %v2180 = vpow.pop %v2179
    %v2181 = vmul.f32 %v2128, 1.442695
    %v2182 = vpow.pop %v2181
    %v2183 = vmul.f32 %v2129, 1.442695
    %v2184 = vpow.pop %v2183
    %v2185 = vmul.f32 %v2130, 1.442695
    %v2186 = vpow.pop %v2185
    %v2187 = vmul.f32 %v2131, 1.442695
    %v2188 = vpow.pop %v2187
    %v2189 = vmul.f32 %v2132, 1.442695
    %v2190 = vpow.pop %v2189
    %v2191 = vmul.f32 %v2133, 1.442695
    %v2192 = vpow.pop %v2191
    %v2193 = vmul.f32 %v2134, 1.442695
    %v2194 = vpow.pop %v2193
    %v2195 = vmul.f32 %v2135, 1.442695
    %v2196 = vpow.pop %v2195
    %v2197 = vmul.f32 %v2136, 1.442695
    %v2198 = vpow.pop %v2197
    %v2199 = vmul.f32 %v2137, 1.442695
    %v2200 = vpow.pop %v2199
    %v2201 = vmul.f32 %v2138, 1.442695
    %v2202 = vpow.pop %v2201
    %v2203 = vsel %vm445, %v2140, 0.0
    %2204 = vadd.xlane.f32.xlu0 %v2203
    %v2205 = vpop.xlane.xlu0 %2204
    %v2206 = vsel %vm445, %v2142, 0.0
    %2207 = vadd.xlane.f32.xlu0 %v2206
    %v2208 = vpop.xlane.xlu0 %2207
    %v2209 = vsel %vm445, %v2144, 0.0
    %2210 = vadd.xlane.f32.xlu0 %v2209
    %v2211 = vpop.xlane.xlu0 %2210
    %v2212 = vsel %vm445, %v2146, 0.0
    %2213 = vadd.xlane.f32.xlu0 %v2212
    %v2214 = vpop.xlane.xlu0 %2213
    %v2215 = vsel %vm445, %v2148, 0.0
    %2216 = vadd.xlane.f32.xlu0 %v2215
    %v2217 = vpop.xlane.xlu0 %2216
    %v2218 = vsel %vm445, %v2150, 0.0
    %2219 = vadd.xlane.f32.xlu0 %v2218
    %v2220 = vpop.xlane.xlu0 %2219
    %v2221 = vsel %vm445, %v2152, 0.0
    %2222 = vadd.xlane.f32.xlu0 %v2221
    %v2223 = vpop.xlane.xlu0 %2222
    %v2224 = vsel %vm445, %v2154, 0.0
    %2225 = vadd.xlane.f32.xlu0 %v2224
    %v2226 = vpop.xlane.xlu0 %2225
    %v2227 = vsel %vm445, %v2156, 0.0
    %2228 = vadd.xlane.f32.xlu0 %v2227
    %v2229 = vpop.xlane.xlu0 %2228
    %v2230 = vsel %vm445, %v2158, 0.0
    %2231 = vadd.xlane.f32.xlu0 %v2230
    %v2232 = vpop.xlane.xlu0 %2231
    %v2233 = vsel %vm445, %v2160, 0.0
    %2234 = vadd.xlane.f32.xlu0 %v2233
    %v2235 = vpop.xlane.xlu0 %2234
    %v2236 = vsel %vm445, %v2162, 0.0
    %2237 = vadd.xlane.f32.xlu0 %v2236
    %v2238 = vpop.xlane.xlu0 %2237
    %v2239 = vsel %vm445, %v2164, 0.0
    %2240 = vadd.xlane.f32.xlu0 %v2239
    %v2241 = vpop.xlane.xlu0 %2240
    %v2242 = vsel %vm445, %v2166, 0.0
    %2243 = vadd.xlane.f32.xlu0 %v2242
    %v2244 = vpop.xlane.xlu0 %2243
    %v2245 = vsel %vm445, %v2168, 0.0
    %2246 = vadd.xlane.f32.xlu0 %v2245
    %v2247 = vpop.xlane.xlu0 %2246
    %v2248 = vsel %vm445, %v2170, 0.0
    %2249 = vadd.xlane.f32.xlu0 %v2248
    %v2250 = vpop.xlane.xlu0 %2249
    %v2251 = vsel %vm445, %v2172, 0.0
    %2252 = vadd.xlane.f32.xlu0 %v2251
    %v2253 = vpop.xlane.xlu0 %2252
    %v2254 = vsel %vm445, %v2174, 0.0
    %2255 = vadd.xlane.f32.xlu0 %v2254
    %v2256 = vpop.xlane.xlu0 %2255
    %v2257 = vsel %vm445, %v2176, 0.0
    %2258 = vadd.xlane.f32.xlu0 %v2257
    %v2259 = vpop.xlane.xlu0 %2258
    %v2260 = vsel %vm445, %v2178, 0.0
    %2261 = vadd.xlane.f32.xlu0 %v2260
    %v2262 = vpop.xlane.xlu0 %2261
    %v2263 = vsel %vm445, %v2180, 0.0
    %2264 = vadd.xlane.f32.xlu0 %v2263
    %v2265 = vpop.xlane.xlu0 %2264
    %v2266 = vsel %vm445, %v2182, 0.0
    %2267 = vadd.xlane.f32.xlu0 %v2266
    %v2268 = vpop.xlane.xlu0 %2267
    %v2269 = vsel %vm445, %v2184, 0.0
    %2270 = vadd.xlane.f32.xlu0 %v2269
    %v2271 = vpop.xlane.xlu0 %2270
    %v2272 = vsel %vm445, %v2186, 0.0
    %2273 = vadd.xlane.f32.xlu0 %v2272
    %v2274 = vpop.xlane.xlu0 %2273
    %v2275 = vsel %vm445, %v2188, 0.0
    %2276 = vadd.xlane.f32.xlu0 %v2275
    %v2277 = vpop.xlane.xlu0 %2276
    %v2278 = vsel %vm445, %v2190, 0.0
    %2279 = vadd.xlane.f32.xlu0 %v2278
    %v2280 = vpop.xlane.xlu0 %2279
    %v2281 = vsel %vm445, %v2192, 0.0
    %2282 = vadd.xlane.f32.xlu0 %v2281
    %v2283 = vpop.xlane.xlu0 %2282
    %v2284 = vsel %vm445, %v2194, 0.0
    %2285 = vadd.xlane.f32.xlu0 %v2284
    %v2286 = vpop.xlane.xlu0 %2285
    %v2287 = vsel %vm445, %v2196, 0.0
    %2288 = vadd.xlane.f32.xlu0 %v2287
    %v2289 = vpop.xlane.xlu0 %2288
    %v2290 = vsel %vm445, %v2198, 0.0
    %2291 = vadd.xlane.f32.xlu0 %v2290
    %v2292 = vpop.xlane.xlu0 %2291
    %v2293 = vsel %vm445, %v2200, 0.0
    %2294 = vadd.xlane.f32.xlu0 %v2293
    %v2295 = vpop.xlane.xlu0 %2294
    %v2296 = vsel %vm445, %v2202, 0.0
    %2297 = vadd.xlane.f32.xlu0 %v2296
    %v2298 = vpop.xlane.xlu0 %2297
    %v2299 = vrcp.pop %v2205
    %v2300 = vrcp.pop %v2208
    %v2301 = vrcp.pop %v2211
    %v2302 = vrcp.pop %v2214
    %v2303 = vrcp.pop %v2217
    %v2304 = vrcp.pop %v2220
    %v2305 = vrcp.pop %v2223
    %v2306 = vrcp.pop %v2226
    %v2307 = vrcp.pop %v2229
    %v2308 = vrcp.pop %v2232
    %v2309 = vrcp.pop %v2235
    %v2310 = vrcp.pop %v2238
    %v2311 = vrcp.pop %v2241
    %v2312 = vrcp.pop %v2244
    %v2313 = vrcp.pop %v2247
    %v2314 = vrcp.pop %v2250
    %v2315 = vrcp.pop %v2253
    %v2316 = vrcp.pop %v2256
    %v2317 = vrcp.pop %v2259
    %v2318 = vrcp.pop %v2262
    %v2319 = vrcp.pop %v2265
    %v2320 = vrcp.pop %v2268
    %v2321 = vrcp.pop %v2271
    %v2322 = vrcp.pop %v2274
    %v2323 = vrcp.pop %v2277
    %v2324 = vrcp.pop %v2280
    %v2325 = vrcp.pop %v2283
    %v2326 = vrcp.pop %v2286
    %v2327 = vrcp.pop %v2289
    %v2328 = vrcp.pop %v2292
    %v2329 = vrcp.pop %v2295
    %v2330 = vrcp.pop %v2298
    %v2331 = vmul.f32 %v2140, %v2299
    %v2332 = vmul.f32 %v2142, %v2300
    %v2333 = vmul.f32 %v2144, %v2301
    %v2334 = vmul.f32 %v2146, %v2302
    %v2335 = vmul.f32 %v2148, %v2303
    %v2336 = vmul.f32 %v2150, %v2304
    %v2337 = vmul.f32 %v2152, %v2305
    %v2338 = vmul.f32 %v2154, %v2306
    %v2339 = vmul.f32 %v2156, %v2307
    %v2340 = vmul.f32 %v2158, %v2308
    %v2341 = vmul.f32 %v2160, %v2309
    %v2342 = vmul.f32 %v2162, %v2310
    %v2343 = vmul.f32 %v2164, %v2311
    %v2344 = vmul.f32 %v2166, %v2312
    %v2345 = vmul.f32 %v2168, %v2313
    %v2346 = vmul.f32 %v2170, %v2314
    %v2347 = vmul.f32 %v2172, %v2315
    %v2348 = vmul.f32 %v2174, %v2316
    %v2349 = vmul.f32 %v2176, %v2317
    %v2350 = vmul.f32 %v2178, %v2318
    %v2351 = vmul.f32 %v2180, %v2319
    %v2352 = vmul.f32 %v2182, %v2320
    %v2353 = vmul.f32 %v2184, %v2321
    %v2354 = vmul.f32 %v2186, %v2322
    %v2355 = vmul.f32 %v2188, %v2323
    %v2356 = vmul.f32 %v2190, %v2324
    %v2357 = vmul.f32 %v2192, %v2325
    %v2358 = vmul.f32 %v2194, %v2326
    %v2359 = vmul.f32 %v2196, %v2327
    %v2360 = vmul.f32 %v2198, %v2328
    %v2361 = vmul.f32 %v2200, %v2329
    %v2362 = vmul.f32 %v2202, %v2330
    %v2363 = vpack.c.bf16 %v2331, %v2331
    %v2364 = vpack.c.bf16 %v2332, %v2332
    %v2365 = vpack.c.bf16 %v2333, %v2333
    %v2366 = vpack.c.bf16 %v2334, %v2334
    %v2367 = vpack.c.bf16 %v2335, %v2335
    %v2368 = vpack.c.bf16 %v2336, %v2336
    %v2369 = vpack.c.bf16 %v2337, %v2337
    %v2370 = vpack.c.bf16 %v2338, %v2338
    %v2371 = vpack.c.bf16 %v2339, %v2339
    %v2372 = vpack.c.bf16 %v2340, %v2340
    %v2373 = vpack.c.bf16 %v2341, %v2341
    %v2374 = vpack.c.bf16 %v2342, %v2342
    %v2375 = vpack.c.bf16 %v2343, %v2343
    %v2376 = vpack.c.bf16 %v2344, %v2344
    %v2377 = vpack.c.bf16 %v2345, %v2345
    %v2378 = vpack.c.bf16 %v2346, %v2346
    %v2379 = vpack.c.bf16 %v2347, %v2347
    %v2380 = vpack.c.bf16 %v2348, %v2348
    %v2381 = vpack.c.bf16 %v2349, %v2349
    %v2382 = vpack.c.bf16 %v2350, %v2350
    %v2383 = vpack.c.bf16 %v2351, %v2351
    %v2384 = vpack.c.bf16 %v2352, %v2352
    %v2385 = vpack.c.bf16 %v2353, %v2353
    %v2386 = vpack.c.bf16 %v2354, %v2354
    %v2387 = vpack.c.bf16 %v2355, %v2355
    %v2388 = vpack.c.bf16 %v2356, %v2356
    %v2389 = vpack.c.bf16 %v2357, %v2357
    %v2390 = vpack.c.bf16 %v2358, %v2358
    %v2391 = vpack.c.bf16 %v2359, %v2359
    %v2392 = vpack.c.bf16 %v2360, %v2360
    %v2393 = vpack.c.bf16 %v2361, %v2361
    %v2394 = vpack.c.bf16 %v2362, %v2362
    %2395 = vrot.lane.b32.xlu0 %v402, 64
    %v2396 = vpop.permute.xlu0 %2395
    %v2398 = vsel %vm445, %v2363, 0
    %vm2400 = vcmask 1043456
    %v2402 = vsel %vm2400, %v2396, 0
    %2404 = vmatprep.subr.bf16.mxu0 0
    %2405 = vmatpush1.bf16.msra.mxu0 %v2402
    %2406 = vmatprep.subr.bf16.mxu0 0
    %2407 = vmatpush1.bf16.msra.mxu0 0
    %2408 = vmatprep.subr.bf16.mxu0 0
    %2409 = vmatpush1.bf16.msra.mxu0 0
    %2410 = vmatprep.subr.bf16.mxu0 0
    %2411 = vmatpush1.bf16.msra.mxu0 0
    %2412 = vmatprep.subr.bf16.mxu0 0
    %2413 = vmatpush1.bf16.msra.mxu0 0
    %2414 = vmatprep.subr.bf16.mxu0 0
    %2415 = vmatpush1.bf16.msra.mxu0 0
    %2416 = vmatprep.subr.bf16.mxu0 0
    %2417 = vmatpush1.bf16.msra.mxu0 0
    %2418 = vmatprep.subr.bf16.mxu0 0
    %2419 = vmatpush1.bf16.msra.mxu0 0
    %2420 = vmatprep.subr.bf16.mxu0 0
    %2421 = vmatpush1.bf16.msra.mxu0 0
    %2422 = vmatprep.subr.bf16.mxu0 0
    %2423 = vmatpush1.bf16.msra.mxu0 0
    %2424 = vmatprep.subr.bf16.mxu0 0
    %2425 = vmatpush1.bf16.msra.mxu0 0
    %2426 = vmatprep.subr.bf16.mxu0 0
    %2427 = vmatpush1.bf16.msra.mxu0 0
    %2428 = vmatprep.subr.bf16.mxu0 0
    %2429 = vmatpush1.bf16.msra.mxu0 0
    %2430 = vmatprep.subr.bf16.mxu0 0
    %2431 = vmatpush1.bf16.msra.mxu0 0
    %2432 = vmatprep.subr.bf16.mxu0 0
    %2433 = vmatpush1.bf16.msra.mxu0 0
    %2434 = vmatprep.subr.bf16.mxu0 0
    %2435 = vmatpush1.bf16.msra.mxu0 0
    %2436 = vmatprep.mubr.bf16.mxu0 0
    %2437 = vmatmul.mubr.bf16.gmra.mrb[0].mxu0 %v2398
    %v2438 = vpop.f32.mrb[0].mxu0
    %v2439 = vadd.f32 0.0, %v2438
    %v2440 = vpop.f32.mrb[0].mxu0
    %v2441 = vpop.f32.mrb[0].mxu0
    %v2442 = vpop.f32.mrb[0].mxu0
    %2443 = vdwg.mxu0
    %2444 = vrot.lane.b32.xlu0 %v403, 64
    %v2445 = vpop.permute.xlu0 %2444
    %v2447 = vsel %vm445, %v2364, 0
    %v2450 = vsel %vm2400, %v2445, 0
    %2452 = vmatprep.subr.bf16.mxu0 0
    %2453 = vmatpush1.bf16.msra.mxu0 %v2450
    %2454 = vmatprep.subr.bf16.mxu0 0
    %2455 = vmatpush1.bf16.msra.mxu0 0
    %2456 = vmatprep.subr.bf16.mxu0 0
    %2457 = vmatpush1.bf16.msra.mxu0 0
    %2458 = vmatprep.subr.bf16.mxu0 0
    %2459 = vmatpush1.bf16.msra.mxu0 0
    %2460 = vmatprep.subr.bf16.mxu0 0
    %2461 = vmatpush1.bf16.msra.mxu0 0
    %2462 = vmatprep.subr.bf16.mxu0 0
    %2463 = vmatpush1.bf16.msra.mxu0 0
    %2464 = vmatprep.subr.bf16.mxu0 0
    %2465 = vmatpush1.bf16.msra.mxu0 0
    %2466 = vmatprep.subr.bf16.mxu0 0
    %2467 = vmatpush1.bf16.msra.mxu0 0
    %2468 = vmatprep.subr.bf16.mxu0 0
    %2469 = vmatpush1.bf16.msra.mxu0 0
    %2470 = vmatprep.subr.bf16.mxu0 0
    %2471 = vmatpush1.bf16.msra.mxu0 0
    %2472 = vmatprep.subr.bf16.mxu0 0
    %2473 = vmatpush1.bf16.msra.mxu0 0
    %2474 = vmatprep.subr.bf16.mxu0 0
    %2475 = vmatpush1.bf16.msra.mxu0 0
    %2476 = vmatprep.subr.bf16.mxu0 0
    %2477 = vmatpush1.bf16.msra.mxu0 0
    %2478 = vmatprep.subr.bf16.mxu0 0
    %2479 = vmatpush1.bf16.msra.mxu0 0
    %2480 = vmatprep.subr.bf16.mxu0 0
    %2481 = vmatpush1.bf16.msra.mxu0 0
    %2482 = vmatprep.subr.bf16.mxu0 0
    %2483 = vmatpush1.bf16.msra.mxu0 0
    %2484 = vmatprep.mubr.bf16.mxu0 0
    %2485 = vmatmul.mubr.bf16.gmra.mrb[0].mxu0 %v2447
    %v2486 = vpop.f32.mrb[0].mxu0
    %v2487 = vadd.f32 0.0, %v2486
    %v2488 = vpop.f32.mrb[0].mxu0
    %v2489 = vpop.f32.mrb[0].mxu0
    %v2490 = vpop.f32.mrb[0].mxu0
    %2491 = vdwg.mxu0
    %2492 = vrot.lane.b32.xlu0 %v404, 64
    %v2493 = vpop.permute.xlu0 %2492
    %v2495 = vsel %vm445, %v2365, 0
    %v2498 = vsel %vm2400, %v2493, 0
    %2500 = vmatprep.subr.bf16.mxu0 0
    %2501 = vmatpush1.bf16.msra.mxu0 %v2498
    %2502 = vmatprep.subr.bf16.mxu0 0
    %2503 = vmatpush1.bf16.msra.mxu0 0
    %2504 = vmatprep.subr.bf16.mxu0 0
    %2505 = vmatpush1.bf16.msra.mxu0 0
    %2506 = vmatprep.subr.bf16.mxu0 0
    %2507 = vmatpush1.bf16.msra.mxu0 0
    %2508 = vmatprep.subr.bf16.mxu0 0
    %2509 = vmatpush1.bf16.msra.mxu0 0
    %2510 = vmatprep.subr.bf16.mxu0 0
    %2511 = vmatpush1.bf16.msra.mxu0 0
    %2512 = vmatprep.subr.bf16.mxu0 0
    %2513 = vmatpush1.bf16.msra.mxu0 0
    %2514 = vmatprep.subr.bf16.mxu0 0
    %2515 = vmatpush1.bf16.msra.mxu0 0
    %2516 = vmatprep.subr.bf16.mxu0 0
    %2517 = vmatpush1.bf16.msra.mxu0 0
    %2518 = vmatprep.subr.bf16.mxu0 0
    %2519 = vmatpush1.bf16.msra.mxu0 0
    %2520 = vmatprep.subr.bf16.mxu0 0
    %2521 = vmatpush1.bf16.msra.mxu0 0
    %2522 = vmatprep.subr.bf16.mxu0 0
    %2523 = vmatpush1.bf16.msra.mxu0 0
    %2524 = vmatprep.subr.bf16.mxu0 0
    %2525 = vmatpush1.bf16.msra.mxu0 0
    %2526 = vmatprep.subr.bf16.mxu0 0
    %2527 = vmatpush1.bf16.msra.mxu0 0
    %2528 = vmatprep.subr.bf16.mxu0 0
    %2529 = vmatpush1.bf16.msra.mxu0 0
    %2530 = vmatprep.subr.bf16.mxu0 0
    %2531 = vmatpush1.bf16.msra.mxu0 0
    %2532 = vmatprep.mubr.bf16.mxu0 0
    %2533 = vmatmul.mubr.bf16.gmra.mrb[0].mxu0 %v2495
    %v2534 = vpop.f32.mrb[0].mxu0
    %v2535 = vadd.f32 0.0, %v2534
    %v2536 = vpop.f32.mrb[0].mxu0
    %v2537 = vpop.f32.mrb[0].mxu0
    %v2538 = vpop.f32.mrb[0].mxu0
    %2539 = vdwg.mxu0
    %2540 = vrot.lane.b32.xlu0 %v405, 64
    %v2541 = vpop.permute.xlu0 %2540
    %v2543 = vsel %vm445, %v2366, 0
    %v2546 = vsel %vm2400, %v2541, 0
    %2548 = vmatprep.subr.bf16.mxu0 0
    %2549 = vmatpush1.bf16.msra.mxu0 %v2546
    %2550 = vmatprep.subr.bf16.mxu0 0
    %2551 = vmatpush1.bf16.msra.mxu0 0
    %2552 = vmatprep.subr.bf16.mxu0 0
    %2553 = vmatpush1.bf16.msra.mxu0 0
    %2554 = vmatprep.subr.bf16.mxu0 0
    %2555 = vmatpush1.bf16.msra.mxu0 0
    %2556 = vmatprep.subr.bf16.mxu0 0
    %2557 = vmatpush1.bf16.msra.mxu0 0
    %2558 = vmatprep.subr.bf16.mxu0 0
    %2559 = vmatpush1.bf16.msra.mxu0 0
    %2560 = vmatprep.subr.bf16.mxu0 0
    %2561 = vmatpush1.bf16.msra.mxu0 0
    %2562 = vmatprep.subr.bf16.mxu0 0
    %2563 = vmatpush1.bf16.msra.mxu0 0
    %2564 = vmatprep.subr.bf16.mxu0 0
    %2565 = vmatpush1.bf16.msra.mxu0 0
    %2566 = vmatprep.subr.bf16.mxu0 0
    %2567 = vmatpush1.bf16.msra.mxu0 0
    %2568 = vmatprep.subr.bf16.mxu0 0
    %2569 = vmatpush1.bf16.msra.mxu0 0
    %2570 = vmatprep.subr.bf16.mxu0 0
    %2571 = vmatpush1.bf16.msra.mxu0 0
    %2572 = vmatprep.subr.bf16.mxu0 0
    %2573 = vmatpush1.bf16.msra.mxu0 0
    %2574 = vmatprep.subr.bf16.mxu0 0
    %2575 = vmatpush1.bf16.msra.mxu0 0
    %2576 = vmatprep.subr.bf16.mxu0 0
    %2577 = vmatpush1.bf16.msra.mxu0 0
    %2578 = vmatprep.subr.bf16.mxu0 0
    %2579 = vmatpush1.bf16.msra.mxu0 0
    %2580 = vmatprep.mubr.bf16.mxu0 0
    %2581 = vmatmul.mubr.bf16.gmra.mrb[0].mxu0 %v2543
    %v2582 = vpop.f32.mrb[0].mxu0
    %v2583 = vadd.f32 0.0, %v2582
    %v2584 = vpop.f32.mrb[0].mxu0
    %v2585 = vpop.f32.mrb[0].mxu0
    %v2586 = vpop.f32.mrb[0].mxu0
    %2587 = vdwg.mxu0
    %2588 = vrot.lane.b32.xlu0 %v406, 64
    %v2589 = vpop.permute.xlu0 %2588
    %v2591 = vsel %vm445, %v2367, 0
    %v2594 = vsel %vm2400, %v2589, 0
    %2596 = vmatprep.subr.bf16.mxu0 0
    %2597 = vmatpush1.bf16.msra.mxu0 %v2594
    %2598 = vmatprep.subr.bf16.mxu0 0
    %2599 = vmatpush1.bf16.msra.mxu0 0
    %2600 = vmatprep.subr.bf16.mxu0 0
    %2601 = vmatpush1.bf16.msra.mxu0 0
    %2602 = vmatprep.subr.bf16.mxu0 0
    %2603 = vmatpush1.bf16.msra.mxu0 0
    %2604 = vmatprep.subr.bf16.mxu0 0
    %2605 = vmatpush1.bf16.msra.mxu0 0
    %2606 = vmatprep.subr.bf16.mxu0 0
    %2607 = vmatpush1.bf16.msra.mxu0 0
    %2608 = vmatprep.subr.bf16.mxu0 0
    %2609 = vmatpush1.bf16.msra.mxu0 0
    %2610 = vmatprep.subr.bf16.mxu0 0
    %2611 = vmatpush1.bf16.msra.mxu0 0
    %2612 = vmatprep.subr.bf16.mxu0 0
    %2613 = vmatpush1.bf16.msra.mxu0 0
    %2614 = vmatprep.subr.bf16.mxu0 0
    %2615 = vmatpush1.bf16.msra.mxu0 0
    %2616 = vmatprep.subr.bf16.mxu0 0
    %2617 = vmatpush1.bf16.msra.mxu0 0
    %2618 = vmatprep.subr.bf16.mxu0 0
    %2619 = vmatpush1.bf16.msra.mxu0 0
    %2620 = vmatprep.subr.bf16.mxu0 0
    %2621 = vmatpush1.bf16.msra.mxu0 0
    %2622 = vmatprep.subr.bf16.mxu0 0
    %2623 = vmatpush1.bf16.msra.mxu0 0
    %2624 = vmatprep.subr.bf16.mxu0 0
    %2625 = vmatpush1.bf16.msra.mxu0 0
    %2626 = vmatprep.subr.bf16.mxu0 0
    %2627 = vmatpush1.bf16.msra.mxu0 0
    %2628 = vmatprep.mubr.bf16.mxu0 0
    %2629 = vmatmul.mubr.bf16.gmra.mrb[0].mxu0 %v2591
    %v2630 = vpop.f32.mrb[0].mxu0
    %v2631 = vadd.f32 0.0, %v2630
    %v2632 = vpop.f32.mrb[0].mxu0
    %v2633 = vpop.f32.mrb[0].mxu0
    %v2634 = vpop.f32.mrb[0].mxu0
    %2635 = vdwg.mxu0
    %2636 = vrot.lane.b32.xlu0 %v407, 64
    %v2637 = vpop.permute.xlu0 %2636
    %v2639 = vsel %vm445, %v2368, 0
    %v2642 = vsel %vm2400, %v2637, 0
    %2644 = vmatprep.subr.bf16.mxu0 0
    %2645 = vmatpush1.bf16.msra.mxu0 %v2642
    %2646 = vmatprep.subr.bf16.mxu0 0
    %2647 = vmatpush1.bf16.msra.mxu0 0
    %2648 = vmatprep.subr.bf16.mxu0 0
    %2649 = vmatpush1.bf16.msra.mxu0 0
    %2650 = vmatprep.subr.bf16.mxu0 0
    %2651 = vmatpush1.bf16.msra.mxu0 0
    %2652 = vmatprep.subr.bf16.mxu0 0
    %2653 = vmatpush1.bf16.msra.mxu0 0
    %2654 = vmatprep.subr.bf16.mxu0 0
    %2655 = vmatpush1.bf16.msra.mxu0 0
    %2656 = vmatprep.subr.bf16.mxu0 0
    %2657 = vmatpush1.bf16.msra.mxu0 0
    %2658 = vmatprep.subr.bf16.mxu0 0
    %2659 = vmatpush1.bf16.msra.mxu0 0
    %2660 = vmatprep.subr.bf16.mxu0 0
    %2661 = vmatpush1.bf16.msra.mxu0 0
    %2662 = vmatprep.subr.bf16.mxu0 0
    %2663 = vmatpush1.bf16.msra.mxu0 0
    %2664 = vmatprep.subr.bf16.mxu0 0
    %2665 = vmatpush1.bf16.msra.mxu0 0
    %2666 = vmatprep.subr.bf16.mxu0 0
    %2667 = vmatpush1.bf16.msra.mxu0 0
    %2668 = vmatprep.subr.bf16.mxu0 0
    %2669 = vmatpush1.bf16.msra.mxu0 0
    %2670 = vmatprep.subr.bf16.mxu0 0
    %2671 = vmatpush1.bf16.msra.mxu0 0
    %2672 = vmatprep.subr.bf16.mxu0 0
    %2673 = vmatpush1.bf16.msra.mxu0 0
    %2674 = vmatprep.subr.bf16.mxu0 0
    %2675 = vmatpush1.bf16.msra.mxu0 0
    %2676 = vmatprep.mubr.bf16.mxu0 0
    %2677 = vmatmul.mubr.bf16.gmra.mrb[0].mxu0 %v2639
    %v2678 = vpop.f32.mrb[0].mxu0
    %v2679 = vadd.f32 0.0, %v2678
    %v2680 = vpop.f32.mrb[0].mxu0
    %v2681 = vpop.f32.mrb[0].mxu0
    %v2682 = vpop.f32.mrb[0].mxu0
    %2683 = vdwg.mxu0
    %2684 = vrot.lane.b32.xlu0 %v408, 64
    %v2685 = vpop.permute.xlu0 %2684
    %v2687 = vsel %vm445, %v2369, 0
    %v2690 = vsel %vm2400, %v2685, 0
    %2692 = vmatprep.subr.bf16.mxu0 0
    %2693 = vmatpush1.bf16.msra.mxu0 %v2690
    %2694 = vmatprep.subr.bf16.mxu0 0
    %2695 = vmatpush1.bf16.msra.mxu0 0
    %2696 = vmatprep.subr.bf16.mxu0 0
    %2697 = vmatpush1.bf16.msra.mxu0 0
    %2698 = vmatprep.subr.bf16.mxu0 0
    %2699 = vmatpush1.bf16.msra.mxu0 0
    %2700 = vmatprep.subr.bf16.mxu0 0
    %2701 = vmatpush1.bf16.msra.mxu0 0
    %2702 = vmatprep.subr.bf16.mxu0 0
    %2703 = vmatpush1.bf16.msra.mxu0 0
    %2704 = vmatprep.subr.bf16.mxu0 0
    %2705 = vmatpush1.bf16.msra.mxu0 0
    %2706 = vmatprep.subr.bf16.mxu0 0
    %2707 = vmatpush1.bf16.msra.mxu0 0
    %2708 = vmatprep.subr.bf16.mxu0 0
    %2709 = vmatpush1.bf16.msra.mxu0 0
    %2710 = vmatprep.subr.bf16.mxu0 0
    %2711 = vmatpush1.bf16.msra.mxu0 0
    %2712 = vmatprep.subr.bf16.mxu0 0
    %2713 = vmatpush1.bf16.msra.mxu0 0
    %2714 = vmatprep.subr.bf16.mxu0 0
    %2715 = vmatpush1.bf16.msra.mxu0 0
    %2716 = vmatprep.subr.bf16.mxu0 0
    %2717 = vmatpush1.bf16.msra.mxu0 0
    %2718 = vmatprep.subr.bf16.mxu0 0
    %2719 = vmatpush1.bf16.msra.mxu0 0
    %2720 = vmatprep.subr.bf16.mxu0 0
    %2721 = vmatpush1.bf16.msra.mxu0 0
    %2722 = vmatprep.subr.bf16.mxu0 0
    %2723 = vmatpush1.bf16.msra.mxu0 0
    %2724 = vmatprep.mubr.bf16.mxu0 0
    %2725 = vmatmul.mubr.bf16.gmra.mrb[0].mxu0 %v2687
    %v2726 = vpop.f32.mrb[0].mxu0
    %v2727 = vadd.f32 0.0, %v2726
    %v2728 = vpop.f32.mrb[0].mxu0
    %v2729 = vpop.f32.mrb[0].mxu0
    %v2730 = vpop.f32.mrb[0].mxu0
    %2731 = vdwg.mxu0
    %2732 = vrot.lane.b32.xlu0 %v409, 64
    %v2733 = vpop.permute.xlu0 %2732
    %v2735 = vsel %vm445, %v2370, 0
    %v2738 = vsel %vm2400, %v2733, 0
    %2740 = vmatprep.subr.bf16.mxu0 0
    %2741 = vmatpush1.bf16.msra.mxu0 %v2738
    %2742 = vmatprep.subr.bf16.mxu0 0
    %2743 = vmatpush1.bf16.msra.mxu0 0
    %2744 = vmatprep.subr.bf16.mxu0 0
    %2745 = vmatpush1.bf16.msra.mxu0 0
    %2746 = vmatprep.subr.bf16.mxu0 0
    %2747 = vmatpush1.bf16.msra.mxu0 0
    %2748 = vmatprep.subr.bf16.mxu0 0
    %2749 = vmatpush1.bf16.msra.mxu0 0
    %2750 = vmatprep.subr.bf16.mxu0 0
    %2751 = vmatpush1.bf16.msra.mxu0 0
    %2752 = vmatprep.subr.bf16.mxu0 0
    %2753 = vmatpush1.bf16.msra.mxu0 0
    %2754 = vmatprep.subr.bf16.mxu0 0
    %2755 = vmatpush1.bf16.msra.mxu0 0
    %2756 = vmatprep.subr.bf16.mxu0 0
    %2757 = vmatpush1.bf16.msra.mxu0 0
    %2758 = vmatprep.subr.bf16.mxu0 0
    %2759 = vmatpush1.bf16.msra.mxu0 0
    %2760 = vmatprep.subr.bf16.mxu0 0
    %2761 = vmatpush1.bf16.msra.mxu0 0
    %2762 = vmatprep.subr.bf16.mxu0 0
    %2763 = vmatpush1.bf16.msra.mxu0 0
    %2764 = vmatprep.subr.bf16.mxu0 0
    %2765 = vmatpush1.bf16.msra.mxu0 0
    %2766 = vmatprep.subr.bf16.mxu0 0
    %2767 = vmatpush1.bf16.msra.mxu0 0
    %2768 = vmatprep.subr.bf16.mxu0 0
    %2769 = vmatpush1.bf16.msra.mxu0 0
    %2770 = vmatprep.subr.bf16.mxu0 0
    %2771 = vmatpush1.bf16.msra.mxu0 0
    %2772 = vmatprep.mubr.bf16.mxu0 0
    %2773 = vmatmul.mubr.bf16.gmra.mrb[0].mxu0 %v2735
    %v2774 = vpop.f32.mrb[0].mxu0
    %v2775 = vadd.f32 0.0, %v2774
    %v2776 = vpop.f32.mrb[0].mxu0
    %v2777 = vpop.f32.mrb[0].mxu0
    %v2778 = vpop.f32.mrb[0].mxu0
    %2779 = vdwg.mxu0
    %2780 = vrot.lane.b32.xlu0 %v410, 64
    %v2781 = vpop.permute.xlu0 %2780
    %v2783 = vsel %vm445, %v2371, 0
    %v2786 = vsel %vm2400, %v2781, 0
    %2788 = vmatprep.subr.bf16.mxu0 0
    %2789 = vmatpush1.bf16.msra.mxu0 %v2786
    %2790 = vmatprep.subr.bf16.mxu0 0
    %2791 = vmatpush1.bf16.msra.mxu0 0
    %2792 = vmatprep.subr.bf16.mxu0 0
    %2793 = vmatpush1.bf16.msra.mxu0 0
    %2794 = vmatprep.subr.bf16.mxu0 0
    %2795 = vmatpush1.bf16.msra.mxu0 0
    %2796 = vmatprep.subr.bf16.mxu0 0
    %2797 = vmatpush1.bf16.msra.mxu0 0
    %2798 = vmatprep.subr.bf16.mxu0 0
    %2799 = vmatpush1.bf16.msra.mxu0 0
    %2800 = vmatprep.subr.bf16.mxu0 0
    %2801 = vmatpush1.bf16.msra.mxu0 0
    %2802 = vmatprep.subr.bf16.mxu0 0
    %2803 = vmatpush1.bf16.msra.mxu0 0
    %2804 = vmatprep.subr.bf16.mxu0 0
    %2805 = vmatpush1.bf16.msra.mxu0 0
    %2806 = vmatprep.subr.bf16.mxu0 0
    %2807 = vmatpush1.bf16.msra.mxu0 0
    %2808 = vmatprep.subr.bf16.mxu0 0
    %2809 = vmatpush1.bf16.msra.mxu0 0
    %2810 = vmatprep.subr.bf16.mxu0 0
    %2811 = vmatpush1.bf16.msra.mxu0 0
    %2812 = vmatprep.subr.bf16.mxu0 0
    %2813 = vmatpush1.bf16.msra.mxu0 0
    %2814 = vmatprep.subr.bf16.mxu0 0
    %2815 = vmatpush1.bf16.msra.mxu0 0
    %2816 = vmatprep.subr.bf16.mxu0 0
    %2817 = vmatpush1.bf16.msra.mxu0 0
    %2818 = vmatprep.subr.bf16.mxu0 0
    %2819 = vmatpush1.bf16.msra.mxu0 0
    %2820 = vmatprep.mubr.bf16.mxu0 0
    %2821 = vmatmul.mubr.bf16.gmra.mrb[0].mxu0 %v2783
    %v2822 = vpop.f32.mrb[0].mxu0
    %v2823 = vadd.f32 0.0, %v2822
    %v2824 = vpop.f32.mrb[0].mxu0
    %v2825 = vpop.f32.mrb[0].mxu0
    %v2826 = vpop.f32.mrb[0].mxu0
    %2827 = vdwg.mxu0
    %2828 = vrot.lane.b32.xlu0 %v411, 64
    %v2829 = vpop.permute.xlu0 %2828
    %v2831 = vsel %vm445, %v2372, 0
    %v2834 = vsel %vm2400, %v2829, 0
    %2836 = vmatprep.subr.bf16.mxu0 0
    %2837 = vmatpush1.bf16.msra.mxu0 %v2834
    %2838 = vmatprep.subr.bf16.mxu0 0
    %2839 = vmatpush1.bf16.msra.mxu0 0
    %2840 = vmatprep.subr.bf16.mxu0 0
    %2841 = vmatpush1.bf16.msra.mxu0 0
    %2842 = vmatprep.subr.bf16.mxu0 0
    %2843 = vmatpush1.bf16.msra.mxu0 0
    %2844 = vmatprep.subr.bf16.mxu0 0
    %2845 = vmatpush1.bf16.msra.mxu0 0
    %2846 = vmatprep.subr.bf16.mxu0 0
    %2847 = vmatpush1.bf16.msra.mxu0 0
    %2848 = vmatprep.subr.bf16.mxu0 0
    %2849 = vmatpush1.bf16.msra.mxu0 0
    %2850 = vmatprep.subr.bf16.mxu0 0
    %2851 = vmatpush1.bf16.msra.mxu0 0
    %2852 = vmatprep.subr.bf16.mxu0 0
    %2853 = vmatpush1.bf16.msra.mxu0 0
    %2854 = vmatprep.subr.bf16.mxu0 0
    %2855 = vmatpush1.bf16.msra.mxu0 0
    %2856 = vmatprep.subr.bf16.mxu0 0
    %2857 = vmatpush1.bf16.msra.mxu0 0
    %2858 = vmatprep.subr.bf16.mxu0 0
    %2859 = vmatpush1.bf16.msra.mxu0 0
    %2860 = vmatprep.subr.bf16.mxu0 0
    %2861 = vmatpush1.bf16.msra.mxu0 0
    %2862 = vmatprep.subr.bf16.mxu0 0
    %2863 = vmatpush1.bf16.msra.mxu0 0
    %2864 = vmatprep.subr.bf16.mxu0 0
    %2865 = vmatpush1.bf16.msra.mxu0 0
    %2866 = vmatprep.subr.bf16.mxu0 0
    %2867 = vmatpush1.bf16.msra.mxu0 0
    %2868 = vmatprep.mubr.bf16.mxu0 0
    %2869 = vmatmul.mubr.bf16.gmra.mrb[0].mxu0 %v2831
    %v2870 = vpop.f32.mrb[0].mxu0
    %v2871 = vadd.f32 0.0, %v2870
    %v2872 = vpop.f32.mrb[0].mxu0
    %v2873 = vpop.f32.mrb[0].mxu0
    %v2874 = vpop.f32.mrb[0].mxu0
    %2875 = vdwg.mxu0
    %2876 = vrot.lane.b32.xlu0 %v412, 64
    %v2877 = vpop.permute.xlu0 %2876
    %v2879 = vsel %vm445, %v2373, 0
    %v2882 = vsel %vm2400, %v2877, 0
    %2884 = vmatprep.subr.bf16.mxu0 0
    %2885 = vmatpush1.bf16.msra.mxu0 %v2882
    %2886 = vmatprep.subr.bf16.mxu0 0
    %2887 = vmatpush1.bf16.msra.mxu0 0
    %2888 = vmatprep.subr.bf16.mxu0 0
    %2889 = vmatpush1.bf16.msra.mxu0 0
    %2890 = vmatprep.subr.bf16.mxu0 0
    %2891 = vmatpush1.bf16.msra.mxu0 0
    %2892 = vmatprep.subr.bf16.mxu0 0
    %2893 = vmatpush1.bf16.msra.mxu0 0
    %2894 = vmatprep.subr.bf16.mxu0 0
    %2895 = vmatpush1.bf16.msra.mxu0 0
    %2896 = vmatprep.subr.bf16.mxu0 0
    %2897 = vmatpush1.bf16.msra.mxu0 0
    %2898 = vmatprep.subr.bf16.mxu0 0
    %2899 = vmatpush1.bf16.msra.mxu0 0
    %2900 = vmatprep.subr.bf16.mxu0 0
    %2901 = vmatpush1.bf16.msra.mxu0 0
    %2902 = vmatprep.subr.bf16.mxu0 0
    %2903 = vmatpush1.bf16.msra.mxu0 0
    %2904 = vmatprep.subr.bf16.mxu0 0
    %2905 = vmatpush1.bf16.msra.mxu0 0
    %2906 = vmatprep.subr.bf16.mxu0 0
    %2907 = vmatpush1.bf16.msra.mxu0 0
    %2908 = vmatprep.subr.bf16.mxu0 0
    %2909 = vmatpush1.bf16.msra.mxu0 0
    %2910 = vmatprep.subr.bf16.mxu0 0
    %2911 = vmatpush1.bf16.msra.mxu0 0
    %2912 = vmatprep.subr.bf16.mxu0 0
    %2913 = vmatpush1.bf16.msra.mxu0 0
    %2914 = vmatprep.subr.bf16.mxu0 0
    %2915 = vmatpush1.bf16.msra.mxu0 0
    %2916 = vmatprep.mubr.bf16.mxu0 0
    %2917 = vmatmul.mubr.bf16.gmra.mrb[0].mxu0 %v2879
    %v2918 = vpop.f32.mrb[0].mxu0
    %v2919 = vadd.f32 0.0, %v2918
    %v2920 = vpop.f32.mrb[0].mxu0
    %v2921 = vpop.f32.mrb[0].mxu0
    %v2922 = vpop.f32.mrb[0].mxu0
    %2923 = vdwg.mxu0
    %2924 = vrot.lane.b32.xlu0 %v413, 64
    %v2925 = vpop.permute.xlu0 %2924
    %v2927 = vsel %vm445, %v2374, 0
    %v2930 = vsel %vm2400, %v2925, 0
    %2932 = vmatprep.subr.bf16.mxu0 0
    %2933 = vmatpush1.bf16.msra.mxu0 %v2930
    %2934 = vmatprep.subr.bf16.mxu0 0
    %2935 = vmatpush1.bf16.msra.mxu0 0
    %2936 = vmatprep.subr.bf16.mxu0 0
    %2937 = vmatpush1.bf16.msra.mxu0 0
    %2938 = vmatprep.subr.bf16.mxu0 0
    %2939 = vmatpush1.bf16.msra.mxu0 0
    %2940 = vmatprep.subr.bf16.mxu0 0
    %2941 = vmatpush1.bf16.msra.mxu0 0
    %2942 = vmatprep.subr.bf16.mxu0 0
    %2943 = vmatpush1.bf16.msra.mxu0 0
    %2944 = vmatprep.subr.bf16.mxu0 0
    %2945 = vmatpush1.bf16.msra.mxu0 0
    %2946 = vmatprep.subr.bf16.mxu0 0
    %2947 = vmatpush1.bf16.msra.mxu0 0
    %2948 = vmatprep.subr.bf16.mxu0 0
    %2949 = vmatpush1.bf16.msra.mxu0 0
    %2950 = vmatprep.subr.bf16.mxu0 0
    %2951 = vmatpush1.bf16.msra.mxu0 0
    %2952 = vmatprep.subr.bf16.mxu0 0
    %2953 = vmatpush1.bf16.msra.mxu0 0
    %2954 = vmatprep.subr.bf16.mxu0 0
    %2955 = vmatpush1.bf16.msra.mxu0 0
    %2956 = vmatprep.subr.bf16.mxu0 0
    %2957 = vmatpush1.bf16.msra.mxu0 0
    %2958 = vmatprep.subr.bf16.mxu0 0
    %2959 = vmatpush1.bf16.msra.mxu0 0
    %2960 = vmatprep.subr.bf16.mxu0 0
    %2961 = vmatpush1.bf16.msra.mxu0 0
    %2962 = vmatprep.subr.bf16.mxu0 0
    %2963 = vmatpush1.bf16.msra.mxu0 0
    %2964 = vmatprep.mubr.bf16.mxu0 0
    %2965 = vmatmul.mubr.bf16.gmra.mrb[0].mxu0 %v2927
    %v2966 = vpop.f32.mrb[0].mxu0
    %v2967 = vadd.f32 0.0, %v2966
    %v2968 = vpop.f32.mrb[0].mxu0
    %v2969 = vpop.f32.mrb[0].mxu0
    %v2970 = vpop.f32.mrb[0].mxu0
    %2971 = vdwg.mxu0
    %2972 = vrot.lane.b32.xlu0 %v414, 64
    %v2973 = vpop.permute.xlu0 %2972
    %v2975 = vsel %vm445, %v2375, 0
    %v2978 = vsel %vm2400, %v2973, 0
    %2980 = vmatprep.subr.bf16.mxu0 0
    %2981 = vmatpush1.bf16.msra.mxu0 %v2978
    %2982 = vmatprep.subr.bf16.mxu0 0
    %2983 = vmatpush1.bf16.msra.mxu0 0
    %2984 = vmatprep.subr.bf16.mxu0 0
    %2985 = vmatpush1.bf16.msra.mxu0 0
    %2986 = vmatprep.subr.bf16.mxu0 0
    %2987 = vmatpush1.bf16.msra.mxu0 0
    %2988 = vmatprep.subr.bf16.mxu0 0
    %2989 = vmatpush1.bf16.msra.mxu0 0
    %2990 = vmatprep.subr.bf16.mxu0 0
    %2991 = vmatpush1.bf16.msra.mxu0 0
    %2992 = vmatprep.subr.bf16.mxu0 0
    %2993 = vmatpush1.bf16.msra.mxu0 0
    %2994 = vmatprep.subr.bf16.mxu0 0
    %2995 = vmatpush1.bf16.msra.mxu0 0
    %2996 = vmatprep.subr.bf16.mxu0 0
    %2997 = vmatpush1.bf16.msra.mxu0 0
    %2998 = vmatprep.subr.bf16.mxu0 0
    %2999 = vmatpush1.bf16.msra.mxu0 0
    %3000 = vmatprep.subr.bf16.mxu0 0
    %3001 = vmatpush1.bf16.msra.mxu0 0
    %3002 = vmatprep.subr.bf16.mxu0 0
    %3003 = vmatpush1.bf16.msra.mxu0 0
    %3004 = vmatprep.subr.bf16.mxu0 0
    %3005 = vmatpush1.bf16.msra.mxu0 0
    %3006 = vmatprep.subr.bf16.mxu0 0
    %3007 = vmatpush1.bf16.msra.mxu0 0
    %3008 = vmatprep.subr.bf16.mxu0 0
    %3009 = vmatpush1.bf16.msra.mxu0 0
    %3010 = vmatprep.subr.bf16.mxu0 0
    %3011 = vmatpush1.bf16.msra.mxu0 0
    %3012 = vmatprep.mubr.bf16.mxu0 0
    %3013 = vmatmul.mubr.bf16.gmra.mrb[0].mxu0 %v2975
    %v3014 = vpop.f32.mrb[0].mxu0
    %v3015 = vadd.f32 0.0, %v3014
    %v3016 = vpop.f32.mrb[0].mxu0
    %v3017 = vpop.f32.mrb[0].mxu0
    %v3018 = vpop.f32.mrb[0].mxu0
    %3019 = vdwg.mxu0
    %3020 = vrot.lane.b32.xlu0 %v415, 64
    %v3021 = vpop.permute.xlu0 %3020
    %v3023 = vsel %vm445, %v2376, 0
    %v3026 = vsel %vm2400, %v3021, 0
    %3028 = vmatprep.subr.bf16.mxu0 0
    %3029 = vmatpush1.bf16.msra.mxu0 %v3026
    %3030 = vmatprep.subr.bf16.mxu0 0
    %3031 = vmatpush1.bf16.msra.mxu0 0
    %3032 = vmatprep.subr.bf16.mxu0 0
    %3033 = vmatpush1.bf16.msra.mxu0 0
    %3034 = vmatprep.subr.bf16.mxu0 0
    %3035 = vmatpush1.bf16.msra.mxu0 0
    %3036 = vmatprep.subr.bf16.mxu0 0
    %3037 = vmatpush1.bf16.msra.mxu0 0
    %3038 = vmatprep.subr.bf16.mxu0 0
    %3039 = vmatpush1.bf16.msra.mxu0 0
    %3040 = vmatprep.subr.bf16.mxu0 0
    %3041 = vmatpush1.bf16.msra.mxu0 0
    %3042 = vmatprep.subr.bf16.mxu0 0
    %3043 = vmatpush1.bf16.msra.mxu0 0
    %3044 = vmatprep.subr.bf16.mxu0 0
    %3045 = vmatpush1.bf16.msra.mxu0 0
    %3046 = vmatprep.subr.bf16.mxu0 0
    %3047 = vmatpush1.bf16.msra.mxu0 0
    %3048 = vmatprep.subr.bf16.mxu0 0
    %3049 = vmatpush1.bf16.msra.mxu0 0
    %3050 = vmatprep.subr.bf16.mxu0 0
    %3051 = vmatpush1.bf16.msra.mxu0 0
    %3052 = vmatprep.subr.bf16.mxu0 0
    %3053 = vmatpush1.bf16.msra.mxu0 0
    %3054 = vmatprep.subr.bf16.mxu0 0
    %3055 = vmatpush1.bf16.msra.mxu0 0
    %3056 = vmatprep.subr.bf16.mxu0 0
    %3057 = vmatpush1.bf16.msra.mxu0 0
    %3058 = vmatprep.subr.bf16.mxu0 0
    %3059 = vmatpush1.bf16.msra.mxu0 0
    %3060 = vmatprep.mubr.bf16.mxu0 0
    %3061 = vmatmul.mubr.bf16.gmra.mrb[0].mxu0 %v3023
    %v3062 = vpop.f32.mrb[0].mxu0
    %v3063 = vadd.f32 0.0, %v3062
    %v3064 = vpop.f32.mrb[0].mxu0
    %v3065 = vpop.f32.mrb[0].mxu0
    %v3066 = vpop.f32.mrb[0].mxu0
    %3067 = vdwg.mxu0
    %3068 = vrot.lane.b32.xlu0 %v416, 64
    %v3069 = vpop.permute.xlu0 %3068
    %v3071 = vsel %vm445, %v2377, 0
    %v3074 = vsel %vm2400, %v3069, 0
    %3076 = vmatprep.subr.bf16.mxu0 0
    %3077 = vmatpush1.bf16.msra.mxu0 %v3074
    %3078 = vmatprep.subr.bf16.mxu0 0
    %3079 = vmatpush1.bf16.msra.mxu0 0
    %3080 = vmatprep.subr.bf16.mxu0 0
    %3081 = vmatpush1.bf16.msra.mxu0 0
    %3082 = vmatprep.subr.bf16.mxu0 0
    %3083 = vmatpush1.bf16.msra.mxu0 0
    %3084 = vmatprep.subr.bf16.mxu0 0
    %3085 = vmatpush1.bf16.msra.mxu0 0
    %3086 = vmatprep.subr.bf16.mxu0 0
    %3087 = vmatpush1.bf16.msra.mxu0 0
    %3088 = vmatprep.subr.bf16.mxu0 0
    %3089 = vmatpush1.bf16.msra.mxu0 0
    %3090 = vmatprep.subr.bf16.mxu0 0
    %3091 = vmatpush1.bf16.msra.mxu0 0
    %3092 = vmatprep.subr.bf16.mxu0 0
    %3093 = vmatpush1.bf16.msra.mxu0 0
    %3094 = vmatprep.subr.bf16.mxu0 0
    %3095 = vmatpush1.bf16.msra.mxu0 0
    %3096 = vmatprep.subr.bf16.mxu0 0
    %3097 = vmatpush1.bf16.msra.mxu0 0
    %3098 = vmatprep.subr.bf16.mxu0 0
    %3099 = vmatpush1.bf16.msra.mxu0 0
    %3100 = vmatprep.subr.bf16.mxu0 0
    %3101 = vmatpush1.bf16.msra.mxu0 0
    %3102 = vmatprep.subr.bf16.mxu0 0
    %3103 = vmatpush1.bf16.msra.mxu0 0
    %3104 = vmatprep.subr.bf16.mxu0 0
    %3105 = vmatpush1.bf16.msra.mxu0 0
    %3106 = vmatprep.subr.bf16.mxu0 0
    %3107 = vmatpush1.bf16.msra.mxu0 0
    %3108 = vmatprep.mubr.bf16.mxu0 0
    %3109 = vmatmul.mubr.bf16.gmra.mrb[0].mxu0 %v3071
    %v3110 = vpop.f32.mrb[0].mxu0
    %v3111 = vadd.f32 0.0, %v3110
    %v3112 = vpop.f32.mrb[0].mxu0
    %v3113 = vpop.f32.mrb[0].mxu0
    %v3114 = vpop.f32.mrb[0].mxu0
    %3115 = vdwg.mxu0
    %3116 = vrot.lane.b32.xlu0 %v417, 64
    %v3117 = vpop.permute.xlu0 %3116
    %v3119 = vsel %vm445, %v2378, 0
    %v3122 = vsel %vm2400, %v3117, 0
    %3124 = vmatprep.subr.bf16.mxu0 0
    %3125 = vmatpush1.bf16.msra.mxu0 %v3122
    %3126 = vmatprep.subr.bf16.mxu0 0
    %3127 = vmatpush1.bf16.msra.mxu0 0
    %3128 = vmatprep.subr.bf16.mxu0 0
    %3129 = vmatpush1.bf16.msra.mxu0 0
    %3130 = vmatprep.subr.bf16.mxu0 0
    %3131 = vmatpush1.bf16.msra.mxu0 0
    %3132 = vmatprep.subr.bf16.mxu0 0
    %3133 = vmatpush1.bf16.msra.mxu0 0
    %3134 = vmatprep.subr.bf16.mxu0 0
    %3135 = vmatpush1.bf16.msra.mxu0 0
    %3136 = vmatprep.subr.bf16.mxu0 0
    %3137 = vmatpush1.bf16.msra.mxu0 0
    %3138 = vmatprep.subr.bf16.mxu0 0
    %3139 = vmatpush1.bf16.msra.mxu0 0
    %3140 = vmatprep.subr.bf16.mxu0 0
    %3141 = vmatpush1.bf16.msra.mxu0 0
    %3142 = vmatprep.subr.bf16.mxu0 0
    %3143 = vmatpush1.bf16.msra.mxu0 0
    %3144 = vmatprep.subr.bf16.mxu0 0
    %3145 = vmatpush1.bf16.msra.mxu0 0
    %3146 = vmatprep.subr.bf16.mxu0 0
    %3147 = vmatpush1.bf16.msra.mxu0 0
    %3148 = vmatprep.subr.bf16.mxu0 0
    %3149 = vmatpush1.bf16.msra.mxu0 0
    %3150 = vmatprep.subr.bf16.mxu0 0
    %3151 = vmatpush1.bf16.msra.mxu0 0
    %3152 = vmatprep.subr.bf16.mxu0 0
    %3153 = vmatpush1.bf16.msra.mxu0 0
    %3154 = vmatprep.subr.bf16.mxu0 0
    %3155 = vmatpush1.bf16.msra.mxu0 0
    %3156 = vmatprep.mubr.bf16.mxu0 0
    %3157 = vmatmul.mubr.bf16.gmra.mrb[0].mxu0 %v3119
    %v3158 = vpop.f32.mrb[0].mxu0
    %v3159 = vadd.f32 0.0, %v3158
    %v3160 = vpop.f32.mrb[0].mxu0
    %v3161 = vpop.f32.mrb[0].mxu0
    %v3162 = vpop.f32.mrb[0].mxu0
    %3163 = vdwg.mxu0
    %3164 = vrot.lane.b32.xlu0 %v418, 64
    %v3165 = vpop.permute.xlu0 %3164
    %v3167 = vsel %vm445, %v2379, 0
    %v3170 = vsel %vm2400, %v3165, 0
    %3172 = vmatprep.subr.bf16.mxu0 0
    %3173 = vmatpush1.bf16.msra.mxu0 %v3170
    %3174 = vmatprep.subr.bf16.mxu0 0
    %3175 = vmatpush1.bf16.msra.mxu0 0
    %3176 = vmatprep.subr.bf16.mxu0 0
    %3177 = vmatpush1.bf16.msra.mxu0 0
    %3178 = vmatprep.subr.bf16.mxu0 0
    %3179 = vmatpush1.bf16.msra.mxu0 0
    %3180 = vmatprep.subr.bf16.mxu0 0
    %3181 = vmatpush1.bf16.msra.mxu0 0
    %3182 = vmatprep.subr.bf16.mxu0 0
    %3183 = vmatpush1.bf16.msra.mxu0 0
    %3184 = vmatprep.subr.bf16.mxu0 0
    %3185 = vmatpush1.bf16.msra.mxu0 0
    %3186 = vmatprep.subr.bf16.mxu0 0
    %3187 = vmatpush1.bf16.msra.mxu0 0
    %3188 = vmatprep.subr.bf16.mxu0 0
    %3189 = vmatpush1.bf16.msra.mxu0 0
    %3190 = vmatprep.subr.bf16.mxu0 0
    %3191 = vmatpush1.bf16.msra.mxu0 0
    %3192 = vmatprep.subr.bf16.mxu0 0
    %3193 = vmatpush1.bf16.msra.mxu0 0
    %3194 = vmatprep.subr.bf16.mxu0 0
    %3195 = vmatpush1.bf16.msra.mxu0 0
    %3196 = vmatprep.subr.bf16.mxu0 0
    %3197 = vmatpush1.bf16.msra.mxu0 0
    %3198 = vmatprep.subr.bf16.mxu0 0
    %3199 = vmatpush1.bf16.msra.mxu0 0
    %3200 = vmatprep.subr.bf16.mxu0 0
    %3201 = vmatpush1.bf16.msra.mxu0 0
    %3202 = vmatprep.subr.bf16.mxu0 0
    %3203 = vmatpush1.bf16.msra.mxu0 0
    %3204 = vmatprep.mubr.bf16.mxu0 0
    %3205 = vmatmul.mubr.bf16.gmra.mrb[0].mxu0 %v3167
    %v3206 = vpop.f32.mrb[0].mxu0
    %v3207 = vadd.f32 0.0, %v3206
    %v3208 = vpop.f32.mrb[0].mxu0
    %v3209 = vpop.f32.mrb[0].mxu0
    %v3210 = vpop.f32.mrb[0].mxu0
    %3211 = vdwg.mxu0
    %3212 = vrot.lane.b32.xlu0 %v419, 64
    %v3213 = vpop.permute.xlu0 %3212
    %v3215 = vsel %vm445, %v2380, 0
    %v3218 = vsel %vm2400, %v3213, 0
    %3220 = vmatprep.subr.bf16.mxu0 0
    %3221 = vmatpush1.bf16.msra.mxu0 %v3218
    %3222 = vmatprep.subr.bf16.mxu0 0
    %3223 = vmatpush1.bf16.msra.mxu0 0
    %3224 = vmatprep.subr.bf16.mxu0 0
    %3225 = vmatpush1.bf16.msra.mxu0 0
    %3226 = vmatprep.subr.bf16.mxu0 0
    %3227 = vmatpush1.bf16.msra.mxu0 0
    %3228 = vmatprep.subr.bf16.mxu0 0
    %3229 = vmatpush1.bf16.msra.mxu0 0
    %3230 = vmatprep.subr.bf16.mxu0 0
    %3231 = vmatpush1.bf16.msra.mxu0 0
    %3232 = vmatprep.subr.bf16.mxu0 0
    %3233 = vmatpush1.bf16.msra.mxu0 0
    %3234 = vmatprep.subr.bf16.mxu0 0
    %3235 = vmatpush1.bf16.msra.mxu0 0
    %3236 = vmatprep.subr.bf16.mxu0 0
    %3237 = vmatpush1.bf16.msra.mxu0 0
    %3238 = vmatprep.subr.bf16.mxu0 0
    %3239 = vmatpush1.bf16.msra.mxu0 0
    %3240 = vmatprep.subr.bf16.mxu0 0
    %3241 = vmatpush1.bf16.msra.mxu0 0
    %3242 = vmatprep.subr.bf16.mxu0 0
    %3243 = vmatpush1.bf16.msra.mxu0 0
    %3244 = vmatprep.subr.bf16.mxu0 0
    %3245 = vmatpush1.bf16.msra.mxu0 0
    %3246 = vmatprep.subr.bf16.mxu0 0
    %3247 = vmatpush1.bf16.msra.mxu0 0
    %3248 = vmatprep.subr.bf16.mxu0 0
    %3249 = vmatpush1.bf16.msra.mxu0 0
    %3250 = vmatprep.subr.bf16.mxu0 0
    %3251 = vmatpush1.bf16.msra.mxu0 0
    %3252 = vmatprep.mubr.bf16.mxu0 0
    %3253 = vmatmul.mubr.bf16.gmra.mrb[0].mxu0 %v3215
    %v3254 = vpop.f32.mrb[0].mxu0
    %v3255 = vadd.f32 0.0, %v3254
    %v3256 = vpop.f32.mrb[0].mxu0
    %v3257 = vpop.f32.mrb[0].mxu0
    %v3258 = vpop.f32.mrb[0].mxu0
    %3259 = vdwg.mxu0
    %3260 = vrot.lane.b32.xlu0 %v420, 64
    %v3261 = vpop.permute.xlu0 %3260
    %v3263 = vsel %vm445, %v2381, 0
    %v3266 = vsel %vm2400, %v3261, 0
    %3268 = vmatprep.subr.bf16.mxu0 0
    %3269 = vmatpush1.bf16.msra.mxu0 %v3266
    %3270 = vmatprep.subr.bf16.mxu0 0
    %3271 = vmatpush1.bf16.msra.mxu0 0
    %3272 = vmatprep.subr.bf16.mxu0 0
    %3273 = vmatpush1.bf16.msra.mxu0 0
    %3274 = vmatprep.subr.bf16.mxu0 0
    %3275 = vmatpush1.bf16.msra.mxu0 0
    %3276 = vmatprep.subr.bf16.mxu0 0
    %3277 = vmatpush1.bf16.msra.mxu0 0
    %3278 = vmatprep.subr.bf16.mxu0 0
    %3279 = vmatpush1.bf16.msra.mxu0 0
    %3280 = vmatprep.subr.bf16.mxu0 0
    %3281 = vmatpush1.bf16.msra.mxu0 0
    %3282 = vmatprep.subr.bf16.mxu0 0
    %3283 = vmatpush1.bf16.msra.mxu0 0
    %3284 = vmatprep.subr.bf16.mxu0 0
    %3285 = vmatpush1.bf16.msra.mxu0 0
    %3286 = vmatprep.subr.bf16.mxu0 0
    %3287 = vmatpush1.bf16.msra.mxu0 0
    %3288 = vmatprep.subr.bf16.mxu0 0
    %3289 = vmatpush1.bf16.msra.mxu0 0
    %3290 = vmatprep.subr.bf16.mxu0 0
    %3291 = vmatpush1.bf16.msra.mxu0 0
    %3292 = vmatprep.subr.bf16.mxu0 0
    %3293 = vmatpush1.bf16.msra.mxu0 0
    %3294 = vmatprep.subr.bf16.mxu0 0
    %3295 = vmatpush1.bf16.msra.mxu0 0
    %3296 = vmatprep.subr.bf16.mxu0 0
    %3297 = vmatpush1.bf16.msra.mxu0 0
    %3298 = vmatprep.subr.bf16.mxu0 0
    %3299 = vmatpush1.bf16.msra.mxu0 0
    %3300 = vmatprep.mubr.bf16.mxu0 0
    %3301 = vmatmul.mubr.bf16.gmra.mrb[0].mxu0 %v3263
    %v3302 = vpop.f32.mrb[0].mxu0
    %v3303 = vadd.f32 0.0, %v3302
    %v3304 = vpop.f32.mrb[0].mxu0
    %v3305 = vpop.f32.mrb[0].mxu0
    %v3306 = vpop.f32.mrb[0].mxu0
    %3307 = vdwg.mxu0
    %3308 = vrot.lane.b32.xlu0 %v421, 64
    %v3309 = vpop.permute.xlu0 %3308
    %v3311 = vsel %vm445, %v2382, 0
    %v3314 = vsel %vm2400, %v3309, 0
    %3316 = vmatprep.subr.bf16.mxu0 0
    %3317 = vmatpush1.bf16.msra.mxu0 %v3314
    %3318 = vmatprep.subr.bf16.mxu0 0
    %3319 = vmatpush1.bf16.msra.mxu0 0
    %3320 = vmatprep.subr.bf16.mxu0 0
    %3321 = vmatpush1.bf16.msra.mxu0 0
    %3322 = vmatprep.subr.bf16.mxu0 0
    %3323 = vmatpush1.bf16.msra.mxu0 0
    %3324 = vmatprep.subr.bf16.mxu0 0
    %3325 = vmatpush1.bf16.msra.mxu0 0
    %3326 = vmatprep.subr.bf16.mxu0 0
    %3327 = vmatpush1.bf16.msra.mxu0 0
    %3328 = vmatprep.subr.bf16.mxu0 0
    %3329 = vmatpush1.bf16.msra.mxu0 0
    %3330 = vmatprep.subr.bf16.mxu0 0
    %3331 = vmatpush1.bf16.msra.mxu0 0
    %3332 = vmatprep.subr.bf16.mxu0 0
    %3333 = vmatpush1.bf16.msra.mxu0 0
    %3334 = vmatprep.subr.bf16.mxu0 0
    %3335 = vmatpush1.bf16.msra.mxu0 0
    %3336 = vmatprep.subr.bf16.mxu0 0
    %3337 = vmatpush1.bf16.msra.mxu0 0
    %3338 = vmatprep.subr.bf16.mxu0 0
    %3339 = vmatpush1.bf16.msra.mxu0 0
    %3340 = vmatprep.subr.bf16.mxu0 0
    %3341 = vmatpush1.bf16.msra.mxu0 0
    %3342 = vmatprep.subr.bf16.mxu0 0
    %3343 = vmatpush1.bf16.msra.mxu0 0
    %3344 = vmatprep.subr.bf16.mxu0 0
    %3345 = vmatpush1.bf16.msra.mxu0 0
    %3346 = vmatprep.subr.bf16.mxu0 0
    %3347 = vmatpush1.bf16.msra.mxu0 0
    %3348 = vmatprep.mubr.bf16.mxu0 0
    %3349 = vmatmul.mubr.bf16.gmra.mrb[0].mxu0 %v3311
    %v3350 = vpop.f32.mrb[0].mxu0
    %v3351 = vadd.f32 0.0, %v3350
    %v3352 = vpop.f32.mrb[0].mxu0
    %v3353 = vpop.f32.mrb[0].mxu0
    %v3354 = vpop.f32.mrb[0].mxu0
    %3355 = vdwg.mxu0
    %3356 = vrot.lane.b32.xlu0 %v422, 64
    %v3357 = vpop.permute.xlu0 %3356
    %v3359 = vsel %vm445, %v2383, 0
    %v3362 = vsel %vm2400, %v3357, 0
    %3364 = vmatprep.subr.bf16.mxu0 0
    %3365 = vmatpush1.bf16.msra.mxu0 %v3362
    %3366 = vmatprep.subr.bf16.mxu0 0
    %3367 = vmatpush1.bf16.msra.mxu0 0
    %3368 = vmatprep.subr.bf16.mxu0 0
    %3369 = vmatpush1.bf16.msra.mxu0 0
    %3370 = vmatprep.subr.bf16.mxu0 0
    %3371 = vmatpush1.bf16.msra.mxu0 0
    %3372 = vmatprep.subr.bf16.mxu0 0
    %3373 = vmatpush1.bf16.msra.mxu0 0
    %3374 = vmatprep.subr.bf16.mxu0 0
    %3375 = vmatpush1.bf16.msra.mxu0 0
    %3376 = vmatprep.subr.bf16.mxu0 0
    %3377 = vmatpush1.bf16.msra.mxu0 0
    %3378 = vmatprep.subr.bf16.mxu0 0
    %3379 = vmatpush1.bf16.msra.mxu0 0
    %3380 = vmatprep.subr.bf16.mxu0 0
    %3381 = vmatpush1.bf16.msra.mxu0 0
    %3382 = vmatprep.subr.bf16.mxu0 0
    %3383 = vmatpush1.bf16.msra.mxu0 0
    %3384 = vmatprep.subr.bf16.mxu0 0
    %3385 = vmatpush1.bf16.msra.mxu0 0
    %3386 = vmatprep.subr.bf16.mxu0 0
    %3387 = vmatpush1.bf16.msra.mxu0 0
    %3388 = vmatprep.subr.bf16.mxu0 0
    %3389 = vmatpush1.bf16.msra.mxu0 0
    %3390 = vmatprep.subr.bf16.mxu0 0
    %3391 = vmatpush1.bf16.msra.mxu0 0
    %3392 = vmatprep.subr.bf16.mxu0 0
    %3393 = vmatpush1.bf16.msra.mxu0 0
    %3394 = vmatprep.subr.bf16.mxu0 0
    %3395 = vmatpush1.bf16.msra.mxu0 0
    %3396 = vmatprep.mubr.bf16.mxu0 0
    %3397 = vmatmul.mubr.bf16.gmra.mrb[0].mxu0 %v3359
    %v3398 = vpop.f32.mrb[0].mxu0
    %v3399 = vadd.f32 0.0, %v3398
    %v3400 = vpop.f32.mrb[0].mxu0
    %v3401 = vpop.f32.mrb[0].mxu0
    %v3402 = vpop.f32.mrb[0].mxu0
    %3403 = vdwg.mxu0
    %3404 = vrot.lane.b32.xlu0 %v423, 64
    %v3405 = vpop.permute.xlu0 %3404
    %v3407 = vsel %vm445, %v2384, 0
    %v3410 = vsel %vm2400, %v3405, 0
    %3412 = vmatprep.subr.bf16.mxu0 0
    %3413 = vmatpush1.bf16.msra.mxu0 %v3410
    %3414 = vmatprep.subr.bf16.mxu0 0
    %3415 = vmatpush1.bf16.msra.mxu0 0
    %3416 = vmatprep.subr.bf16.mxu0 0
    %3417 = vmatpush1.bf16.msra.mxu0 0
    %3418 = vmatprep.subr.bf16.mxu0 0
    %3419 = vmatpush1.bf16.msra.mxu0 0
    %3420 = vmatprep.subr.bf16.mxu0 0
    %3421 = vmatpush1.bf16.msra.mxu0 0
    %3422 = vmatprep.subr.bf16.mxu0 0
    %3423 = vmatpush1.bf16.msra.mxu0 0
    %3424 = vmatprep.subr.bf16.mxu0 0
    %3425 = vmatpush1.bf16.msra.mxu0 0
    %3426 = vmatprep.subr.bf16.mxu0 0
    %3427 = vmatpush1.bf16.msra.mxu0 0
    %3428 = vmatprep.subr.bf16.mxu0 0
    %3429 = vmatpush1.bf16.msra.mxu0 0
    %3430 = vmatprep.subr.bf16.mxu0 0
    %3431 = vmatpush1.bf16.msra.mxu0 0
    %3432 = vmatprep.subr.bf16.mxu0 0
    %3433 = vmatpush1.bf16.msra.mxu0 0
    %3434 = vmatprep.subr.bf16.mxu0 0
    %3435 = vmatpush1.bf16.msra.mxu0 0
    %3436 = vmatprep.subr.bf16.mxu0 0
    %3437 = vmatpush1.bf16.msra.mxu0 0
    %3438 = vmatprep.subr.bf16.mxu0 0
    %3439 = vmatpush1.bf16.msra.mxu0 0
    %3440 = vmatprep.subr.bf16.mxu0 0
    %3441 = vmatpush1.bf16.msra.mxu0 0
    %3442 = vmatprep.subr.bf16.mxu0 0
    %3443 = vmatpush1.bf16.msra.mxu0 0
    %3444 = vmatprep.mubr.bf16.mxu0 0
    %3445 = vmatmul.mubr.bf16.gmra.mrb[0].mxu0 %v3407
    %v3446 = vpop.f32.mrb[0].mxu0
    %v3447 = vadd.f32 0.0, %v3446
    %v3448 = vpop.f32.mrb[0].mxu0
    %v3449 = vpop.f32.mrb[0].mxu0
    %v3450 = vpop.f32.mrb[0].mxu0
    %3451 = vdwg.mxu0
    %3452 = vrot.lane.b32.xlu0 %v424, 64
    %v3453 = vpop.permute.xlu0 %3452
    %v3455 = vsel %vm445, %v2385, 0
    %v3458 = vsel %vm2400, %v3453, 0
    %3460 = vmatprep.subr.bf16.mxu0 0
    %3461 = vmatpush1.bf16.msra.mxu0 %v3458
    %3462 = vmatprep.subr.bf16.mxu0 0
    %3463 = vmatpush1.bf16.msra.mxu0 0
    %3464 = vmatprep.subr.bf16.mxu0 0
    %3465 = vmatpush1.bf16.msra.mxu0 0
    %3466 = vmatprep.subr.bf16.mxu0 0
    %3467 = vmatpush1.bf16.msra.mxu0 0
    %3468 = vmatprep.subr.bf16.mxu0 0
    %3469 = vmatpush1.bf16.msra.mxu0 0
    %3470 = vmatprep.subr.bf16.mxu0 0
    %3471 = vmatpush1.bf16.msra.mxu0 0
    %3472 = vmatprep.subr.bf16.mxu0 0
    %3473 = vmatpush1.bf16.msra.mxu0 0
    %3474 = vmatprep.subr.bf16.mxu0 0
    %3475 = vmatpush1.bf16.msra.mxu0 0
    %3476 = vmatprep.subr.bf16.mxu0 0
    %3477 = vmatpush1.bf16.msra.mxu0 0
    %3478 = vmatprep.subr.bf16.mxu0 0
    %3479 = vmatpush1.bf16.msra.mxu0 0
    %3480 = vmatprep.subr.bf16.mxu0 0
    %3481 = vmatpush1.bf16.msra.mxu0 0
    %3482 = vmatprep.subr.bf16.mxu0 0
    %3483 = vmatpush1.bf16.msra.mxu0 0
    %3484 = vmatprep.subr.bf16.mxu0 0
    %3485 = vmatpush1.bf16.msra.mxu0 0
    %3486 = vmatprep.subr.bf16.mxu0 0
    %3487 = vmatpush1.bf16.msra.mxu0 0
    %3488 = vmatprep.subr.bf16.mxu0 0
    %3489 = vmatpush1.bf16.msra.mxu0 0
    %3490 = vmatprep.subr.bf16.mxu0 0
    %3491 = vmatpush1.bf16.msra.mxu0 0
    %3492 = vmatprep.mubr.bf16.mxu0 0
    %3493 = vmatmul.mubr.bf16.gmra.mrb[0].mxu0 %v3455
    %v3494 = vpop.f32.mrb[0].mxu0
    %v3495 = vadd.f32 0.0, %v3494
    %v3496 = vpop.f32.mrb[0].mxu0
    %v3497 = vpop.f32.mrb[0].mxu0
    %v3498 = vpop.f32.mrb[0].mxu0
    %3499 = vdwg.mxu0
    %3500 = vrot.lane.b32.xlu0 %v425, 64
    %v3501 = vpop.permute.xlu0 %3500
    %v3503 = vsel %vm445, %v2386, 0
    %v3506 = vsel %vm2400, %v3501, 0
    %3508 = vmatprep.subr.bf16.mxu0 0
    %3509 = vmatpush1.bf16.msra.mxu0 %v3506
    %3510 = vmatprep.subr.bf16.mxu0 0
    %3511 = vmatpush1.bf16.msra.mxu0 0
    %3512 = vmatprep.subr.bf16.mxu0 0
    %3513 = vmatpush1.bf16.msra.mxu0 0
    %3514 = vmatprep.subr.bf16.mxu0 0
    %3515 = vmatpush1.bf16.msra.mxu0 0
    %3516 = vmatprep.subr.bf16.mxu0 0
    %3517 = vmatpush1.bf16.msra.mxu0 0
    %3518 = vmatprep.subr.bf16.mxu0 0
    %3519 = vmatpush1.bf16.msra.mxu0 0
    %3520 = vmatprep.subr.bf16.mxu0 0
    %3521 = vmatpush1.bf16.msra.mxu0 0
    %3522 = vmatprep.subr.bf16.mxu0 0
    %3523 = vmatpush1.bf16.msra.mxu0 0
    %3524 = vmatprep.subr.bf16.mxu0 0
    %3525 = vmatpush1.bf16.msra.mxu0 0
    %3526 = vmatprep.subr.bf16.mxu0 0
    %3527 = vmatpush1.bf16.msra.mxu0 0
    %3528 = vmatprep.subr.bf16.mxu0 0
    %3529 = vmatpush1.bf16.msra.mxu0 0
    %3530 = vmatprep.subr.bf16.mxu0 0
    %3531 = vmatpush1.bf16.msra.mxu0 0
    %3532 = vmatprep.subr.bf16.mxu0 0
    %3533 = vmatpush1.bf16.msra.mxu0 0
    %3534 = vmatprep.subr.bf16.mxu0 0
    %3535 = vmatpush1.bf16.msra.mxu0 0
    %3536 = vmatprep.subr.bf16.mxu0 0
    %3537 = vmatpush1.bf16.msra.mxu0 0
    %3538 = vmatprep.subr.bf16.mxu0 0
    %3539 = vmatpush1.bf16.msra.mxu0 0
    %3540 = vmatprep.mubr.bf16.mxu0 0
    %3541 = vmatmul.mubr.bf16.gmra.mrb[0].mxu0 %v3503
    %v3542 = vpop.f32.mrb[0].mxu0
    %v3543 = vadd.f32 0.0, %v3542
    %v3544 = vpop.f32.mrb[0].mxu0
    %v3545 = vpop.f32.mrb[0].mxu0
    %v3546 = vpop.f32.mrb[0].mxu0
    %3547 = vdwg.mxu0
    %3548 = vrot.lane.b32.xlu0 %v426, 64
    %v3549 = vpop.permute.xlu0 %3548
    %v3551 = vsel %vm445, %v2387, 0
    %v3554 = vsel %vm2400, %v3549, 0
    %3556 = vmatprep.subr.bf16.mxu0 0
    %3557 = vmatpush1.bf16.msra.mxu0 %v3554
    %3558 = vmatprep.subr.bf16.mxu0 0
    %3559 = vmatpush1.bf16.msra.mxu0 0
    %3560 = vmatprep.subr.bf16.mxu0 0
    %3561 = vmatpush1.bf16.msra.mxu0 0
    %3562 = vmatprep.subr.bf16.mxu0 0
    %3563 = vmatpush1.bf16.msra.mxu0 0
    %3564 = vmatprep.subr.bf16.mxu0 0
    %3565 = vmatpush1.bf16.msra.mxu0 0
    %3566 = vmatprep.subr.bf16.mxu0 0
    %3567 = vmatpush1.bf16.msra.mxu0 0
    %3568 = vmatprep.subr.bf16.mxu0 0
    %3569 = vmatpush1.bf16.msra.mxu0 0
    %3570 = vmatprep.subr.bf16.mxu0 0
    %3571 = vmatpush1.bf16.msra.mxu0 0
    %3572 = vmatprep.subr.bf16.mxu0 0
    %3573 = vmatpush1.bf16.msra.mxu0 0
    %3574 = vmatprep.subr.bf16.mxu0 0
    %3575 = vmatpush1.bf16.msra.mxu0 0
    %3576 = vmatprep.subr.bf16.mxu0 0
    %3577 = vmatpush1.bf16.msra.mxu0 0
    %3578 = vmatprep.subr.bf16.mxu0 0
    %3579 = vmatpush1.bf16.msra.mxu0 0
    %3580 = vmatprep.subr.bf16.mxu0 0
    %3581 = vmatpush1.bf16.msra.mxu0 0
    %3582 = vmatprep.subr.bf16.mxu0 0
    %3583 = vmatpush1.bf16.msra.mxu0 0
    %3584 = vmatprep.subr.bf16.mxu0 0
    %3585 = vmatpush1.bf16.msra.mxu0 0
    %3586 = vmatprep.subr.bf16.mxu0 0
    %3587 = vmatpush1.bf16.msra.mxu0 0
    %3588 = vmatprep.mubr.bf16.mxu0 0
    %3589 = vmatmul.mubr.bf16.gmra.mrb[0].mxu0 %v3551
    %v3590 = vpop.f32.mrb[0].mxu0
    %v3591 = vadd.f32 0.0, %v3590
    %v3592 = vpop.f32.mrb[0].mxu0
    %v3593 = vpop.f32.mrb[0].mxu0
    %v3594 = vpop.f32.mrb[0].mxu0
    %3595 = vdwg.mxu0
    %3596 = vrot.lane.b32.xlu0 %v427, 64
    %v3597 = vpop.permute.xlu0 %3596
    %v3599 = vsel %vm445, %v2388, 0
    %v3602 = vsel %vm2400, %v3597, 0
    %3604 = vmatprep.subr.bf16.mxu0 0
    %3605 = vmatpush1.bf16.msra.mxu0 %v3602
    %3606 = vmatprep.subr.bf16.mxu0 0
    %3607 = vmatpush1.bf16.msra.mxu0 0
    %3608 = vmatprep.subr.bf16.mxu0 0
    %3609 = vmatpush1.bf16.msra.mxu0 0
    %3610 = vmatprep.subr.bf16.mxu0 0
    %3611 = vmatpush1.bf16.msra.mxu0 0
    %3612 = vmatprep.subr.bf16.mxu0 0
    %3613 = vmatpush1.bf16.msra.mxu0 0
    %3614 = vmatprep.subr.bf16.mxu0 0
    %3615 = vmatpush1.bf16.msra.mxu0 0
    %3616 = vmatprep.subr.bf16.mxu0 0
    %3617 = vmatpush1.bf16.msra.mxu0 0
    %3618 = vmatprep.subr.bf16.mxu0 0
    %3619 = vmatpush1.bf16.msra.mxu0 0
    %3620 = vmatprep.subr.bf16.mxu0 0
    %3621 = vmatpush1.bf16.msra.mxu0 0
    %3622 = vmatprep.subr.bf16.mxu0 0
    %3623 = vmatpush1.bf16.msra.mxu0 0
    %3624 = vmatprep.subr.bf16.mxu0 0
    %3625 = vmatpush1.bf16.msra.mxu0 0
    %3626 = vmatprep.subr.bf16.mxu0 0
    %3627 = vmatpush1.bf16.msra.mxu0 0
    %3628 = vmatprep.subr.bf16.mxu0 0
    %3629 = vmatpush1.bf16.msra.mxu0 0
    %3630 = vmatprep.subr.bf16.mxu0 0
    %3631 = vmatpush1.bf16.msra.mxu0 0
    %3632 = vmatprep.subr.bf16.mxu0 0
    %3633 = vmatpush1.bf16.msra.mxu0 0
    %3634 = vmatprep.subr.bf16.mxu0 0
    %3635 = vmatpush1.bf16.msra.mxu0 0
    %3636 = vmatprep.mubr.bf16.mxu0 0
    %3637 = vmatmul.mubr.bf16.gmra.mrb[0].mxu0 %v3599
    %v3638 = vpop.f32.mrb[0].mxu0
    %v3639 = vadd.f32 0.0, %v3638
    %v3640 = vpop.f32.mrb[0].mxu0
    %v3641 = vpop.f32.mrb[0].mxu0
    %v3642 = vpop.f32.mrb[0].mxu0
    %3643 = vdwg.mxu0
    %3644 = vrot.lane.b32.xlu0 %v428, 64
    %v3645 = vpop.permute.xlu0 %3644
    %v3647 = vsel %vm445, %v2389, 0
    %v3650 = vsel %vm2400, %v3645, 0
    %3652 = vmatprep.subr.bf16.mxu0 0
    %3653 = vmatpush1.bf16.msra.mxu0 %v3650
    %3654 = vmatprep.subr.bf16.mxu0 0
    %3655 = vmatpush1.bf16.msra.mxu0 0
    %3656 = vmatprep.subr.bf16.mxu0 0
    %3657 = vmatpush1.bf16.msra.mxu0 0
    %3658 = vmatprep.subr.bf16.mxu0 0
    %3659 = vmatpush1.bf16.msra.mxu0 0
    %3660 = vmatprep.subr.bf16.mxu0 0
    %3661 = vmatpush1.bf16.msra.mxu0 0
    %3662 = vmatprep.subr.bf16.mxu0 0
    %3663 = vmatpush1.bf16.msra.mxu0 0
    %3664 = vmatprep.subr.bf16.mxu0 0
    %3665 = vmatpush1.bf16.msra.mxu0 0
    %3666 = vmatprep.subr.bf16.mxu0 0
    %3667 = vmatpush1.bf16.msra.mxu0 0
    %3668 = vmatprep.subr.bf16.mxu0 0
    %3669 = vmatpush1.bf16.msra.mxu0 0
    %3670 = vmatprep.subr.bf16.mxu0 0
    %3671 = vmatpush1.bf16.msra.mxu0 0
    %3672 = vmatprep.subr.bf16.mxu0 0
    %3673 = vmatpush1.bf16.msra.mxu0 0
    %3674 = vmatprep.subr.bf16.mxu0 0
    %3675 = vmatpush1.bf16.msra.mxu0 0
    %3676 = vmatprep.subr.bf16.mxu0 0
    %3677 = vmatpush1.bf16.msra.mxu0 0
    %3678 = vmatprep.subr.bf16.mxu0 0
    %3679 = vmatpush1.bf16.msra.mxu0 0
    %3680 = vmatprep.subr.bf16.mxu0 0
    %3681 = vmatpush1.bf16.msra.mxu0 0
    %3682 = vmatprep.subr.bf16.mxu0 0
    %3683 = vmatpush1.bf16.msra.mxu0 0
    %3684 = vmatprep.mubr.bf16.mxu0 0
    %3685 = vmatmul.mubr.bf16.gmra.mrb[0].mxu0 %v3647
    %v3686 = vpop.f32.mrb[0].mxu0
    %v3687 = vadd.f32 0.0, %v3686
    %v3688 = vpop.f32.mrb[0].mxu0
    %v3689 = vpop.f32.mrb[0].mxu0
    %v3690 = vpop.f32.mrb[0].mxu0
    %3691 = vdwg.mxu0
    %3692 = vrot.lane.b32.xlu0 %v429, 64
    %v3693 = vpop.permute.xlu0 %3692
    %v3695 = vsel %vm445, %v2390, 0
    %v3698 = vsel %vm2400, %v3693, 0
    %3700 = vmatprep.subr.bf16.mxu0 0
    %3701 = vmatpush1.bf16.msra.mxu0 %v3698
    %3702 = vmatprep.subr.bf16.mxu0 0
    %3703 = vmatpush1.bf16.msra.mxu0 0
    %3704 = vmatprep.subr.bf16.mxu0 0
    %3705 = vmatpush1.bf16.msra.mxu0 0
    %3706 = vmatprep.subr.bf16.mxu0 0
    %3707 = vmatpush1.bf16.msra.mxu0 0
    %3708 = vmatprep.subr.bf16.mxu0 0
    %3709 = vmatpush1.bf16.msra.mxu0 0
    %3710 = vmatprep.subr.bf16.mxu0 0
    %3711 = vmatpush1.bf16.msra.mxu0 0
    %3712 = vmatprep.subr.bf16.mxu0 0
    %3713 = vmatpush1.bf16.msra.mxu0 0
    %3714 = vmatprep.subr.bf16.mxu0 0
    %3715 = vmatpush1.bf16.msra.mxu0 0
    %3716 = vmatprep.subr.bf16.mxu0 0
    %3717 = vmatpush1.bf16.msra.mxu0 0
    %3718 = vmatprep.subr.bf16.mxu0 0
    %3719 = vmatpush1.bf16.msra.mxu0 0
    %3720 = vmatprep.subr.bf16.mxu0 0
    %3721 = vmatpush1.bf16.msra.mxu0 0
    %3722 = vmatprep.subr.bf16.mxu0 0
    %3723 = vmatpush1.bf16.msra.mxu0 0
    %3724 = vmatprep.subr.bf16.mxu0 0
    %3725 = vmatpush1.bf16.msra.mxu0 0
    %3726 = vmatprep.subr.bf16.mxu0 0
    %3727 = vmatpush1.bf16.msra.mxu0 0
    %3728 = vmatprep.subr.bf16.mxu0 0
    %3729 = vmatpush1.bf16.msra.mxu0 0
    %3730 = vmatprep.subr.bf16.mxu0 0
    %3731 = vmatpush1.bf16.msra.mxu0 0
    %3732 = vmatprep.mubr.bf16.mxu0 0
    %3733 = vmatmul.mubr.bf16.gmra.mrb[0].mxu0 %v3695
    %v3734 = vpop.f32.mrb[0].mxu0
    %v3735 = vadd.f32 0.0, %v3734
    %v3736 = vpop.f32.mrb[0].mxu0
    %v3737 = vpop.f32.mrb[0].mxu0
    %v3738 = vpop.f32.mrb[0].mxu0
    %3739 = vdwg.mxu0
    %3740 = vrot.lane.b32.xlu0 %v430, 64
    %v3741 = vpop.permute.xlu0 %3740
    %v3743 = vsel %vm445, %v2391, 0
    %v3746 = vsel %vm2400, %v3741, 0
    %3748 = vmatprep.subr.bf16.mxu0 0
    %3749 = vmatpush1.bf16.msra.mxu0 %v3746
    %3750 = vmatprep.subr.bf16.mxu0 0
    %3751 = vmatpush1.bf16.msra.mxu0 0
    %3752 = vmatprep.subr.bf16.mxu0 0
    %3753 = vmatpush1.bf16.msra.mxu0 0
    %3754 = vmatprep.subr.bf16.mxu0 0
    %3755 = vmatpush1.bf16.msra.mxu0 0
    %3756 = vmatprep.subr.bf16.mxu0 0
    %3757 = vmatpush1.bf16.msra.mxu0 0
    %3758 = vmatprep.subr.bf16.mxu0 0
    %3759 = vmatpush1.bf16.msra.mxu0 0
    %3760 = vmatprep.subr.bf16.mxu0 0
    %3761 = vmatpush1.bf16.msra.mxu0 0
    %3762 = vmatprep.subr.bf16.mxu0 0
    %3763 = vmatpush1.bf16.msra.mxu0 0
    %3764 = vmatprep.subr.bf16.mxu0 0
    %3765 = vmatpush1.bf16.msra.mxu0 0
    %3766 = vmatprep.subr.bf16.mxu0 0
    %3767 = vmatpush1.bf16.msra.mxu0 0
    %3768 = vmatprep.subr.bf16.mxu0 0
    %3769 = vmatpush1.bf16.msra.mxu0 0
    %3770 = vmatprep.subr.bf16.mxu0 0
    %3771 = vmatpush1.bf16.msra.mxu0 0
    %3772 = vmatprep.subr.bf16.mxu0 0
    %3773 = vmatpush1.bf16.msra.mxu0 0
    %3774 = vmatprep.subr.bf16.mxu0 0
    %3775 = vmatpush1.bf16.msra.mxu0 0
    %3776 = vmatprep.subr.bf16.mxu0 0
    %3777 = vmatpush1.bf16.msra.mxu0 0
    %3778 = vmatprep.subr.bf16.mxu0 0
    %3779 = vmatpush1.bf16.msra.mxu0 0
    %3780 = vmatprep.mubr.bf16.mxu0 0
    %3781 = vmatmul.mubr.bf16.gmra.mrb[0].mxu0 %v3743
    %v3782 = vpop.f32.mrb[0].mxu0
    %v3783 = vadd.f32 0.0, %v3782
    %v3784 = vpop.f32.mrb[0].mxu0
    %v3785 = vpop.f32.mrb[0].mxu0
    %v3786 = vpop.f32.mrb[0].mxu0
    %3787 = vdwg.mxu0
    %3788 = vrot.lane.b32.xlu0 %v431, 64
    %v3789 = vpop.permute.xlu0 %3788
    %v3791 = vsel %vm445, %v2392, 0
    %v3794 = vsel %vm2400, %v3789, 0
    %3796 = vmatprep.subr.bf16.mxu0 0
    %3797 = vmatpush1.bf16.msra.mxu0 %v3794
    %3798 = vmatprep.subr.bf16.mxu0 0
    %3799 = vmatpush1.bf16.msra.mxu0 0
    %3800 = vmatprep.subr.bf16.mxu0 0
    %3801 = vmatpush1.bf16.msra.mxu0 0
    %3802 = vmatprep.subr.bf16.mxu0 0
    %3803 = vmatpush1.bf16.msra.mxu0 0
    %3804 = vmatprep.subr.bf16.mxu0 0
    %3805 = vmatpush1.bf16.msra.mxu0 0
    %3806 = vmatprep.subr.bf16.mxu0 0
    %3807 = vmatpush1.bf16.msra.mxu0 0
    %3808 = vmatprep.subr.bf16.mxu0 0
    %3809 = vmatpush1.bf16.msra.mxu0 0
    %3810 = vmatprep.subr.bf16.mxu0 0
    %3811 = vmatpush1.bf16.msra.mxu0 0
    %3812 = vmatprep.subr.bf16.mxu0 0
    %3813 = vmatpush1.bf16.msra.mxu0 0
    %3814 = vmatprep.subr.bf16.mxu0 0
    %3815 = vmatpush1.bf16.msra.mxu0 0
    %3816 = vmatprep.subr.bf16.mxu0 0
    %3817 = vmatpush1.bf16.msra.mxu0 0
    %3818 = vmatprep.subr.bf16.mxu0 0
    %3819 = vmatpush1.bf16.msra.mxu0 0
    %3820 = vmatprep.subr.bf16.mxu0 0
    %3821 = vmatpush1.bf16.msra.mxu0 0
    %3822 = vmatprep.subr.bf16.mxu0 0
    %3823 = vmatpush1.bf16.msra.mxu0 0
    %3824 = vmatprep.subr.bf16.mxu0 0
    %3825 = vmatpush1.bf16.msra.mxu0 0
    %3826 = vmatprep.subr.bf16.mxu0 0
    %3827 = vmatpush1.bf16.msra.mxu0 0
    %3828 = vmatprep.mubr.bf16.mxu0 0
    %3829 = vmatmul.mubr.bf16.gmra.mrb[0].mxu0 %v3791
    %v3830 = vpop.f32.mrb[0].mxu0
    %v3831 = vadd.f32 0.0, %v3830
    %v3832 = vpop.f32.mrb[0].mxu0
    %v3833 = vpop.f32.mrb[0].mxu0
    %v3834 = vpop.f32.mrb[0].mxu0
    %3835 = vdwg.mxu0
    %3836 = vrot.lane.b32.xlu0 %v432, 64
    %v3837 = vpop.permute.xlu0 %3836
    %v3839 = vsel %vm445, %v2393, 0
    %v3842 = vsel %vm2400, %v3837, 0
    %3844 = vmatprep.subr.bf16.mxu0 0
    %3845 = vmatpush1.bf16.msra.mxu0 %v3842
    %3846 = vmatprep.subr.bf16.mxu0 0
    %3847 = vmatpush1.bf16.msra.mxu0 0
    %3848 = vmatprep.subr.bf16.mxu0 0
    %3849 = vmatpush1.bf16.msra.mxu0 0
    %3850 = vmatprep.subr.bf16.mxu0 0
    %3851 = vmatpush1.bf16.msra.mxu0 0
    %3852 = vmatprep.subr.bf16.mxu0 0
    %3853 = vmatpush1.bf16.msra.mxu0 0
    %3854 = vmatprep.subr.bf16.mxu0 0
    %3855 = vmatpush1.bf16.msra.mxu0 0
    %3856 = vmatprep.subr.bf16.mxu0 0
    %3857 = vmatpush1.bf16.msra.mxu0 0
    %3858 = vmatprep.subr.bf16.mxu0 0
    %3859 = vmatpush1.bf16.msra.mxu0 0
    %3860 = vmatprep.subr.bf16.mxu0 0
    %3861 = vmatpush1.bf16.msra.mxu0 0
    %3862 = vmatprep.subr.bf16.mxu0 0
    %3863 = vmatpush1.bf16.msra.mxu0 0
    %3864 = vmatprep.subr.bf16.mxu0 0
    %3865 = vmatpush1.bf16.msra.mxu0 0
    %3866 = vmatprep.subr.bf16.mxu0 0
    %3867 = vmatpush1.bf16.msra.mxu0 0
    %3868 = vmatprep.subr.bf16.mxu0 0
    %3869 = vmatpush1.bf16.msra.mxu0 0
    %3870 = vmatprep.subr.bf16.mxu0 0
    %3871 = vmatpush1.bf16.msra.mxu0 0
    %3872 = vmatprep.subr.bf16.mxu0 0
    %3873 = vmatpush1.bf16.msra.mxu0 0
    %3874 = vmatprep.subr.bf16.mxu0 0
    %3875 = vmatpush1.bf16.msra.mxu0 0
    %3876 = vmatprep.mubr.bf16.mxu0 0
    %3877 = vmatmul.mubr.bf16.gmra.mrb[0].mxu0 %v3839
    %v3878 = vpop.f32.mrb[0].mxu0
    %v3879 = vadd.f32 0.0, %v3878
    %v3880 = vpop.f32.mrb[0].mxu0
    %v3881 = vpop.f32.mrb[0].mxu0
    %v3882 = vpop.f32.mrb[0].mxu0
    %3883 = vdwg.mxu0
    %3884 = vrot.lane.b32.xlu0 %v433, 64
    %v3885 = vpop.permute.xlu0 %3884
    %v3887 = vsel %vm445, %v2394, 0
    %v3890 = vsel %vm2400, %v3885, 0
    %3892 = vmatprep.subr.bf16.mxu0 0
    %3893 = vmatpush1.bf16.msra.mxu0 %v3890
    %3894 = vmatprep.subr.bf16.mxu0 0
    %3895 = vmatpush1.bf16.msra.mxu0 0
    %3896 = vmatprep.subr.bf16.mxu0 0
    %3897 = vmatpush1.bf16.msra.mxu0 0
    %3898 = vmatprep.subr.bf16.mxu0 0
    %3899 = vmatpush1.bf16.msra.mxu0 0
    %3900 = vmatprep.subr.bf16.mxu0 0
    %3901 = vmatpush1.bf16.msra.mxu0 0
    %3902 = vmatprep.subr.bf16.mxu0 0
    %3903 = vmatpush1.bf16.msra.mxu0 0
    %3904 = vmatprep.subr.bf16.mxu0 0
    %3905 = vmatpush1.bf16.msra.mxu0 0
    %3906 = vmatprep.subr.bf16.mxu0 0
    %3907 = vmatpush1.bf16.msra.mxu0 0
    %3908 = vmatprep.subr.bf16.mxu0 0
    %3909 = vmatpush1.bf16.msra.mxu0 0
    %3910 = vmatprep.subr.bf16.mxu0 0
    %3911 = vmatpush1.bf16.msra.mxu0 0
    %3912 = vmatprep.subr.bf16.mxu0 0
    %3913 = vmatpush1.bf16.msra.mxu0 0
    %3914 = vmatprep.subr.bf16.mxu0 0
    %3915 = vmatpush1.bf16.msra.mxu0 0
    %3916 = vmatprep.subr.bf16.mxu0 0
    %3917 = vmatpush1.bf16.msra.mxu0 0
    %3918 = vmatprep.subr.bf16.mxu0 0
    %3919 = vmatpush1.bf16.msra.mxu0 0
    %3920 = vmatprep.subr.bf16.mxu0 0
    %3921 = vmatpush1.bf16.msra.mxu0 0
    %3922 = vmatprep.subr.bf16.mxu0 0
    %3923 = vmatpush1.bf16.msra.mxu0 0
    %3924 = vmatprep.mubr.bf16.mxu0 0
    %3925 = vmatmul.mubr.bf16.gmra.mrb[0].mxu0 %v3887
    %v3926 = vpop.f32.mrb[0].mxu0
    %v3927 = vadd.f32 0.0, %v3926
    %v3928 = vpop.f32.mrb[0].mxu0
    %v3929 = vpop.f32.mrb[0].mxu0
    %v3930 = vpop.f32.mrb[0].mxu0
    %3931 = vdwg.mxu0
    %3940 = vrot.lane.b32.xlu0 %v2823, 8
    %v3941 = vpop.permute.xlu0 %3940
    %3942 = vrot.lane.b32.xlu0 %v2871, 8
    %v3943 = vpop.permute.xlu0 %3942
    %3944 = vrot.lane.b32.xlu0 %v2919, 8
    %v3945 = vpop.permute.xlu0 %3944
    %3946 = vrot.lane.b32.xlu0 %v2967, 8
    %v3947 = vpop.permute.xlu0 %3946
    %3948 = vrot.lane.b32.xlu0 %v3015, 8
    %v3949 = vpop.permute.xlu0 %3948
    %3950 = vrot.lane.b32.xlu0 %v3063, 8
    %v3951 = vpop.permute.xlu0 %3950
    %3952 = vrot.lane.b32.xlu0 %v3111, 8
    %v3953 = vpop.permute.xlu0 %3952
    %3954 = vrot.lane.b32.xlu0 %v3159, 8
    %v3955 = vpop.permute.xlu0 %3954
    %3972 = vrot.lane.b32.xlu0 %v3207, 16
    %v3973 = vpop.permute.xlu0 %3972
    %3974 = vrot.lane.b32.xlu0 %v3255, 16
    %v3975 = vpop.permute.xlu0 %3974
    %3976 = vrot.lane.b32.xlu0 %v3303, 16
    %v3977 = vpop.permute.xlu0 %3976
    %3978 = vrot.lane.b32.xlu0 %v3351, 16
    %v3979 = vpop.permute.xlu0 %3978
    %3980 = vrot.lane.b32.xlu0 %v3399, 16
    %v3981 = vpop.permute.xlu0 %3980
    %3982 = vrot.lane.b32.xlu0 %v3447, 16
    %v3983 = vpop.permute.xlu0 %3982
    %3984 = vrot.lane.b32.xlu0 %v3495, 16
    %v3985 = vpop.permute.xlu0 %3984
    %3986 = vrot.lane.b32.xlu0 %v3543, 16
    %v3987 = vpop.permute.xlu0 %3986
    %4004 = vrot.lane.b32.xlu0 %v3591, 24
    %v4005 = vpop.permute.xlu0 %4004
    %4006 = vrot.lane.b32.xlu0 %v3639, 24
    %v4007 = vpop.permute.xlu0 %4006
    %4008 = vrot.lane.b32.xlu0 %v3687, 24
    %v4009 = vpop.permute.xlu0 %4008
    %4010 = vrot.lane.b32.xlu0 %v3735, 24
    %v4011 = vpop.permute.xlu0 %4010
    %4012 = vrot.lane.b32.xlu0 %v3783, 24
    %v4013 = vpop.permute.xlu0 %4012
    %4014 = vrot.lane.b32.xlu0 %v3831, 24
    %v4015 = vpop.permute.xlu0 %4014
    %4016 = vrot.lane.b32.xlu0 %v3879, 24
    %v4017 = vpop.permute.xlu0 %4016
    %4018 = vrot.lane.b32.xlu0 %v3927, 24
    %v4019 = vpop.permute.xlu0 %4018
    %v4028 = vsel %vm445, %v2439, %v3941
    %v4029 = vsel %vm445, %v2487, %v3943
    %v4030 = vsel %vm445, %v2535, %v3945
    %v4031 = vsel %vm445, %v2583, %v3947
    %v4032 = vsel %vm445, %v2631, %v3949
    %v4033 = vsel %vm445, %v2679, %v3951
    %v4034 = vsel %vm445, %v2727, %v3953
    %v4035 = vsel %vm445, %v2775, %v3955
    %vm4036 = vcmask 130048
    %v4037 = vsel %vm4036, %v4028, %v3973
    %v4038 = vsel %vm4036, %v4029, %v3975
    %v4039 = vsel %vm4036, %v4030, %v3977
    %v4040 = vsel %vm4036, %v4031, %v3979
    %v4041 = vsel %vm4036, %v4032, %v3981
    %v4042 = vsel %vm4036, %v4033, %v3983
    %v4043 = vsel %vm4036, %v4034, %v3985
    %v4044 = vsel %vm4036, %v4035, %v3987
    %vm4045 = vcmask 195584
    %v4046 = vsel %vm4045, %v4037, %v4005
    %v4047 = vsel %vm4045, %v4038, %v4007
    %v4048 = vsel %vm4045, %v4039, %v4009
    %v4049 = vsel %vm4045, %v4040, %v4011
    %v4050 = vsel %vm4045, %v4041, %v4013
    %v4051 = vsel %vm4045, %v4042, %v4015
    %v4052 = vsel %vm4045, %v4043, %v4017
    %v4053 = vsel %vm4045, %v4044, %v4019
    %v4054 = vpack.c.bf16 %v4047, %v4046
    %v4055 = vpack.c.bf16 %v4049, %v4048
    %v4056 = vpack.c.bf16 %v4051, %v4050
    %v4057 = vpack.c.bf16 %v4053, %v4052
    %v4058 = vlaneseq
    %v4059 = vshrl.u32 %v4058, 7
    %v4060 = vsub.s32 0, %v4059
    %v4061 = vrot.slane %v86, %v4060
    %4062 = vrot.lane.b32.xlu0 %v241, 32
    %v4063 = vpop.permute.xlu0 %4062
    %4064 = vrot.lane.b32.xlu0 %v242, 32
    %v4065 = vpop.permute.xlu0 %4064
    %v4069 = vsel %vm99, %v4054, 0
    %v4072 = vsel %vm99, %v4055, 0
    %v4075 = vsel %vm99, %v4056, 0
    %v4078 = vsel %vm99, %v4057, 0
    %4080 = vmatprep.subr.bf16.mxu0 0
    %4081 = vmatpush1.bf16.msra.mxu0 %v4063
    %4082 = vmatprep.subr.bf16.mxu0 0
    %4083 = vmatpush1.bf16.msra.mxu0 %v4065
    %4084 = vmatprep.subr.bf16.mxu0 0
    %4085 = vmatpush1.bf16.msra.mxu0 0
    %4086 = vmatprep.subr.bf16.mxu0 0
    %4087 = vmatpush1.bf16.msra.mxu0 0
    %4088 = vmatprep.subr.bf16.mxu0 0
    %4089 = vmatpush1.bf16.msra.mxu0 0
    %4090 = vmatprep.subr.bf16.mxu0 0
    %4091 = vmatpush1.bf16.msra.mxu0 0
    %4092 = vmatprep.subr.bf16.mxu0 0
    %4093 = vmatpush1.bf16.msra.mxu0 0
    %4094 = vmatprep.subr.bf16.mxu0 0
    %4095 = vmatpush1.bf16.msra.mxu0 0
    %4096 = vmatprep.subr.bf16.mxu0 0
    %4097 = vmatpush1.bf16.msra.mxu0 0
    %4098 = vmatprep.subr.bf16.mxu0 0
    %4099 = vmatpush1.bf16.msra.mxu0 0
    %4100 = vmatprep.subr.bf16.mxu0 0
    %4101 = vmatpush1.bf16.msra.mxu0 0
    %4102 = vmatprep.subr.bf16.mxu0 0
    %4103 = vmatpush1.bf16.msra.mxu0 0
    %4104 = vmatprep.subr.bf16.mxu0 0
    %4105 = vmatpush1.bf16.msra.mxu0 0
    %4106 = vmatprep.subr.bf16.mxu0 0
    %4107 = vmatpush1.bf16.msra.mxu0 0
    %4108 = vmatprep.subr.bf16.mxu0 0
    %4109 = vmatpush1.bf16.msra.mxu0 0
    %4110 = vmatprep.subr.bf16.mxu0 0
    %4111 = vmatpush1.bf16.msra.mxu0 0
    %4112 = vmatprep.mubr.bf16.mxu0 0
    %4113 = vmatmul.mubr.bf16.gmra.mrb[0].mxu0 %v4069
    %v4114 = vpop.f32.mrb[0].mxu0
    %v4115 = vadd.f32 %v4061, %v4114
    %v4116 = vpop.f32.mrb[0].mxu0
    %v4117 = vpop.f32.mrb[0].mxu0
    %v4118 = vadd.f32 %v4061, %v4117
    %v4119 = vpop.f32.mrb[0].mxu0
    %4120 = vmatprep.mubr.bf16.mxu0 0
    %4121 = vmatmul.mubr.bf16.gmra.mrb[0].mxu0 %v4072
    %v4122 = vpop.f32.mrb[0].mxu0
    %v4123 = vadd.f32 %v4061, %v4122
    %v4124 = vpop.f32.mrb[0].mxu0
    %v4125 = vpop.f32.mrb[0].mxu0
    %v4126 = vadd.f32 %v4061, %v4125
    %v4127 = vpop.f32.mrb[0].mxu0
    %4128 = vmatprep.mubr.bf16.mxu0 0
    %4129 = vmatmul.mubr.bf16.gmra.mrb[0].mxu0 %v4075
    %v4130 = vpop.f32.mrb[0].mxu0
    %v4131 = vadd.f32 %v4061, %v4130
    %v4132 = vpop.f32.mrb[0].mxu0
    %v4133 = vpop.f32.mrb[0].mxu0
    %v4134 = vadd.f32 %v4061, %v4133
    %v4135 = vpop.f32.mrb[0].mxu0
    %4136 = vmatprep.mubr.bf16.mxu0 0
    %4137 = vmatmul.mubr.bf16.gmra.mrb[0].mxu0 %v4078
    %v4138 = vpop.f32.mrb[0].mxu0
    %v4139 = vadd.f32 %v4061, %v4138
    %v4140 = vpop.f32.mrb[0].mxu0
    %v4141 = vpop.f32.mrb[0].mxu0
    %v4142 = vadd.f32 %v4061, %v4141
    %v4143 = vpop.f32.mrb[0].mxu0
    %4144 = vdwg.mxu0
    %v4145 = vadd.f32 %v91, %v4115
    %v4146 = vadd.f32 %v92, %v4118
    %v4147 = vadd.f32 %v93, %v4123
    %v4148 = vadd.f32 %v94, %v4126
    %v4149 = vadd.f32 %v95, %v4131
    %v4150 = vadd.f32 %v96, %v4134
    %v4151 = vadd.f32 %v97, %v4139
    %v4152 = vadd.f32 %v98, %v4142
    %v4153 = vsel %vm99, %v4145, 0.0
    %4154 = vadd.xlane.f32.xlu0 %v4153
    %v4155 = vpop.xlane.xlu0 %4154
    %v4156 = vsel %vm99, %v4146, 0.0
    %4157 = vadd.xlane.f32.xlu0 %v4156
    %v4158 = vpop.xlane.xlu0 %4157
    %v4159 = vsel %vm99, %v4147, 0.0
    %4160 = vadd.xlane.f32.xlu0 %v4159
    %v4161 = vpop.xlane.xlu0 %4160
    %v4162 = vsel %vm99, %v4148, 0.0
    %4163 = vadd.xlane.f32.xlu0 %v4162
    %v4164 = vpop.xlane.xlu0 %4163
    %v4165 = vsel %vm99, %v4149, 0.0
    %4166 = vadd.xlane.f32.xlu0 %v4165
    %v4167 = vpop.xlane.xlu0 %4166
    %v4168 = vsel %vm99, %v4150, 0.0
    %4169 = vadd.xlane.f32.xlu0 %v4168
    %v4170 = vpop.xlane.xlu0 %4169
    %v4171 = vsel %vm99, %v4151, 0.0
    %4172 = vadd.xlane.f32.xlu0 %v4171
    %v4173 = vpop.xlane.xlu0 %4172
    %v4174 = vsel %vm99, %v4152, 0.0
    %4175 = vadd.xlane.f32.xlu0 %v4174
    %v4176 = vpop.xlane.xlu0 %4175
    %v4177 = vmul.f32 %v4155, %v124
    %v4178 = vmul.f32 %v4158, %v124
    %v4179 = vmul.f32 %v4161, %v124
    %v4180 = vmul.f32 %v4164, %v124
    %v4181 = vmul.f32 %v4167, %v124
    %v4182 = vmul.f32 %v4170, %v124
    %v4183 = vmul.f32 %v4173, %v124
    %v4184 = vmul.f32 %v4176, %v124
    %v4185 = vsub.f32 %v4145, %v4177
    %v4186 = vsub.f32 %v4146, %v4178
    %v4187 = vsub.f32 %v4147, %v4179
    %v4188 = vsub.f32 %v4148, %v4180
    %v4189 = vsub.f32 %v4149, %v4181
    %v4190 = vsub.f32 %v4150, %v4182
    %v4191 = vsub.f32 %v4151, %v4183
    %v4192 = vsub.f32 %v4152, %v4184
    %v4193 = vmul.f32 %v4185, %v4185
    %v4194 = vmul.f32 %v4186, %v4186
    %v4195 = vmul.f32 %v4187, %v4187
    %v4196 = vmul.f32 %v4188, %v4188
    %v4197 = vmul.f32 %v4189, %v4189
    %v4198 = vmul.f32 %v4190, %v4190
    %v4199 = vmul.f32 %v4191, %v4191
    %v4200 = vmul.f32 %v4192, %v4192
    %v4201 = vsel %vm99, %v4193, 0.0
    %4202 = vadd.xlane.f32.xlu0 %v4201
    %v4203 = vpop.xlane.xlu0 %4202
    %v4204 = vsel %vm99, %v4194, 0.0
    %4205 = vadd.xlane.f32.xlu0 %v4204
    %v4206 = vpop.xlane.xlu0 %4205
    %v4207 = vsel %vm99, %v4195, 0.0
    %4208 = vadd.xlane.f32.xlu0 %v4207
    %v4209 = vpop.xlane.xlu0 %4208
    %v4210 = vsel %vm99, %v4196, 0.0
    %4211 = vadd.xlane.f32.xlu0 %v4210
    %v4212 = vpop.xlane.xlu0 %4211
    %v4213 = vsel %vm99, %v4197, 0.0
    %4214 = vadd.xlane.f32.xlu0 %v4213
    %v4215 = vpop.xlane.xlu0 %4214
    %v4216 = vsel %vm99, %v4198, 0.0
    %4217 = vadd.xlane.f32.xlu0 %v4216
    %v4218 = vpop.xlane.xlu0 %4217
    %v4219 = vsel %vm99, %v4199, 0.0
    %4220 = vadd.xlane.f32.xlu0 %v4219
    %v4221 = vpop.xlane.xlu0 %4220
    %v4222 = vsel %vm99, %v4200, 0.0
    %4223 = vadd.xlane.f32.xlu0 %v4222
    %v4224 = vpop.xlane.xlu0 %4223
    %v4225 = vmul.f32 %v4203, %v124
    %v4226 = vmul.f32 %v4206, %v124
    %v4227 = vmul.f32 %v4209, %v124
    %v4228 = vmul.f32 %v4212, %v124
    %v4229 = vmul.f32 %v4215, %v124
    %v4230 = vmul.f32 %v4218, %v124
    %v4231 = vmul.f32 %v4221, %v124
    %v4232 = vmul.f32 %v4224, %v124
    %v4233 = vadd.f32 %v4225, 1e-05
    %v4234 = vadd.f32 %v4226, 1e-05
    %v4235 = vadd.f32 %v4227, 1e-05
    %v4236 = vadd.f32 %v4228, 1e-05
    %v4237 = vadd.f32 %v4229, 1e-05
    %v4238 = vadd.f32 %v4230, 1e-05
    %v4239 = vadd.f32 %v4231, 1e-05
    %v4240 = vadd.f32 %v4232, 1e-05
    %v4241 = vrsqrt.pop %v4233
    %v4242 = vrsqrt.pop %v4234
    %v4243 = vrsqrt.pop %v4235
    %v4244 = vrsqrt.pop %v4236
    %v4245 = vrsqrt.pop %v4237
    %v4246 = vrsqrt.pop %v4238
    %v4247 = vrsqrt.pop %v4239
    %v4248 = vrsqrt.pop %v4240
    %v4249 = vmul.f32 %v4185, %v4241
    %v4250 = vmul.f32 %v4186, %v4242
    %v4251 = vmul.f32 %v4187, %v4243
    %v4252 = vmul.f32 %v4188, %v4244
    %v4253 = vmul.f32 %v4189, %v4245
    %v4254 = vmul.f32 %v4190, %v4246
    %v4255 = vmul.f32 %v4191, %v4247
    %v4256 = vmul.f32 %v4192, %v4248
    %v4257 = vlaneseq
    %v4258 = vshrl.u32 %v4257, 7
    %v4259 = vsub.s32 0, %v4258
    %v4260 = vrot.slane %v87, %v4259
    %v4261 = vmul.f32 %v4249, %v4260
    %v4262 = vmul.f32 %v4250, %v4260
    %v4263 = vmul.f32 %v4251, %v4260
    %v4264 = vmul.f32 %v4252, %v4260
    %v4265 = vmul.f32 %v4253, %v4260
    %v4266 = vmul.f32 %v4254, %v4260
    %v4267 = vmul.f32 %v4255, %v4260
    %v4268 = vmul.f32 %v4256, %v4260
    %v4269 = vlaneseq
    %v4270 = vshrl.u32 %v4269, 7
    %v4271 = vsub.s32 0, %v4270
    %v4272 = vrot.slane %v88, %v4271
    %v4273 = vadd.f32 %v4261, %v4272
    %v4274 = vadd.f32 %v4262, %v4272
    %v4275 = vadd.f32 %v4263, %v4272
    %v4276 = vadd.f32 %v4264, %v4272
    %v4277 = vadd.f32 %v4265, %v4272
    %v4278 = vadd.f32 %v4266, %v4272
    %v4279 = vadd.f32 %v4267, %v4272
    %v4280 = vadd.f32 %v4268, %v4272
    %v4281 = vpack.c.bf16 %v4274, %v4273
    %v4282 = vpack.c.bf16 %v4276, %v4275
    %v4283 = vpack.c.bf16 %v4278, %v4277
    %v4284 = vpack.c.bf16 %v4280, %v4279
    %v4285 = vlaneseq
    %v4286 = vshrl.u32 %v4285, 7
    %v4287 = vsub.s32 0, %v4286
    %v4288 = vrot.slane %v89, %v4287
    %v4293 = vunpack.c.l.b16 %v76
    %v4294 = vunpack.c.l.b16 %v77
    %v4295 = vunpack.c.l.b16 %v78
    %v4296 = vunpack.c.l.b16 %v79
    %v4297 = vpack.c.b16 %v4294, %v4293
    %v4298 = vpack.c.b16 %v4296, %v4295
    %v4302 = vsel %vm99, %v4281, 0
    %v4305 = vsel %vm99, %v4282, 0
    %v4308 = vsel %vm99, %v4283, 0
    %v4311 = vsel %vm99, %v4284, 0
    %4313 = vmatprep.subr.bf16.mxu0 0
    %4314 = vmatpush1.bf16.msra.mxu0 %v4297
    %4315 = vmatprep.subr.bf16.mxu0 0
    %4316 = vmatpush1.bf16.msra.mxu0 %v4298
    %4317 = vmatprep.subr.bf16.mxu0 0
    %4318 = vmatpush1.bf16.msra.mxu0 0
    %4319 = vmatprep.subr.bf16.mxu0 0
    %4320 = vmatpush1.bf16.msra.mxu0 0
    %4321 = vmatprep.subr.bf16.mxu0 0
    %4322 = vmatpush1.bf16.msra.mxu0 0
    %4323 = vmatprep.subr.bf16.mxu0 0
    %4324 = vmatpush1.bf16.msra.mxu0 0
    %4325 = vmatprep.subr.bf16.mxu0 0
    %4326 = vmatpush1.bf16.msra.mxu0 0
    %4327 = vmatprep.subr.bf16.mxu0 0
    %4328 = vmatpush1.bf16.msra.mxu0 0
    %4329 = vmatprep.subr.bf16.mxu0 0
    %4330 = vmatpush1.bf16.msra.mxu0 0
    %4331 = vmatprep.subr.bf16.mxu0 0
    %4332 = vmatpush1.bf16.msra.mxu0 0
    %4333 = vmatprep.subr.bf16.mxu0 0
    %4334 = vmatpush1.bf16.msra.mxu0 0
    %4335 = vmatprep.subr.bf16.mxu0 0
    %4336 = vmatpush1.bf16.msra.mxu0 0
    %4337 = vmatprep.subr.bf16.mxu0 0
    %4338 = vmatpush1.bf16.msra.mxu0 0
    %4339 = vmatprep.subr.bf16.mxu0 0
    %4340 = vmatpush1.bf16.msra.mxu0 0
    %4341 = vmatprep.subr.bf16.mxu0 0
    %4342 = vmatpush1.bf16.msra.mxu0 0
    %4343 = vmatprep.subr.bf16.mxu0 0
    %4344 = vmatpush1.bf16.msra.mxu0 0
    %4345 = vmatprep.mubr.bf16.mxu0 0
    %4346 = vmatmul.mubr.bf16.gmra.mrb[0].mxu0 %v4302
    %v4347 = vpop.f32.mrb[0].mxu0
    %v4348 = vadd.f32 %v4288, %v4347
    %v4349 = vpop.f32.mrb[0].mxu0
    %v4350 = vpop.f32.mrb[0].mxu0
    %v4351 = vadd.f32 %v4288, %v4350
    %v4352 = vpop.f32.mrb[0].mxu0
    %4353 = vmatprep.mubr.bf16.mxu0 0
    %4354 = vmatmul.mubr.bf16.gmra.mrb[0].mxu0 %v4305
    %v4355 = vpop.f32.mrb[0].mxu0
    %v4356 = vadd.f32 %v4288, %v4355
    %v4357 = vpop.f32.mrb[0].mxu0
    %v4358 = vpop.f32.mrb[0].mxu0
    %v4359 = vadd.f32 %v4288, %v4358
    %v4360 = vpop.f32.mrb[0].mxu0
    %4361 = vmatprep.mubr.bf16.mxu0 0
    %4362 = vmatmul.mubr.bf16.gmra.mrb[0].mxu0 %v4308
    %v4363 = vpop.f32.mrb[0].mxu0
    %v4364 = vadd.f32 %v4288, %v4363
    %v4365 = vpop.f32.mrb[0].mxu0
    %v4366 = vpop.f32.mrb[0].mxu0
    %v4367 = vadd.f32 %v4288, %v4366
    %v4368 = vpop.f32.mrb[0].mxu0
    %4369 = vmatprep.mubr.bf16.mxu0 0
    %4370 = vmatmul.mubr.bf16.gmra.mrb[0].mxu0 %v4311
    %v4371 = vpop.f32.mrb[0].mxu0
    %v4372 = vadd.f32 %v4288, %v4371
    %v4373 = vpop.f32.mrb[0].mxu0
    %v4374 = vpop.f32.mrb[0].mxu0
    %v4375 = vadd.f32 %v4288, %v4374
    %v4376 = vpop.f32.mrb[0].mxu0
    %4377 = vdwg.mxu0
    %v4378 = vmul.f32 %v4348, 0.5
    %v4379 = vmul.f32 %v4351, 0.5
    %v4380 = vmul.f32 %v4356, 0.5
    %v4381 = vmul.f32 %v4359, 0.5
    %v4382 = vmul.f32 %v4364, 0.5
    %v4383 = vmul.f32 %v4367, 0.5
    %v4384 = vmul.f32 %v4372, 0.5
    %v4385 = vmul.f32 %v4375, 0.5
    %v4386 = vmul.f32 %v4348, 0.70710677
    %v4387 = vmul.f32 %v4351, 0.70710677
    %v4388 = vmul.f32 %v4356, 0.70710677
    %v4389 = vmul.f32 %v4359, 0.70710677
    %v4390 = vmul.f32 %v4364, 0.70710677
    %v4391 = vmul.f32 %v4367, 0.70710677
    %v4392 = vmul.f32 %v4372, 0.70710677
    %v4393 = vmul.f32 %v4375, 0.70710677
    %v4394 = verf.f32.pop %v4386
    %v4395 = verf.f32.pop %v4387
    %v4396 = verf.f32.pop %v4388
    %v4397 = verf.f32.pop %v4389
    %v4398 = verf.f32.pop %v4390
    %v4399 = verf.f32.pop %v4391
    %v4400 = verf.f32.pop %v4392
    %v4401 = verf.f32.pop %v4393
    %v4402 = vadd.f32 %v4394, 1.0
    %v4403 = vadd.f32 %v4395, 1.0
    %v4404 = vadd.f32 %v4396, 1.0
    %v4405 = vadd.f32 %v4397, 1.0
    %v4406 = vadd.f32 %v4398, 1.0
    %v4407 = vadd.f32 %v4399, 1.0
    %v4408 = vadd.f32 %v4400, 1.0
    %v4409 = vadd.f32 %v4401, 1.0
    %v4410 = vmul.f32 %v4378, %v4402
    %v4411 = vmul.f32 %v4379, %v4403
    %v4412 = vmul.f32 %v4380, %v4404
    %v4413 = vmul.f32 %v4381, %v4405
    %v4414 = vmul.f32 %v4382, %v4406
    %v4415 = vmul.f32 %v4383, %v4407
    %v4416 = vmul.f32 %v4384, %v4408
    %v4417 = vmul.f32 %v4385, %v4409
    %v4418 = vpack.c.bf16 %v4411, %v4410
    %v4419 = vpack.c.bf16 %v4413, %v4412
    %v4420 = vpack.c.bf16 %v4415, %v4414
    %v4421 = vpack.c.bf16 %v4417, %v4416
    %v4422 = vlaneseq
    %v4423 = vshrl.u32 %v4422, 7
    %v4424 = vsub.s32 0, %v4423
    %v4425 = vrot.slane %v90, %v4424
    %v4430 = vunpack.c.l.b16 %v80
    %v4431 = vunpack.c.l.b16 %v81
    %v4432 = vunpack.c.l.b16 %v82
    %v4433 = vunpack.c.l.b16 %v83
    %v4434 = vpack.c.b16 %v4431, %v4430
    %v4435 = vpack.c.b16 %v4433, %v4432
    %4436 = vrot.lane.b32.xlu0 %v4297, 64
    %v4437 = vpop.permute.xlu0 %4436
    %4438 = vrot.lane.b32.xlu0 %v4298, 64
    %v4439 = vpop.permute.xlu0 %4438
    %4440 = vrot.lane.b32.xlu0 %v4434, 64
    %v4441 = vpop.permute.xlu0 %4440
    %4442 = vrot.lane.b32.xlu0 %v4435, 64
    %v4443 = vpop.permute.xlu0 %4442
    %vm4448 = vcmask 523264
    %v4450 = vsel %vm4448, %v4418, 0
    %v4453 = vsel %vm4448, %v4419, 0
    %v4456 = vsel %vm4448, %v4420, 0
    %v4459 = vsel %vm4448, %v4421, 0
    %4461 = vmatprep.subr.bf16.mxu0 0
    %4462 = vmatpush1.bf16.msra.mxu0 %v4437
    %4463 = vmatprep.subr.bf16.mxu0 0
    %4464 = vmatpush1.bf16.msra.mxu0 %v4439
    %4465 = vmatprep.subr.bf16.mxu0 0
    %4466 = vmatpush1.bf16.msra.mxu0 %v4441
    %4467 = vmatprep.subr.bf16.mxu0 0
    %4468 = vmatpush1.bf16.msra.mxu0 %v4443
    %4469 = vmatprep.subr.bf16.mxu0 0
    %4470 = vmatpush1.bf16.msra.mxu0 0
    %4471 = vmatprep.subr.bf16.mxu0 0
    %4472 = vmatpush1.bf16.msra.mxu0 0
    %4473 = vmatprep.subr.bf16.mxu0 0
    %4474 = vmatpush1.bf16.msra.mxu0 0
    %4475 = vmatprep.subr.bf16.mxu0 0
    %4476 = vmatpush1.bf16.msra.mxu0 0
    %4477 = vmatprep.subr.bf16.mxu0 0
    %4478 = vmatpush1.bf16.msra.mxu0 0
    %4479 = vmatprep.subr.bf16.mxu0 0
    %4480 = vmatpush1.bf16.msra.mxu0 0
    %4481 = vmatprep.subr.bf16.mxu0 0
    %4482 = vmatpush1.bf16.msra.mxu0 0
    %4483 = vmatprep.subr.bf16.mxu0 0
    %4484 = vmatpush1.bf16.msra.mxu0 0
    %4485 = vmatprep.subr.bf16.mxu0 0
    %4486 = vmatpush1.bf16.msra.mxu0 0
    %4487 = vmatprep.subr.bf16.mxu0 0
    %4488 = vmatpush1.bf16.msra.mxu0 0
    %4489 = vmatprep.subr.bf16.mxu0 0
    %4490 = vmatpush1.bf16.msra.mxu0 0
    %4491 = vmatprep.subr.bf16.mxu0 0
    %4492 = vmatpush1.bf16.msra.mxu0 0
    %4493 = vmatprep.mubr.bf16.mxu0 0
    %4494 = vmatmul.mubr.bf16.gmra.mrb[0].mxu0 %v4450
    %v4495 = vpop.f32.mrb[0].mxu0
    %v4496 = vadd.f32 %v4425, %v4495
    %v4497 = vpop.f32.mrb[0].mxu0
    %v4498 = vpop.f32.mrb[0].mxu0
    %v4499 = vadd.f32 %v4425, %v4498
    %v4500 = vpop.f32.mrb[0].mxu0
    %4501 = vmatprep.mubr.bf16.mxu0 0
    %4502 = vmatmul.mubr.bf16.gmra.mrb[0].mxu0 %v4453
    %v4503 = vpop.f32.mrb[0].mxu0
    %v4504 = vadd.f32 %v4425, %v4503
    %v4505 = vpop.f32.mrb[0].mxu0
    %v4506 = vpop.f32.mrb[0].mxu0
    %v4507 = vadd.f32 %v4425, %v4506
    %v4508 = vpop.f32.mrb[0].mxu0
    %4509 = vmatprep.mubr.bf16.mxu0 0
    %4510 = vmatmul.mubr.bf16.gmra.mrb[0].mxu0 %v4456
    %v4511 = vpop.f32.mrb[0].mxu0
    %v4512 = vadd.f32 %v4425, %v4511
    %v4513 = vpop.f32.mrb[0].mxu0
    %v4514 = vpop.f32.mrb[0].mxu0
    %v4515 = vadd.f32 %v4425, %v4514
    %v4516 = vpop.f32.mrb[0].mxu0
    %4517 = vmatprep.mubr.bf16.mxu0 0
    %4518 = vmatmul.mubr.bf16.gmra.mrb[0].mxu0 %v4459
    %v4519 = vpop.f32.mrb[0].mxu0
    %v4520 = vadd.f32 %v4425, %v4519
    %v4521 = vpop.f32.mrb[0].mxu0
    %v4522 = vpop.f32.mrb[0].mxu0
    %v4523 = vadd.f32 %v4425, %v4522
    %v4524 = vpop.f32.mrb[0].mxu0
    %4525 = vdwg.mxu0
    %v4526 = vadd.f32 %v4273, %v4496
    %v4527 = vadd.f32 %v4274, %v4499
    %v4528 = vadd.f32 %v4275, %v4504
    %v4529 = vadd.f32 %v4276, %v4507
    %v4530 = vadd.f32 %v4277, %v4512
    %v4531 = vadd.f32 %v4278, %v4515
    %v4532 = vadd.f32 %v4279, %v4520
    %v4533 = vadd.f32 %v4280, %v4523
    %4534 = vst.msk [vmem:[#allocation2] sm:$0xff] %vm99, %v4526
    %4535 = vst.msk [vmem:[#allocation2 + $0x8] sm:$0xff] %vm99, %v4527
    %4536 = vst.msk [vmem:[#allocation2 + $0x10] sm:$0xff] %vm99, %v4528
    %4537 = vst.msk [vmem:[#allocation2 + $0x18] sm:$0xff] %vm99, %v4529
    %4538 = vst.msk [vmem:[#allocation2 + $0x20] sm:$0xff] %vm99, %v4530
    %4539 = vst.msk [vmem:[#allocation2 + $0x28] sm:$0xff] %vm99, %v4531
    %4540 = vst.msk [vmem:[#allocation2 + $0x30] sm:$0xff] %vm99, %v4532
    %4541 = vst.msk [vmem:[#allocation2 + $0x38] sm:$0xff] %vm99, %v4533
    %v4542 = vld [vmem:[#allocation2] ss:$8 sm:$0xf]
    %v4543 = vld [vmem:[#allocation2] ss:$8 sm:$0xf0]
    %v4544 = vor.u32 %v4542, %v4543
    %s4545 = scalar_lea.vmem [#allocation2], 1
    %v4546 = vld [vmem:[%s4545] ss:$8 sm:$0xf]
    %v4547 = vld [vmem:[%s4545] ss:$8 sm:$0xf0]
    %v4548 = vor.u32 %v4546, %v4547
    %s4549 = scalar_lea.vmem [#allocation2], 2
    %v4550 = vld [vmem:[%s4549] ss:$8 sm:$0xf]
    %v4551 = vld [vmem:[%s4549] ss:$8 sm:$0xf0]
    %v4552 = vor.u32 %v4550, %v4551
    %s4553 = scalar_lea.vmem [#allocation2], 3
    %v4554 = vld [vmem:[%s4553] ss:$8 sm:$0xf]
    %v4555 = vld [vmem:[%s4553] ss:$8 sm:$0xf0]
    %v4556 = vor.u32 %v4554, %v4555
    %s4557 = scalar_lea.vmem [#allocation2], 4
    %v4558 = vld [vmem:[%s4557] ss:$8 sm:$0xf]
    %v4559 = vld [vmem:[%s4557] ss:$8 sm:$0xf0]
    %v4560 = vor.u32 %v4558, %v4559
    %s4561 = scalar_lea.vmem [#allocation2], 5
    %v4562 = vld [vmem:[%s4561] ss:$8 sm:$0xf]
    %v4563 = vld [vmem:[%s4561] ss:$8 sm:$0xf0]
    %v4564 = vor.u32 %v4562, %v4563
    %s4565 = scalar_lea.vmem [#allocation2], 6
    %v4566 = vld [vmem:[%s4565] ss:$8 sm:$0xf]
    %v4567 = vld [vmem:[%s4565] ss:$8 sm:$0xf0]
    %v4568 = vor.u32 %v4566, %v4567
    %s4569 = scalar_lea.vmem [#allocation2], 7
    %v4570 = vld [vmem:[%s4569] ss:$8 sm:$0xf]
    %v4571 = vld [vmem:[%s4569] ss:$8 sm:$0xf0]
    %v4572 = vor.u32 %v4570, %v4571
    %4574 = vrot.lane.b32.xlu0 %v4548, 32
    %v4575 = vpop.permute.xlu0 %4574
    %4578 = vrot.lane.b32.xlu0 %v4552, 64
    %v4579 = vpop.permute.xlu0 %4578
    %4582 = vrot.lane.b32.xlu0 %v4556, 96
    %v4583 = vpop.permute.xlu0 %4582
    %4586 = vrot.lane.b32.xlu0 %v4564, 32
    %v4587 = vpop.permute.xlu0 %4586
    %4590 = vrot.lane.b32.xlu0 %v4568, 64
    %v4591 = vpop.permute.xlu0 %4590
    %4594 = vrot.lane.b32.xlu0 %v4572, 96
    %v4595 = vpop.permute.xlu0 %4594
    %v4597 = vsel %vm99, %v4544, %v4575
    %v4598 = vsel %vm4448, %v4597, %v4579
    %vm4599 = vcmask 785408
    %v4600 = vsel %vm4599, %v4598, %v4583
    %v4601 = vsel %vm99, %v4560, %v4587
    %v4602 = vsel %vm4448, %v4601, %v4591
    %v4603 = vsel %vm4599, %v4602, %v4595
    %4604 = vst [vmem:[#allocation11] sm:$0xff] %v4600
    %4605 = vst [vmem:[#allocation11 + $0x8] sm:$0xff] %v4603
    // Predicated region
    $region34: #{tpu_custom_call.1} parent=1 // pred_check
      _
    $region35: #{tpu_custom_call.1} parent=1 // pred_check_branch
      %4607 = sbr.rel (0) target = $region37
    $region36: #{tpu_custom_call.1} parent=1 // pred_region
      %s4609 = ssub.s32 256, 256
      %4610 = vsyncadd [#allocation5], %s4609
      %s4612 = sshll.u32 [#allocation11], 4
      %s4613 = int_to_ptr.vmem [resolvable:$true] %s4612
      %4615 = dma.vmem_to_hbm [thread:$0]  %s4613, 256, %s4, [#allocation5]
    $region37: #{tpu_custom_call.1} parent=1 // pred_fallthru
      _
    // Predicated region
    $region38: #{tpu_custom_call.1} parent=1 // pred_check
      _
    $region39: #{tpu_custom_call.1} parent=1 // pred_check_branch
      %4617 = sbr.rel (0) target = $region41
    $region40: #{tpu_custom_call.1} parent=1 // pred_region
      %4618 = dma.done [#allocation5], 256
    $region41: #{tpu_custom_call.1} parent=1 // pred_fallthru
      _
    %4619 = vsyncpa [#allocation4], 1
    %4620 = vsyncpa [#allocation7], 1
    %4621 = vsyncpa [#allocation10], 1
    %4622 = vsyncpa [#allocation5], 1

</llo_original>
